<compile_context>
chip_gen: v6e
topology: v6e:2x2x1
jax: 0.10.0
libtpu: 0.0.40
codegen_flags: <defaults>
</compile_context>

<pallas_src>
import functools
import math

import jax
import jax.numpy as jnp
from jax.experimental import pallas as pl
from jax.experimental.pallas import tpu as pltpu

# ----------------------------- config ---------------------------------------
CFG = dict(
    vocab_size=128,
    context_length=8,
    emb_dim=32,
    n_heads=4,
    n_layers=2,
    drop_rate=0.1,
    qkv_bias=False,
)

EPS = 1e-5
GELU_C = math.sqrt(2.0 / math.pi)
NEG_INF = -1e30


# ----------------------------- kernel helpers --------------------------------
def _layernorm(x, scale, shift):
    # x: (N, D); scale/shift: (1, D).  Biased variance, eps=1e-5 (nn.LayerNorm).
    mean = jnp.mean(x, axis=-1, keepdims=True)
    var = jnp.mean(jnp.square(x - mean), axis=-1, keepdims=True)
    return (x - mean) * jax.lax.rsqrt(var + EPS) * scale + shift


def _gelu(x):
    return 0.5 * x * (1.0 + jnp.tanh(GELU_C * (x + 0.044715 * x * x * x)))


# ----------------------------- fused GPT kernel ------------------------------
def gpt_kernel(
    x_ref,
    ln1_s_ref, ln1_b_ref, wqkv_ref, wo_ref,
    ln2_s_ref, ln2_b_ref, w1_ref, b1_ref, w2_ref, b2_ref,
    lnf_s_ref, lnf_b_ref, wout_ref,
    o_ref,
    *, n_layers, n_heads, batch, seq,
):
    x = x_ref[...]                              # (B*S, D)
    N, D = x.shape
    hd = D // n_heads
    inv_sqrt_hd = 1.0 / math.sqrt(hd)

    # Causal additive bias, hoisted out of the layer loop (layer-invariant).
    row = jax.lax.broadcasted_iota(jnp.int32, (1, seq, seq), 1)
    col = jax.lax.broadcasted_iota(jnp.int32, (1, seq, seq), 2)
    causal_bias = jnp.where(col > row, NEG_INF, 0.0).astype(jnp.float32)

    for l in range(n_layers):                   # static unroll over layers
        # ---- LayerNorm 1 ----
        xn = _layernorm(x, ln1_s_ref[l], ln1_b_ref[l])

        # ---- fused QKV projection: one (N,D)@(D,3D) matmul ----
        qkv = jnp.dot(xn, wqkv_ref[l], preferred_element_type=jnp.float32)
        q = qkv[:, :D].reshape(batch, seq, D)
        k = qkv[:, D:2 * D].reshape(batch, seq, D)
        v = qkv[:, 2 * D:].reshape(batch, seq, D)

        # ---- multi-head causal attention (batched over B per head) ----
        ctx_heads = []
        for h in range(n_heads):                # static unroll over heads
            sl = slice(h * hd, (h + 1) * hd)
            qh, kh, vh = q[:, :, sl], k[:, :, sl], v[:, :, sl]
            s = jnp.einsum('bqd,bkd->bqk', qh, kh,
                           preferred_element_type=jnp.float32)
            s = s * inv_sqrt_hd + causal_bias
            s = s - jnp.max(s, axis=-1, keepdims=True)
            p = jnp.exp(s)
            p = p * pl.reciprocal(jnp.sum(p, axis=-1, keepdims=True),
                                  approx=True)
            # dropout on attention weights: identity (inference)
            ctx_heads.append(jnp.einsum('bqk,bkd->bqd', p, vh,
                                        preferred_element_type=jnp.float32))
        ctx = jnp.concatenate(ctx_heads, axis=-1).reshape(N, D)

        # ---- single output projection + residual ----
        x = x + jnp.dot(ctx, wo_ref[l], preferred_element_type=jnp.float32)

        # ---- LayerNorm 2 + GELU feed-forward + residual ----
        xn2 = _layernorm(x, ln2_s_ref[l], ln2_b_ref[l])
        h1 = jnp.dot(xn2, w1_ref[l], preferred_element_type=jnp.float32) + b1_ref[l]
        g = _gelu(h1)
        x = x + jnp.dot(g, w2_ref[l], preferred_element_type=jnp.float32) + b2_ref[l]

    # ---- final LayerNorm + vocab projection (lane-dense output, V=128) ----
    xn = _layernorm(x, lnf_s_ref[...], lnf_b_ref[...])
    o_ref[...] = jnp.dot(xn, wout_ref[...], preferred_element_type=jnp.float32)


# ----------------------------- wrapper ---------------------------------------
def gpt_forward(params, tokens):
    B, S = tokens.shape
    D = CFG['emb_dim']
    V = CFG['vocab_size']

    # Embedding gather + positional embedding (plain JAX glue).
    x = jnp.take(params['token_emb'], tokens, axis=0) + params['pos_emb'][:S]
    # dropout after embedding: identity (inference)
    x2 = x.reshape(B * S, D).astype(jnp.float32)

    kernel = functools.partial(
        gpt_kernel,
        n_layers=CFG['n_layers'], n_heads=CFG['n_heads'], batch=B, seq=S)

    logits = pl.pallas_call(
        kernel,
        out_shape=jax.ShapeDtypeStruct((B * S, V), jnp.float32),
        compiler_params=pltpu.CompilerParams(
            vmem_limit_bytes=32 * 1024 * 1024),
    )(x2,
      params['ln1_s'], params['ln1_b'], params['wqkv'], params['wo'],
      params['ln2_s'], params['ln2_b'], params['w1'], params['b1'],
      params['w2'], params['b2'],
      params['last_ln_s'], params['last_ln_b'], params['w_out'])

    return logits.reshape(B, S, V)


# ----------------------------- params ----------------------------------------
def init_params(key, cfg):
    D = cfg['emb_dim']
    V = cfg['vocab_size']
    C = cfg['context_length']
    L = cfg['n_layers']

    def nrm(k, shape, scale=0.02):
        return scale * jax.random.normal(k, shape, jnp.float32)

    ks = jax.random.split(key, 8)
    params = dict(
        token_emb=nrm(ks[0], (V, D)),
        pos_emb=nrm(ks[1], (C, D)),
        # per-layer weights stacked along a leading layer axis
        ln1_s=jnp.ones((L, 1, D), jnp.float32),
        ln1_b=jnp.zeros((L, 1, D), jnp.float32),
        wqkv=nrm(ks[2], (L, D, 3 * D)),        # fused Wq|Wk|Wv, pre-transposed
        wo=nrm(ks[3], (L, D, D)),
        ln2_s=jnp.ones((L, 1, D), jnp.float32),
        ln2_b=jnp.zeros((L, 1, D), jnp.float32),
        w1=nrm(ks[4], (L, D, 4 * D)),
        b1=jnp.zeros((L, 1, 4 * D), jnp.float32),
        w2=nrm(ks[5], (L, 4 * D, D)),
        b2=jnp.zeros((L, 1, D), jnp.float32),
        # final norm + vocab projection
        last_ln_s=jnp.ones((1, D), jnp.float32),
        last_ln_b=jnp.zeros((1, D), jnp.float32),
        w_out=nrm(ks[6], (D, V)),
    )
    return params


# ----------------------------- main -------------------------------------------
if __name__ == "__main__":
    key = jax.random.PRNGKey(0)
    pkey, tkey = jax.random.split(key)
    params = init_params(pkey, CFG)

    B, S = 2, CFG['context_length']
    tokens = jax.random.randint(tkey, (B, S), 0, CFG['vocab_size'], jnp.int32)

    logits = jax.jit(gpt_forward)(params, tokens)
    jax.block_until_ready(logits)

    assert logits.shape == (B, S, CFG['vocab_size'])
    assert bool(jnp.all(jnp.isfinite(logits)))
    print("KERNEL_OK")
</pallas_src>

<mosaic_0001>
module attributes {stable_mosaic.version = 11 : i64} {
  func.func @gpt_kernel(%arg0: memref<16x32xf32, #tpu.memory_space<vmem>>, %arg1: memref<2x1x32xf32, #tpu.memory_space<vmem>>, %arg2: memref<2x1x32xf32, #tpu.memory_space<vmem>>, %arg3: memref<2x32x96xf32, #tpu.memory_space<vmem>>, %arg4: memref<2x32x32xf32, #tpu.memory_space<vmem>>, %arg5: memref<2x1x32xf32, #tpu.memory_space<vmem>>, %arg6: memref<2x1x32xf32, #tpu.memory_space<vmem>>, %arg7: memref<2x32x128xf32, #tpu.memory_space<vmem>>, %arg8: memref<2x1x128xf32, #tpu.memory_space<vmem>>, %arg9: memref<2x128x32xf32, #tpu.memory_space<vmem>>, %arg10: memref<2x1x32xf32, #tpu.memory_space<vmem>>, %arg11: memref<1x32xf32, #tpu.memory_space<vmem>>, %arg12: memref<1x32xf32, #tpu.memory_space<vmem>>, %arg13: memref<32x128xf32, #tpu.memory_space<vmem>>, %arg14: memref<16x128xf32, #tpu.memory_space<vmem>>) attributes {dimension_semantics = [], scalar_prefetch = 0 : i64, scratch_operands = 0 : i64, tpu.core_type = #tpu.core_type<tc>} {
    %c0 = arith.constant 0 : index
    %c0_0 = arith.constant 0 : index
    %0 = vector.load %arg0[%c0, %c0_0] : memref<16x32xf32, #tpu.memory_space<vmem>>, vector<16x32xf32>
    %1 = tpu.iota {dimensions = array<i32: 1>} : vector<1x8x8xi32>
    %2 = tpu.iota {dimensions = array<i32: 2>} : vector<1x8x8xi32>
    %3 = arith.cmpi sgt, %2, %1 : vector<1x8x8xi32>
    %cst = arith.constant -1.000000e+30 : f32
    %cst_1 = arith.constant 0.000000e+00 : f32
    %4 = vector.broadcast %cst : f32 to vector<1x8x8xf32>
    %5 = vector.broadcast %cst_1 : f32 to vector<1x8x8xf32>
    %6 = arith.select %3, %4, %5 : vector<1x8x8xi1>, vector<1x8x8xf32>
    %c0_2 = arith.constant 0 : index
    %c0_3 = arith.constant 0 : index
    %c0_4 = arith.constant 0 : index
    %7 = vector.load %arg1[%c0_2, %c0_3, %c0_4] : memref<2x1x32xf32, #tpu.memory_space<vmem>>, vector<1x1x32xf32>
    %8 = vector.shape_cast %7 : vector<1x1x32xf32> to vector<1x32xf32>
    %c0_5 = arith.constant 0 : index
    %c0_6 = arith.constant 0 : index
    %c0_7 = arith.constant 0 : index
    %9 = vector.load %arg2[%c0_5, %c0_6, %c0_7] : memref<2x1x32xf32, #tpu.memory_space<vmem>>, vector<1x1x32xf32>
    %10 = vector.shape_cast %9 : vector<1x1x32xf32> to vector<1x32xf32>
    %cst_8 = arith.constant dense<0.000000e+00> : vector<16xf32>
    %11 = vector.multi_reduction <add>, %0, %cst_8 [1] : vector<16x32xf32> to vector<16xf32>
    %12 = vector.shape_cast %11 : vector<16xf32> to vector<16x1xf32>
    %cst_9 = arith.constant 3.200000e+01 : f32
    %13 = vector.broadcast %cst_9 : f32 to vector<16x1xf32>
    %14 = arith.divf %12, %13 : vector<16x1xf32>
    %15 = vector.broadcast %14 : vector<16x1xf32> to vector<16x32xf32>
    %16 = arith.subf %0, %15 : vector<16x32xf32>
    %17 = arith.mulf %16, %16 : vector<16x32xf32>
    %cst_10 = arith.constant dense<0.000000e+00> : vector<16xf32>
    %18 = vector.multi_reduction <add>, %17, %cst_10 [1] : vector<16x32xf32> to vector<16xf32>
    %19 = vector.shape_cast %18 : vector<16xf32> to vector<16x1xf32>
    %cst_11 = arith.constant 3.200000e+01 : f32
    %20 = vector.broadcast %cst_11 : f32 to vector<16x1xf32>
    %21 = arith.divf %19, %20 : vector<16x1xf32>
    %22 = vector.broadcast %14 : vector<16x1xf32> to vector<16x32xf32>
    %23 = arith.subf %0, %22 : vector<16x32xf32>
    %cst_12 = arith.constant 9.99999974E-6 : f32
    %24 = vector.broadcast %cst_12 : f32 to vector<16x1xf32>
    %25 = arith.addf %21, %24 : vector<16x1xf32>
    %26 = math.rsqrt %25 : vector<16x1xf32>
    %27 = vector.broadcast %26 : vector<16x1xf32> to vector<16x32xf32>
    %28 = arith.mulf %23, %27 : vector<16x32xf32>
    %29 = vector.broadcast %8 : vector<1x32xf32> to vector<16x32xf32>
    %30 = arith.mulf %28, %29 : vector<16x32xf32>
    %31 = vector.broadcast %10 : vector<1x32xf32> to vector<16x32xf32>
    %32 = arith.addf %30, %31 : vector<16x32xf32>
    %c0_13 = arith.constant 0 : index
    %c0_14 = arith.constant 0 : index
    %c0_15 = arith.constant 0 : index
    %33 = vector.load %arg3[%c0_13, %c0_14, %c0_15] : memref<2x32x96xf32, #tpu.memory_space<vmem>>, vector<1x32x96xf32>
    %34 = vector.shape_cast %33 : vector<1x32x96xf32> to vector<32x96xf32>
    %cst_16 = arith.constant dense<0.000000e+00> : vector<16x96xf32>
    %35 = tpu.matmul %32, %34, %cst_16 {dimension_numbers = #tpu.dot_dimension_numbers<[1], [0], [0], [1], [0, 0, 1, 1], [], []>} : vector<16x32xf32>, vector<32x96xf32>, vector<16x96xf32> -> vector<16x96xf32>
    %36 = vector.extract_strided_slice %35 {offsets = [0, 0], sizes = [16, 32], strides = [1, 1]} : vector<16x96xf32> to vector<16x32xf32>
    %37 = vector.shape_cast %36 : vector<16x32xf32> to vector<2x8x32xf32>
    %38 = vector.extract_strided_slice %35 {offsets = [0, 32], sizes = [16, 32], strides = [1, 1]} : vector<16x96xf32> to vector<16x32xf32>
    %39 = vector.shape_cast %38 : vector<16x32xf32> to vector<2x8x32xf32>
    %40 = vector.extract_strided_slice %35 {offsets = [0, 64], sizes = [16, 32], strides = [1, 1]} : vector<16x96xf32> to vector<16x32xf32>
    %41 = vector.shape_cast %40 : vector<16x32xf32> to vector<2x8x32xf32>
    %42 = vector.extract_strided_slice %37 {offsets = [0, 0, 0], sizes = [2, 8, 8], strides = [1, 1, 1]} : vector<2x8x32xf32> to vector<2x8x8xf32>
    %43 = vector.extract_strided_slice %39 {offsets = [0, 0, 0], sizes = [2, 8, 8], strides = [1, 1, 1]} : vector<2x8x32xf32> to vector<2x8x8xf32>
    %44 = vector.extract_strided_slice %41 {offsets = [0, 0, 0], sizes = [2, 8, 8], strides = [1, 1, 1]} : vector<2x8x32xf32> to vector<2x8x8xf32>
    "tpu.trace_start"() <{level = 10 : i32, message = "bqd,bkd->bqk"}> : () -> ()
    %cst_17 = arith.constant dense<0.000000e+00> : vector<2x8x8xf32>
    %45 = tpu.matmul %42, %43, %cst_17 {dimension_numbers = #tpu.dot_dimension_numbers<[2], [2], [1], [1], [0, 0, 0, 1, 1, 1], [0], [0]>} : vector<2x8x8xf32>, vector<2x8x8xf32>, vector<2x8x8xf32> -> vector<2x8x8xf32>
    "tpu.trace_stop"() : () -> ()
    %cst_18 = arith.constant 0.353553385 : f32
    %46 = vector.broadcast %cst_18 : f32 to vector<2x8x8xf32>
    %47 = arith.mulf %45, %46 : vector<2x8x8xf32>
    %48 = vector.broadcast %6 : vector<1x8x8xf32> to vector<2x8x8xf32>
    %49 = arith.addf %47, %48 : vector<2x8x8xf32>
    %cst_19 = arith.constant dense<0xFF800000> : vector<2x8xf32>
    %50 = vector.multi_reduction <maximumf>, %49, %cst_19 [2] : vector<2x8x8xf32> to vector<2x8xf32>
    %51 = vector.shape_cast %50 : vector<2x8xf32> to vector<2x8x1xf32>
    %52 = vector.broadcast %51 : vector<2x8x1xf32> to vector<2x8x8xf32>
    %53 = arith.subf %49, %52 : vector<2x8x8xf32>
    %54 = math.exp %53 : vector<2x8x8xf32>
    %cst_20 = arith.constant dense<0.000000e+00> : vector<2x8xf32>
    %55 = vector.multi_reduction <add>, %54, %cst_20 [2] : vector<2x8x8xf32> to vector<2x8xf32>
    %56 = vector.shape_cast %55 : vector<2x8xf32> to vector<2x8x1xf32>
    %57 = tpu.reciprocal %56 {approx = true} : vector<2x8x1xf32> -> vector<2x8x1xf32>
    %58 = vector.broadcast %57 : vector<2x8x1xf32> to vector<2x8x8xf32>
    %59 = arith.mulf %54, %58 : vector<2x8x8xf32>
    "tpu.trace_start"() <{level = 10 : i32, message = "bqk,bkd->bqd"}> : () -> ()
    %cst_21 = arith.constant dense<0.000000e+00> : vector<2x8x8xf32>
    %60 = tpu.matmul %59, %44, %cst_21 {dimension_numbers = #tpu.dot_dimension_numbers<[2], [1], [1], [2], [0, 0, 0, 1, 1, 2], [0], [0]>} : vector<2x8x8xf32>, vector<2x8x8xf32>, vector<2x8x8xf32> -> vector<2x8x8xf32>
    "tpu.trace_stop"() : () -> ()
    %61 = vector.extract_strided_slice %37 {offsets = [0, 0, 8], sizes = [2, 8, 8], strides = [1, 1, 1]} : vector<2x8x32xf32> to vector<2x8x8xf32>
    %62 = vector.extract_strided_slice %39 {offsets = [0, 0, 8], sizes = [2, 8, 8], strides = [1, 1, 1]} : vector<2x8x32xf32> to vector<2x8x8xf32>
    %63 = vector.extract_strided_slice %41 {offsets = [0, 0, 8], sizes = [2, 8, 8], strides = [1, 1, 1]} : vector<2x8x32xf32> to vector<2x8x8xf32>
    "tpu.trace_start"() <{level = 10 : i32, message = "bqd,bkd->bqk"}> : () -> ()
    %cst_22 = arith.constant dense<0.000000e+00> : vector<2x8x8xf32>
    %64 = tpu.matmul %61, %62, %cst_22 {dimension_numbers = #tpu.dot_dimension_numbers<[2], [2], [1], [1], [0, 0, 0, 1, 1, 1], [0], [0]>} : vector<2x8x8xf32>, vector<2x8x8xf32>, vector<2x8x8xf32> -> vector<2x8x8xf32>
    "tpu.trace_stop"() : () -> ()
    %cst_23 = arith.constant 0.353553385 : f32
    %65 = vector.broadcast %cst_23 : f32 to vector<2x8x8xf32>
    %66 = arith.mulf %64, %65 : vector<2x8x8xf32>
    %67 = vector.broadcast %6 : vector<1x8x8xf32> to vector<2x8x8xf32>
    %68 = arith.addf %66, %67 : vector<2x8x8xf32>
    %cst_24 = arith.constant dense<0xFF800000> : vector<2x8xf32>
    %69 = vector.multi_reduction <maximumf>, %68, %cst_24 [2] : vector<2x8x8xf32> to vector<2x8xf32>
    %70 = vector.shape_cast %69 : vector<2x8xf32> to vector<2x8x1xf32>
    %71 = vector.broadcast %70 : vector<2x8x1xf32> to vector<2x8x8xf32>
    %72 = arith.subf %68, %71 : vector<2x8x8xf32>
    %73 = math.exp %72 : vector<2x8x8xf32>
    %cst_25 = arith.constant dense<0.000000e+00> : vector<2x8xf32>
    %74 = vector.multi_reduction <add>, %73, %cst_25 [2] : vector<2x8x8xf32> to vector<2x8xf32>
    %75 = vector.shape_cast %74 : vector<2x8xf32> to vector<2x8x1xf32>
    %76 = tpu.reciprocal %75 {approx = true} : vector<2x8x1xf32> -> vector<2x8x1xf32>
    %77 = vector.broadcast %76 : vector<2x8x1xf32> to vector<2x8x8xf32>
    %78 = arith.mulf %73, %77 : vector<2x8x8xf32>
    "tpu.trace_start"() <{level = 10 : i32, message = "bqk,bkd->bqd"}> : () -> ()
    %cst_26 = arith.constant dense<0.000000e+00> : vector<2x8x8xf32>
    %79 = tpu.matmul %78, %63, %cst_26 {dimension_numbers = #tpu.dot_dimension_numbers<[2], [1], [1], [2], [0, 0, 0, 1, 1, 2], [0], [0]>} : vector<2x8x8xf32>, vector<2x8x8xf32>, vector<2x8x8xf32> -> vector<2x8x8xf32>
    "tpu.trace_stop"() : () -> ()
    %80 = vector.extract_strided_slice %37 {offsets = [0, 0, 16], sizes = [2, 8, 8], strides = [1, 1, 1]} : vector<2x8x32xf32> to vector<2x8x8xf32>
    %81 = vector.extract_strided_slice %39 {offsets = [0, 0, 16], sizes = [2, 8, 8], strides = [1, 1, 1]} : vector<2x8x32xf32> to vector<2x8x8xf32>
    %82 = vector.extract_strided_slice %41 {offsets = [0, 0, 16], sizes = [2, 8, 8], strides = [1, 1, 1]} : vector<2x8x32xf32> to vector<2x8x8xf32>
    "tpu.trace_start"() <{level = 10 : i32, message = "bqd,bkd->bqk"}> : () -> ()
    %cst_27 = arith.constant dense<0.000000e+00> : vector<2x8x8xf32>
    %83 = tpu.matmul %80, %81, %cst_27 {dimension_numbers = #tpu.dot_dimension_numbers<[2], [2], [1], [1], [0, 0, 0, 1, 1, 1], [0], [0]>} : vector<2x8x8xf32>, vector<2x8x8xf32>, vector<2x8x8xf32> -> vector<2x8x8xf32>
    "tpu.trace_stop"() : () -> ()
    %cst_28 = arith.constant 0.353553385 : f32
    %84 = vector.broadcast %cst_28 : f32 to vector<2x8x8xf32>
    %85 = arith.mulf %83, %84 : vector<2x8x8xf32>
    %86 = vector.broadcast %6 : vector<1x8x8xf32> to vector<2x8x8xf32>
    %87 = arith.addf %85, %86 : vector<2x8x8xf32>
    %cst_29 = arith.constant dense<0xFF800000> : vector<2x8xf32>
    %88 = vector.multi_reduction <maximumf>, %87, %cst_29 [2] : vector<2x8x8xf32> to vector<2x8xf32>
    %89 = vector.shape_cast %88 : vector<2x8xf32> to vector<2x8x1xf32>
    %90 = vector.broadcast %89 : vector<2x8x1xf32> to vector<2x8x8xf32>
    %91 = arith.subf %87, %90 : vector<2x8x8xf32>
    %92 = math.exp %91 : vector<2x8x8xf32>
    %cst_30 = arith.constant dense<0.000000e+00> : vector<2x8xf32>
    %93 = vector.multi_reduction <add>, %92, %cst_30 [2] : vector<2x8x8xf32> to vector<2x8xf32>
    %94 = vector.shape_cast %93 : vector<2x8xf32> to vector<2x8x1xf32>
    %95 = tpu.reciprocal %94 {approx = true} : vector<2x8x1xf32> -> vector<2x8x1xf32>
    %96 = vector.broadcast %95 : vector<2x8x1xf32> to vector<2x8x8xf32>
    %97 = arith.mulf %92, %96 : vector<2x8x8xf32>
    "tpu.trace_start"() <{level = 10 : i32, message = "bqk,bkd->bqd"}> : () -> ()
    %cst_31 = arith.constant dense<0.000000e+00> : vector<2x8x8xf32>
    %98 = tpu.matmul %97, %82, %cst_31 {dimension_numbers = #tpu.dot_dimension_numbers<[2], [1], [1], [2], [0, 0, 0, 1, 1, 2], [0], [0]>} : vector<2x8x8xf32>, vector<2x8x8xf32>, vector<2x8x8xf32> -> vector<2x8x8xf32>
    "tpu.trace_stop"() : () -> ()
    %99 = vector.extract_strided_slice %37 {offsets = [0, 0, 24], sizes = [2, 8, 8], strides = [1, 1, 1]} : vector<2x8x32xf32> to vector<2x8x8xf32>
    %100 = vector.extract_strided_slice %39 {offsets = [0, 0, 24], sizes = [2, 8, 8], strides = [1, 1, 1]} : vector<2x8x32xf32> to vector<2x8x8xf32>
    %101 = vector.extract_strided_slice %41 {offsets = [0, 0, 24], sizes = [2, 8, 8], strides = [1, 1, 1]} : vector<2x8x32xf32> to vector<2x8x8xf32>
    "tpu.trace_start"() <{level = 10 : i32, message = "bqd,bkd->bqk"}> : () -> ()
    %cst_32 = arith.constant dense<0.000000e+00> : vector<2x8x8xf32>
    %102 = tpu.matmul %99, %100, %cst_32 {dimension_numbers = #tpu.dot_dimension_numbers<[2], [2], [1], [1], [0, 0, 0, 1, 1, 1], [0], [0]>} : vector<2x8x8xf32>, vector<2x8x8xf32>, vector<2x8x8xf32> -> vector<2x8x8xf32>
    "tpu.trace_stop"() : () -> ()
    %cst_33 = arith.constant 0.353553385 : f32
    %103 = vector.broadcast %cst_33 : f32 to vector<2x8x8xf32>
    %104 = arith.mulf %102, %103 : vector<2x8x8xf32>
    %105 = vector.broadcast %6 : vector<1x8x8xf32> to vector<2x8x8xf32>
    %106 = arith.addf %104, %105 : vector<2x8x8xf32>
    %cst_34 = arith.constant dense<0xFF800000> : vector<2x8xf32>
    %107 = vector.multi_reduction <maximumf>, %106, %cst_34 [2] : vector<2x8x8xf32> to vector<2x8xf32>
    %108 = vector.shape_cast %107 : vector<2x8xf32> to vector<2x8x1xf32>
    %109 = vector.broadcast %108 : vector<2x8x1xf32> to vector<2x8x8xf32>
    %110 = arith.subf %106, %109 : vector<2x8x8xf32>
    %111 = math.exp %110 : vector<2x8x8xf32>
    %cst_35 = arith.constant dense<0.000000e+00> : vector<2x8xf32>
    %112 = vector.multi_reduction <add>, %111, %cst_35 [2] : vector<2x8x8xf32> to vector<2x8xf32>
    %113 = vector.shape_cast %112 : vector<2x8xf32> to vector<2x8x1xf32>
    %114 = tpu.reciprocal %113 {approx = true} : vector<2x8x1xf32> -> vector<2x8x1xf32>
    %115 = vector.broadcast %114 : vector<2x8x1xf32> to vector<2x8x8xf32>
    %116 = arith.mulf %111, %115 : vector<2x8x8xf32>
    "tpu.trace_start"() <{level = 10 : i32, message = "bqk,bkd->bqd"}> : () -> ()
    %cst_36 = arith.constant dense<0.000000e+00> : vector<2x8x8xf32>
    %117 = tpu.matmul %116, %101, %cst_36 {dimension_numbers = #tpu.dot_dimension_numbers<[2], [1], [1], [2], [0, 0, 0, 1, 1, 2], [0], [0]>} : vector<2x8x8xf32>, vector<2x8x8xf32>, vector<2x8x8xf32> -> vector<2x8x8xf32>
    "tpu.trace_stop"() : () -> ()
    %118 = tpu.concatenate %60, %79, %98, %117 in 2 : vector<2x8x8xf32>, vector<2x8x8xf32>, vector<2x8x8xf32>, vector<2x8x8xf32> -> vector<2x8x32xf32>
    %119 = vector.shape_cast %118 : vector<2x8x32xf32> to vector<16x32xf32>
    %c0_37 = arith.constant 0 : index
    %c0_38 = arith.constant 0 : index
    %c0_39 = arith.constant 0 : index
    %120 = vector.load %arg4[%c0_37, %c0_38, %c0_39] : memref<2x32x32xf32, #tpu.memory_space<vmem>>, vector<1x32x32xf32>
    %121 = vector.shape_cast %120 : vector<1x32x32xf32> to vector<32x32xf32>
    %cst_40 = arith.constant dense<0.000000e+00> : vector<16x32xf32>
    %122 = tpu.matmul %119, %121, %cst_40 {dimension_numbers = #tpu.dot_dimension_numbers<[1], [0], [0], [1], [0, 0, 1, 1], [], []>} : vector<16x32xf32>, vector<32x32xf32>, vector<16x32xf32> -> vector<16x32xf32>
    %123 = arith.addf %0, %122 : vector<16x32xf32>
    %c0_41 = arith.constant 0 : index
    %c0_42 = arith.constant 0 : index
    %c0_43 = arith.constant 0 : index
    %124 = vector.load %arg5[%c0_41, %c0_42, %c0_43] : memref<2x1x32xf32, #tpu.memory_space<vmem>>, vector<1x1x32xf32>
    %125 = vector.shape_cast %124 : vector<1x1x32xf32> to vector<1x32xf32>
    %c0_44 = arith.constant 0 : index
    %c0_45 = arith.constant 0 : index
    %c0_46 = arith.constant 0 : index
    %126 = vector.load %arg6[%c0_44, %c0_45, %c0_46] : memref<2x1x32xf32, #tpu.memory_space<vmem>>, vector<1x1x32xf32>
    %127 = vector.shape_cast %126 : vector<1x1x32xf32> to vector<1x32xf32>
    %cst_47 = arith.constant dense<0.000000e+00> : vector<16xf32>
    %128 = vector.multi_reduction <add>, %123, %cst_47 [1] : vector<16x32xf32> to vector<16xf32>
    %129 = vector.shape_cast %128 : vector<16xf32> to vector<16x1xf32>
    %cst_48 = arith.constant 3.200000e+01 : f32
    %130 = vector.broadcast %cst_48 : f32 to vector<16x1xf32>
    %131 = arith.divf %129, %130 : vector<16x1xf32>
    %132 = vector.broadcast %131 : vector<16x1xf32> to vector<16x32xf32>
    %133 = arith.subf %123, %132 : vector<16x32xf32>
    %134 = arith.mulf %133, %133 : vector<16x32xf32>
    %cst_49 = arith.constant dense<0.000000e+00> : vector<16xf32>
    %135 = vector.multi_reduction <add>, %134, %cst_49 [1] : vector<16x32xf32> to vector<16xf32>
    %136 = vector.shape_cast %135 : vector<16xf32> to vector<16x1xf32>
    %cst_50 = arith.constant 3.200000e+01 : f32
    %137 = vector.broadcast %cst_50 : f32 to vector<16x1xf32>
    %138 = arith.divf %136, %137 : vector<16x1xf32>
    %139 = vector.broadcast %131 : vector<16x1xf32> to vector<16x32xf32>
    %140 = arith.subf %123, %139 : vector<16x32xf32>
    %cst_51 = arith.constant 9.99999974E-6 : f32
    %141 = vector.broadcast %cst_51 : f32 to vector<16x1xf32>
    %142 = arith.addf %138, %141 : vector<16x1xf32>
    %143 = math.rsqrt %142 : vector<16x1xf32>
    %144 = vector.broadcast %143 : vector<16x1xf32> to vector<16x32xf32>
    %145 = arith.mulf %140, %144 : vector<16x32xf32>
    %146 = vector.broadcast %125 : vector<1x32xf32> to vector<16x32xf32>
    %147 = arith.mulf %145, %146 : vector<16x32xf32>
    %148 = vector.broadcast %127 : vector<1x32xf32> to vector<16x32xf32>
    %149 = arith.addf %147, %148 : vector<16x32xf32>
    %c0_52 = arith.constant 0 : index
    %c0_53 = arith.constant 0 : index
    %c0_54 = arith.constant 0 : index
    %150 = vector.load %arg7[%c0_52, %c0_53, %c0_54] : memref<2x32x128xf32, #tpu.memory_space<vmem>>, vector<1x32x128xf32>
    %151 = vector.shape_cast %150 : vector<1x32x128xf32> to vector<32x128xf32>
    %cst_55 = arith.constant dense<0.000000e+00> : vector<16x128xf32>
    %152 = tpu.matmul %149, %151, %cst_55 {dimension_numbers = #tpu.dot_dimension_numbers<[1], [0], [0], [1], [0, 0, 1, 1], [], []>} : vector<16x32xf32>, vector<32x128xf32>, vector<16x128xf32> -> vector<16x128xf32>
    %c0_56 = arith.constant 0 : index
    %c0_57 = arith.constant 0 : index
    %c0_58 = arith.constant 0 : index
    %153 = vector.load %arg8[%c0_56, %c0_57, %c0_58] : memref<2x1x128xf32, #tpu.memory_space<vmem>>, vector<1x1x128xf32>
    %154 = vector.shape_cast %153 : vector<1x1x128xf32> to vector<1x128xf32>
    %155 = vector.broadcast %154 : vector<1x128xf32> to vector<16x128xf32>
    %156 = arith.addf %152, %155 : vector<16x128xf32>
    %cst_59 = arith.constant 5.000000e-01 : f32
    %157 = vector.broadcast %cst_59 : f32 to vector<16x128xf32>
    %158 = arith.mulf %157, %156 : vector<16x128xf32>
    %cst_60 = arith.constant 4.471500e-02 : f32
    %159 = vector.broadcast %cst_60 : f32 to vector<16x128xf32>
    %160 = arith.mulf %159, %156 : vector<16x128xf32>
    %161 = arith.mulf %160, %156 : vector<16x128xf32>
    %162 = arith.mulf %161, %156 : vector<16x128xf32>
    %163 = arith.addf %156, %162 : vector<16x128xf32>
    %cst_61 = arith.constant 0.797884583 : f32
    %164 = vector.broadcast %cst_61 : f32 to vector<16x128xf32>
    %165 = arith.mulf %164, %163 : vector<16x128xf32>
    %166 = math.tanh %165 : vector<16x128xf32>
    %cst_62 = arith.constant 1.000000e+00 : f32
    %167 = vector.broadcast %cst_62 : f32 to vector<16x128xf32>
    %168 = arith.addf %167, %166 : vector<16x128xf32>
    %169 = arith.mulf %158, %168 : vector<16x128xf32>
    %c0_63 = arith.constant 0 : index
    %c0_64 = arith.constant 0 : index
    %c0_65 = arith.constant 0 : index
    %170 = vector.load %arg9[%c0_63, %c0_64, %c0_65] : memref<2x128x32xf32, #tpu.memory_space<vmem>>, vector<1x128x32xf32>
    %171 = vector.shape_cast %170 : vector<1x128x32xf32> to vector<128x32xf32>
    %cst_66 = arith.constant dense<0.000000e+00> : vector<16x32xf32>
    %172 = tpu.matmul %169, %171, %cst_66 {dimension_numbers = #tpu.dot_dimension_numbers<[1], [0], [0], [1], [0, 0, 1, 1], [], []>} : vector<16x128xf32>, vector<128x32xf32>, vector<16x32xf32> -> vector<16x32xf32>
    %173 = arith.addf %123, %172 : vector<16x32xf32>
    %c0_67 = arith.constant 0 : index
    %c0_68 = arith.constant 0 : index
    %c0_69 = arith.constant 0 : index
    %174 = vector.load %arg10[%c0_67, %c0_68, %c0_69] : memref<2x1x32xf32, #tpu.memory_space<vmem>>, vector<1x1x32xf32>
    %175 = vector.shape_cast %174 : vector<1x1x32xf32> to vector<1x32xf32>
    %176 = vector.broadcast %175 : vector<1x32xf32> to vector<16x32xf32>
    %177 = arith.addf %173, %176 : vector<16x32xf32>
    %c1 = arith.constant 1 : index
    %c0_70 = arith.constant 0 : index
    %c0_71 = arith.constant 0 : index
    %178 = vector.load %arg1[%c1, %c0_70, %c0_71] : memref<2x1x32xf32, #tpu.memory_space<vmem>>, vector<1x1x32xf32>
    %179 = vector.shape_cast %178 : vector<1x1x32xf32> to vector<1x32xf32>
    %c1_72 = arith.constant 1 : index
    %c0_73 = arith.constant 0 : index
    %c0_74 = arith.constant 0 : index
    %180 = vector.load %arg2[%c1_72, %c0_73, %c0_74] : memref<2x1x32xf32, #tpu.memory_space<vmem>>, vector<1x1x32xf32>
    %181 = vector.shape_cast %180 : vector<1x1x32xf32> to vector<1x32xf32>
    %cst_75 = arith.constant dense<0.000000e+00> : vector<16xf32>
    %182 = vector.multi_reduction <add>, %177, %cst_75 [1] : vector<16x32xf32> to vector<16xf32>
    %183 = vector.shape_cast %182 : vector<16xf32> to vector<16x1xf32>
    %cst_76 = arith.constant 3.200000e+01 : f32
    %184 = vector.broadcast %cst_76 : f32 to vector<16x1xf32>
    %185 = arith.divf %183, %184 : vector<16x1xf32>
    %186 = vector.broadcast %185 : vector<16x1xf32> to vector<16x32xf32>
    %187 = arith.subf %177, %186 : vector<16x32xf32>
    %188 = arith.mulf %187, %187 : vector<16x32xf32>
    %cst_77 = arith.constant dense<0.000000e+00> : vector<16xf32>
    %189 = vector.multi_reduction <add>, %188, %cst_77 [1] : vector<16x32xf32> to vector<16xf32>
    %190 = vector.shape_cast %189 : vector<16xf32> to vector<16x1xf32>
    %cst_78 = arith.constant 3.200000e+01 : f32
    %191 = vector.broadcast %cst_78 : f32 to vector<16x1xf32>
    %192 = arith.divf %190, %191 : vector<16x1xf32>
    %193 = vector.broadcast %185 : vector<16x1xf32> to vector<16x32xf32>
    %194 = arith.subf %177, %193 : vector<16x32xf32>
    %cst_79 = arith.constant 9.99999974E-6 : f32
    %195 = vector.broadcast %cst_79 : f32 to vector<16x1xf32>
    %196 = arith.addf %192, %195 : vector<16x1xf32>
    %197 = math.rsqrt %196 : vector<16x1xf32>
    %198 = vector.broadcast %197 : vector<16x1xf32> to vector<16x32xf32>
    %199 = arith.mulf %194, %198 : vector<16x32xf32>
    %200 = vector.broadcast %179 : vector<1x32xf32> to vector<16x32xf32>
    %201 = arith.mulf %199, %200 : vector<16x32xf32>
    %202 = vector.broadcast %181 : vector<1x32xf32> to vector<16x32xf32>
    %203 = arith.addf %201, %202 : vector<16x32xf32>
    %c1_80 = arith.constant 1 : index
    %c0_81 = arith.constant 0 : index
    %c0_82 = arith.constant 0 : index
    %204 = vector.load %arg3[%c1_80, %c0_81, %c0_82] : memref<2x32x96xf32, #tpu.memory_space<vmem>>, vector<1x32x96xf32>
    %205 = vector.shape_cast %204 : vector<1x32x96xf32> to vector<32x96xf32>
    %cst_83 = arith.constant dense<0.000000e+00> : vector<16x96xf32>
    %206 = tpu.matmul %203, %205, %cst_83 {dimension_numbers = #tpu.dot_dimension_numbers<[1], [0], [0], [1], [0, 0, 1, 1], [], []>} : vector<16x32xf32>, vector<32x96xf32>, vector<16x96xf32> -> vector<16x96xf32>
    %207 = vector.extract_strided_slice %206 {offsets = [0, 0], sizes = [16, 32], strides = [1, 1]} : vector<16x96xf32> to vector<16x32xf32>
    %208 = vector.shape_cast %207 : vector<16x32xf32> to vector<2x8x32xf32>
    %209 = vector.extract_strided_slice %206 {offsets = [0, 32], sizes = [16, 32], strides = [1, 1]} : vector<16x96xf32> to vector<16x32xf32>
    %210 = vector.shape_cast %209 : vector<16x32xf32> to vector<2x8x32xf32>
    %211 = vector.extract_strided_slice %206 {offsets = [0, 64], sizes = [16, 32], strides = [1, 1]} : vector<16x96xf32> to vector<16x32xf32>
    %212 = vector.shape_cast %211 : vector<16x32xf32> to vector<2x8x32xf32>
    %213 = vector.extract_strided_slice %208 {offsets = [0, 0, 0], sizes = [2, 8, 8], strides = [1, 1, 1]} : vector<2x8x32xf32> to vector<2x8x8xf32>
    %214 = vector.extract_strided_slice %210 {offsets = [0, 0, 0], sizes = [2, 8, 8], strides = [1, 1, 1]} : vector<2x8x32xf32> to vector<2x8x8xf32>
    %215 = vector.extract_strided_slice %212 {offsets = [0, 0, 0], sizes = [2, 8, 8], strides = [1, 1, 1]} : vector<2x8x32xf32> to vector<2x8x8xf32>
    "tpu.trace_start"() <{level = 10 : i32, message = "bqd,bkd->bqk"}> : () -> ()
    %cst_84 = arith.constant dense<0.000000e+00> : vector<2x8x8xf32>
    %216 = tpu.matmul %213, %214, %cst_84 {dimension_numbers = #tpu.dot_dimension_numbers<[2], [2], [1], [1], [0, 0, 0, 1, 1, 1], [0], [0]>} : vector<2x8x8xf32>, vector<2x8x8xf32>, vector<2x8x8xf32> -> vector<2x8x8xf32>
    "tpu.trace_stop"() : () -> ()
    %cst_85 = arith.constant 0.353553385 : f32
    %217 = vector.broadcast %cst_85 : f32 to vector<2x8x8xf32>
    %218 = arith.mulf %216, %217 : vector<2x8x8xf32>
    %219 = vector.broadcast %6 : vector<1x8x8xf32> to vector<2x8x8xf32>
    %220 = arith.addf %218, %219 : vector<2x8x8xf32>
    %cst_86 = arith.constant dense<0xFF800000> : vector<2x8xf32>
    %221 = vector.multi_reduction <maximumf>, %220, %cst_86 [2] : vector<2x8x8xf32> to vector<2x8xf32>
    %222 = vector.shape_cast %221 : vector<2x8xf32> to vector<2x8x1xf32>
    %223 = vector.broadcast %222 : vector<2x8x1xf32> to vector<2x8x8xf32>
    %224 = arith.subf %220, %223 : vector<2x8x8xf32>
    %225 = math.exp %224 : vector<2x8x8xf32>
    %cst_87 = arith.constant dense<0.000000e+00> : vector<2x8xf32>
    %226 = vector.multi_reduction <add>, %225, %cst_87 [2] : vector<2x8x8xf32> to vector<2x8xf32>
    %227 = vector.shape_cast %226 : vector<2x8xf32> to vector<2x8x1xf32>
    %228 = tpu.reciprocal %227 {approx = true} : vector<2x8x1xf32> -> vector<2x8x1xf32>
    %229 = vector.broadcast %228 : vector<2x8x1xf32> to vector<2x8x8xf32>
    %230 = arith.mulf %225, %229 : vector<2x8x8xf32>
    "tpu.trace_start"() <{level = 10 : i32, message = "bqk,bkd->bqd"}> : () -> ()
    %cst_88 = arith.constant dense<0.000000e+00> : vector<2x8x8xf32>
    %231 = tpu.matmul %230, %215, %cst_88 {dimension_numbers = #tpu.dot_dimension_numbers<[2], [1], [1], [2], [0, 0, 0, 1, 1, 2], [0], [0]>} : vector<2x8x8xf32>, vector<2x8x8xf32>, vector<2x8x8xf32> -> vector<2x8x8xf32>
    "tpu.trace_stop"() : () -> ()
    %232 = vector.extract_strided_slice %208 {offsets = [0, 0, 8], sizes = [2, 8, 8], strides = [1, 1, 1]} : vector<2x8x32xf32> to vector<2x8x8xf32>
    %233 = vector.extract_strided_slice %210 {offsets = [0, 0, 8], sizes = [2, 8, 8], strides = [1, 1, 1]} : vector<2x8x32xf32> to vector<2x8x8xf32>
    %234 = vector.extract_strided_slice %212 {offsets = [0, 0, 8], sizes = [2, 8, 8], strides = [1, 1, 1]} : vector<2x8x32xf32> to vector<2x8x8xf32>
    "tpu.trace_start"() <{level = 10 : i32, message = "bqd,bkd->bqk"}> : () -> ()
    %cst_89 = arith.constant dense<0.000000e+00> : vector<2x8x8xf32>
    %235 = tpu.matmul %232, %233, %cst_89 {dimension_numbers = #tpu.dot_dimension_numbers<[2], [2], [1], [1], [0, 0, 0, 1, 1, 1], [0], [0]>} : vector<2x8x8xf32>, vector<2x8x8xf32>, vector<2x8x8xf32> -> vector<2x8x8xf32>
    "tpu.trace_stop"() : () -> ()
    %cst_90 = arith.constant 0.353553385 : f32
    %236 = vector.broadcast %cst_90 : f32 to vector<2x8x8xf32>
    %237 = arith.mulf %235, %236 : vector<2x8x8xf32>
    %238 = vector.broadcast %6 : vector<1x8x8xf32> to vector<2x8x8xf32>
    %239 = arith.addf %237, %238 : vector<2x8x8xf32>
    %cst_91 = arith.constant dense<0xFF800000> : vector<2x8xf32>
    %240 = vector.multi_reduction <maximumf>, %239, %cst_91 [2] : vector<2x8x8xf32> to vector<2x8xf32>
    %241 = vector.shape_cast %240 : vector<2x8xf32> to vector<2x8x1xf32>
    %242 = vector.broadcast %241 : vector<2x8x1xf32> to vector<2x8x8xf32>
    %243 = arith.subf %239, %242 : vector<2x8x8xf32>
    %244 = math.exp %243 : vector<2x8x8xf32>
    %cst_92 = arith.constant dense<0.000000e+00> : vector<2x8xf32>
    %245 = vector.multi_reduction <add>, %244, %cst_92 [2] : vector<2x8x8xf32> to vector<2x8xf32>
    %246 = vector.shape_cast %245 : vector<2x8xf32> to vector<2x8x1xf32>
    %247 = tpu.reciprocal %246 {approx = true} : vector<2x8x1xf32> -> vector<2x8x1xf32>
    %248 = vector.broadcast %247 : vector<2x8x1xf32> to vector<2x8x8xf32>
    %249 = arith.mulf %244, %248 : vector<2x8x8xf32>
    "tpu.trace_start"() <{level = 10 : i32, message = "bqk,bkd->bqd"}> : () -> ()
    %cst_93 = arith.constant dense<0.000000e+00> : vector<2x8x8xf32>
    %250 = tpu.matmul %249, %234, %cst_93 {dimension_numbers = #tpu.dot_dimension_numbers<[2], [1], [1], [2], [0, 0, 0, 1, 1, 2], [0], [0]>} : vector<2x8x8xf32>, vector<2x8x8xf32>, vector<2x8x8xf32> -> vector<2x8x8xf32>
    "tpu.trace_stop"() : () -> ()
    %251 = vector.extract_strided_slice %208 {offsets = [0, 0, 16], sizes = [2, 8, 8], strides = [1, 1, 1]} : vector<2x8x32xf32> to vector<2x8x8xf32>
    %252 = vector.extract_strided_slice %210 {offsets = [0, 0, 16], sizes = [2, 8, 8], strides = [1, 1, 1]} : vector<2x8x32xf32> to vector<2x8x8xf32>
    %253 = vector.extract_strided_slice %212 {offsets = [0, 0, 16], sizes = [2, 8, 8], strides = [1, 1, 1]} : vector<2x8x32xf32> to vector<2x8x8xf32>
    "tpu.trace_start"() <{level = 10 : i32, message = "bqd,bkd->bqk"}> : () -> ()
    %cst_94 = arith.constant dense<0.000000e+00> : vector<2x8x8xf32>
    %254 = tpu.matmul %251, %252, %cst_94 {dimension_numbers = #tpu.dot_dimension_numbers<[2], [2], [1], [1], [0, 0, 0, 1, 1, 1], [0], [0]>} : vector<2x8x8xf32>, vector<2x8x8xf32>, vector<2x8x8xf32> -> vector<2x8x8xf32>
    "tpu.trace_stop"() : () -> ()
    %cst_95 = arith.constant 0.353553385 : f32
    %255 = vector.broadcast %cst_95 : f32 to vector<2x8x8xf32>
    %256 = arith.mulf %254, %255 : vector<2x8x8xf32>
    %257 = vector.broadcast %6 : vector<1x8x8xf32> to vector<2x8x8xf32>
    %258 = arith.addf %256, %257 : vector<2x8x8xf32>
    %cst_96 = arith.constant dense<0xFF800000> : vector<2x8xf32>
    %259 = vector.multi_reduction <maximumf>, %258, %cst_96 [2] : vector<2x8x8xf32> to vector<2x8xf32>
    %260 = vector.shape_cast %259 : vector<2x8xf32> to vector<2x8x1xf32>
    %261 = vector.broadcast %260 : vector<2x8x1xf32> to vector<2x8x8xf32>
    %262 = arith.subf %258, %261 : vector<2x8x8xf32>
    %263 = math.exp %262 : vector<2x8x8xf32>
    %cst_97 = arith.constant dense<0.000000e+00> : vector<2x8xf32>
    %264 = vector.multi_reduction <add>, %263, %cst_97 [2] : vector<2x8x8xf32> to vector<2x8xf32>
    %265 = vector.shape_cast %264 : vector<2x8xf32> to vector<2x8x1xf32>
    %266 = tpu.reciprocal %265 {approx = true} : vector<2x8x1xf32> -> vector<2x8x1xf32>
    %267 = vector.broadcast %266 : vector<2x8x1xf32> to vector<2x8x8xf32>
    %268 = arith.mulf %263, %267 : vector<2x8x8xf32>
    "tpu.trace_start"() <{level = 10 : i32, message = "bqk,bkd->bqd"}> : () -> ()
    %cst_98 = arith.constant dense<0.000000e+00> : vector<2x8x8xf32>
    %269 = tpu.matmul %268, %253, %cst_98 {dimension_numbers = #tpu.dot_dimension_numbers<[2], [1], [1], [2], [0, 0, 0, 1, 1, 2], [0], [0]>} : vector<2x8x8xf32>, vector<2x8x8xf32>, vector<2x8x8xf32> -> vector<2x8x8xf32>
    "tpu.trace_stop"() : () -> ()
    %270 = vector.extract_strided_slice %208 {offsets = [0, 0, 24], sizes = [2, 8, 8], strides = [1, 1, 1]} : vector<2x8x32xf32> to vector<2x8x8xf32>
    %271 = vector.extract_strided_slice %210 {offsets = [0, 0, 24], sizes = [2, 8, 8], strides = [1, 1, 1]} : vector<2x8x32xf32> to vector<2x8x8xf32>
    %272 = vector.extract_strided_slice %212 {offsets = [0, 0, 24], sizes = [2, 8, 8], strides = [1, 1, 1]} : vector<2x8x32xf32> to vector<2x8x8xf32>
    "tpu.trace_start"() <{level = 10 : i32, message = "bqd,bkd->bqk"}> : () -> ()
    %cst_99 = arith.constant dense<0.000000e+00> : vector<2x8x8xf32>
    %273 = tpu.matmul %270, %271, %cst_99 {dimension_numbers = #tpu.dot_dimension_numbers<[2], [2], [1], [1], [0, 0, 0, 1, 1, 1], [0], [0]>} : vector<2x8x8xf32>, vector<2x8x8xf32>, vector<2x8x8xf32> -> vector<2x8x8xf32>
    "tpu.trace_stop"() : () -> ()
    %cst_100 = arith.constant 0.353553385 : f32
    %274 = vector.broadcast %cst_100 : f32 to vector<2x8x8xf32>
    %275 = arith.mulf %273, %274 : vector<2x8x8xf32>
    %276 = vector.broadcast %6 : vector<1x8x8xf32> to vector<2x8x8xf32>
    %277 = arith.addf %275, %276 : vector<2x8x8xf32>
    %cst_101 = arith.constant dense<0xFF800000> : vector<2x8xf32>
    %278 = vector.multi_reduction <maximumf>, %277, %cst_101 [2] : vector<2x8x8xf32> to vector<2x8xf32>
    %279 = vector.shape_cast %278 : vector<2x8xf32> to vector<2x8x1xf32>
    %280 = vector.broadcast %279 : vector<2x8x1xf32> to vector<2x8x8xf32>
    %281 = arith.subf %277, %280 : vector<2x8x8xf32>
    %282 = math.exp %281 : vector<2x8x8xf32>
    %cst_102 = arith.constant dense<0.000000e+00> : vector<2x8xf32>
    %283 = vector.multi_reduction <add>, %282, %cst_102 [2] : vector<2x8x8xf32> to vector<2x8xf32>
    %284 = vector.shape_cast %283 : vector<2x8xf32> to vector<2x8x1xf32>
    %285 = tpu.reciprocal %284 {approx = true} : vector<2x8x1xf32> -> vector<2x8x1xf32>
    %286 = vector.broadcast %285 : vector<2x8x1xf32> to vector<2x8x8xf32>
    %287 = arith.mulf %282, %286 : vector<2x8x8xf32>
    "tpu.trace_start"() <{level = 10 : i32, message = "bqk,bkd->bqd"}> : () -> ()
    %cst_103 = arith.constant dense<0.000000e+00> : vector<2x8x8xf32>
    %288 = tpu.matmul %287, %272, %cst_103 {dimension_numbers = #tpu.dot_dimension_numbers<[2], [1], [1], [2], [0, 0, 0, 1, 1, 2], [0], [0]>} : vector<2x8x8xf32>, vector<2x8x8xf32>, vector<2x8x8xf32> -> vector<2x8x8xf32>
    "tpu.trace_stop"() : () -> ()
    %289 = tpu.concatenate %231, %250, %269, %288 in 2 : vector<2x8x8xf32>, vector<2x8x8xf32>, vector<2x8x8xf32>, vector<2x8x8xf32> -> vector<2x8x32xf32>
    %290 = vector.shape_cast %289 : vector<2x8x32xf32> to vector<16x32xf32>
    %c1_104 = arith.constant 1 : index
    %c0_105 = arith.constant 0 : index
    %c0_106 = arith.constant 0 : index
    %291 = vector.load %arg4[%c1_104, %c0_105, %c0_106] : memref<2x32x32xf32, #tpu.memory_space<vmem>>, vector<1x32x32xf32>
    %292 = vector.shape_cast %291 : vector<1x32x32xf32> to vector<32x32xf32>
    %cst_107 = arith.constant dense<0.000000e+00> : vector<16x32xf32>
    %293 = tpu.matmul %290, %292, %cst_107 {dimension_numbers = #tpu.dot_dimension_numbers<[1], [0], [0], [1], [0, 0, 1, 1], [], []>} : vector<16x32xf32>, vector<32x32xf32>, vector<16x32xf32> -> vector<16x32xf32>
    %294 = arith.addf %177, %293 : vector<16x32xf32>
    %c1_108 = arith.constant 1 : index
    %c0_109 = arith.constant 0 : index
    %c0_110 = arith.constant 0 : index
    %295 = vector.load %arg5[%c1_108, %c0_109, %c0_110] : memref<2x1x32xf32, #tpu.memory_space<vmem>>, vector<1x1x32xf32>
    %296 = vector.shape_cast %295 : vector<1x1x32xf32> to vector<1x32xf32>
    %c1_111 = arith.constant 1 : index
    %c0_112 = arith.constant 0 : index
    %c0_113 = arith.constant 0 : index
    %297 = vector.load %arg6[%c1_111, %c0_112, %c0_113] : memref<2x1x32xf32, #tpu.memory_space<vmem>>, vector<1x1x32xf32>
    %298 = vector.shape_cast %297 : vector<1x1x32xf32> to vector<1x32xf32>
    %cst_114 = arith.constant dense<0.000000e+00> : vector<16xf32>
    %299 = vector.multi_reduction <add>, %294, %cst_114 [1] : vector<16x32xf32> to vector<16xf32>
    %300 = vector.shape_cast %299 : vector<16xf32> to vector<16x1xf32>
    %cst_115 = arith.constant 3.200000e+01 : f32
    %301 = vector.broadcast %cst_115 : f32 to vector<16x1xf32>
    %302 = arith.divf %300, %301 : vector<16x1xf32>
    %303 = vector.broadcast %302 : vector<16x1xf32> to vector<16x32xf32>
    %304 = arith.subf %294, %303 : vector<16x32xf32>
    %305 = arith.mulf %304, %304 : vector<16x32xf32>
    %cst_116 = arith.constant dense<0.000000e+00> : vector<16xf32>
    %306 = vector.multi_reduction <add>, %305, %cst_116 [1] : vector<16x32xf32> to vector<16xf32>
    %307 = vector.shape_cast %306 : vector<16xf32> to vector<16x1xf32>
    %cst_117 = arith.constant 3.200000e+01 : f32
    %308 = vector.broadcast %cst_117 : f32 to vector<16x1xf32>
    %309 = arith.divf %307, %308 : vector<16x1xf32>
    %310 = vector.broadcast %302 : vector<16x1xf32> to vector<16x32xf32>
    %311 = arith.subf %294, %310 : vector<16x32xf32>
    %cst_118 = arith.constant 9.99999974E-6 : f32
    %312 = vector.broadcast %cst_118 : f32 to vector<16x1xf32>
    %313 = arith.addf %309, %312 : vector<16x1xf32>
    %314 = math.rsqrt %313 : vector<16x1xf32>
    %315 = vector.broadcast %314 : vector<16x1xf32> to vector<16x32xf32>
    %316 = arith.mulf %311, %315 : vector<16x32xf32>
    %317 = vector.broadcast %296 : vector<1x32xf32> to vector<16x32xf32>
    %318 = arith.mulf %316, %317 : vector<16x32xf32>
    %319 = vector.broadcast %298 : vector<1x32xf32> to vector<16x32xf32>
    %320 = arith.addf %318, %319 : vector<16x32xf32>
    %c1_119 = arith.constant 1 : index
    %c0_120 = arith.constant 0 : index
    %c0_121 = arith.constant 0 : index
    %321 = vector.load %arg7[%c1_119, %c0_120, %c0_121] : memref<2x32x128xf32, #tpu.memory_space<vmem>>, vector<1x32x128xf32>
    %322 = vector.shape_cast %321 : vector<1x32x128xf32> to vector<32x128xf32>
    %cst_122 = arith.constant dense<0.000000e+00> : vector<16x128xf32>
    %323 = tpu.matmul %320, %322, %cst_122 {dimension_numbers = #tpu.dot_dimension_numbers<[1], [0], [0], [1], [0, 0, 1, 1], [], []>} : vector<16x32xf32>, vector<32x128xf32>, vector<16x128xf32> -> vector<16x128xf32>
    %c1_123 = arith.constant 1 : index
    %c0_124 = arith.constant 0 : index
    %c0_125 = arith.constant 0 : index
    %324 = vector.load %arg8[%c1_123, %c0_124, %c0_125] : memref<2x1x128xf32, #tpu.memory_space<vmem>>, vector<1x1x128xf32>
    %325 = vector.shape_cast %324 : vector<1x1x128xf32> to vector<1x128xf32>
    %326 = vector.broadcast %325 : vector<1x128xf32> to vector<16x128xf32>
    %327 = arith.addf %323, %326 : vector<16x128xf32>
    %cst_126 = arith.constant 5.000000e-01 : f32
    %328 = vector.broadcast %cst_126 : f32 to vector<16x128xf32>
    %329 = arith.mulf %328, %327 : vector<16x128xf32>
    %cst_127 = arith.constant 4.471500e-02 : f32
    %330 = vector.broadcast %cst_127 : f32 to vector<16x128xf32>
    %331 = arith.mulf %330, %327 : vector<16x128xf32>
    %332 = arith.mulf %331, %327 : vector<16x128xf32>
    %333 = arith.mulf %332, %327 : vector<16x128xf32>
    %334 = arith.addf %327, %333 : vector<16x128xf32>
    %cst_128 = arith.constant 0.797884583 : f32
    %335 = vector.broadcast %cst_128 : f32 to vector<16x128xf32>
    %336 = arith.mulf %335, %334 : vector<16x128xf32>
    %337 = math.tanh %336 : vector<16x128xf32>
    %cst_129 = arith.constant 1.000000e+00 : f32
    %338 = vector.broadcast %cst_129 : f32 to vector<16x128xf32>
    %339 = arith.addf %338, %337 : vector<16x128xf32>
    %340 = arith.mulf %329, %339 : vector<16x128xf32>
    %c1_130 = arith.constant 1 : index
    %c0_131 = arith.constant 0 : index
    %c0_132 = arith.constant 0 : index
    %341 = vector.load %arg9[%c1_130, %c0_131, %c0_132] : memref<2x128x32xf32, #tpu.memory_space<vmem>>, vector<1x128x32xf32>
    %342 = vector.shape_cast %341 : vector<1x128x32xf32> to vector<128x32xf32>
    %cst_133 = arith.constant dense<0.000000e+00> : vector<16x32xf32>
    %343 = tpu.matmul %340, %342, %cst_133 {dimension_numbers = #tpu.dot_dimension_numbers<[1], [0], [0], [1], [0, 0, 1, 1], [], []>} : vector<16x128xf32>, vector<128x32xf32>, vector<16x32xf32> -> vector<16x32xf32>
    %344 = arith.addf %294, %343 : vector<16x32xf32>
    %c1_134 = arith.constant 1 : index
    %c0_135 = arith.constant 0 : index
    %c0_136 = arith.constant 0 : index
    %345 = vector.load %arg10[%c1_134, %c0_135, %c0_136] : memref<2x1x32xf32, #tpu.memory_space<vmem>>, vector<1x1x32xf32>
    %346 = vector.shape_cast %345 : vector<1x1x32xf32> to vector<1x32xf32>
    %347 = vector.broadcast %346 : vector<1x32xf32> to vector<16x32xf32>
    %348 = arith.addf %344, %347 : vector<16x32xf32>
    %c0_137 = arith.constant 0 : index
    %c0_138 = arith.constant 0 : index
    %349 = vector.load %arg11[%c0_137, %c0_138] : memref<1x32xf32, #tpu.memory_space<vmem>>, vector<1x32xf32>
    %c0_139 = arith.constant 0 : index
    %c0_140 = arith.constant 0 : index
    %350 = vector.load %arg12[%c0_139, %c0_140] : memref<1x32xf32, #tpu.memory_space<vmem>>, vector<1x32xf32>
    %cst_141 = arith.constant dense<0.000000e+00> : vector<16xf32>
    %351 = vector.multi_reduction <add>, %348, %cst_141 [1] : vector<16x32xf32> to vector<16xf32>
    %352 = vector.shape_cast %351 : vector<16xf32> to vector<16x1xf32>
    %cst_142 = arith.constant 3.200000e+01 : f32
    %353 = vector.broadcast %cst_142 : f32 to vector<16x1xf32>
    %354 = arith.divf %352, %353 : vector<16x1xf32>
    %355 = vector.broadcast %354 : vector<16x1xf32> to vector<16x32xf32>
    %356 = arith.subf %348, %355 : vector<16x32xf32>
    %357 = arith.mulf %356, %356 : vector<16x32xf32>
    %cst_143 = arith.constant dense<0.000000e+00> : vector<16xf32>
    %358 = vector.multi_reduction <add>, %357, %cst_143 [1] : vector<16x32xf32> to vector<16xf32>
    %359 = vector.shape_cast %358 : vector<16xf32> to vector<16x1xf32>
    %cst_144 = arith.constant 3.200000e+01 : f32
    %360 = vector.broadcast %cst_144 : f32 to vector<16x1xf32>
    %361 = arith.divf %359, %360 : vector<16x1xf32>
    %362 = vector.broadcast %354 : vector<16x1xf32> to vector<16x32xf32>
    %363 = arith.subf %348, %362 : vector<16x32xf32>
    %cst_145 = arith.constant 9.99999974E-6 : f32
    %364 = vector.broadcast %cst_145 : f32 to vector<16x1xf32>
    %365 = arith.addf %361, %364 : vector<16x1xf32>
    %366 = math.rsqrt %365 : vector<16x1xf32>
    %367 = vector.broadcast %366 : vector<16x1xf32> to vector<16x32xf32>
    %368 = arith.mulf %363, %367 : vector<16x32xf32>
    %369 = vector.broadcast %349 : vector<1x32xf32> to vector<16x32xf32>
    %370 = arith.mulf %368, %369 : vector<16x32xf32>
    %371 = vector.broadcast %350 : vector<1x32xf32> to vector<16x32xf32>
    %372 = arith.addf %370, %371 : vector<16x32xf32>
    %c0_146 = arith.constant 0 : index
    %c0_147 = arith.constant 0 : index
    %373 = vector.load %arg13[%c0_146, %c0_147] : memref<32x128xf32, #tpu.memory_space<vmem>>, vector<32x128xf32>
    %cst_148 = arith.constant dense<0.000000e+00> : vector<16x128xf32>
    %374 = tpu.matmul %372, %373, %cst_148 {dimension_numbers = #tpu.dot_dimension_numbers<[1], [0], [0], [1], [0, 0, 1, 1], [], []>} : vector<16x32xf32>, vector<32x128xf32>, vector<16x128xf32> -> vector<16x128xf32>
    %c0_149 = arith.constant 0 : index
    %c0_150 = arith.constant 0 : index
    %375 = vector.load %arg14[%c0_149, %c0_150] : memref<16x128xf32, #tpu.memory_space<vmem>>, vector<16x128xf32>
    tpu.vector_store %arg14[%c0_149, %c0_150], %374 {strides = array<i32>} : memref<16x128xf32, #tpu.memory_space<vmem>>, vector<16x128xf32>,
    return
  }
}

</mosaic_0001>

<llo_original>
// kernel: gpt_forward.1
$region0: #{gpt_forward.1}
  #allocation0 [shape = 'u32[]', space=smem, size = 0x4, offset = 0x4, fixed_abs, tag = 'smem constant byte address 0x4 - core index']
  #allocation1 [shape = 'u32[144,128]{1,0:T(1,128)}', space=vmem, size = 0x12000, scoped, tag = 'internal scratch']
  %s0 = inlined_call_operand.vmem [shape: f32[16,32], index: 0, kind: input, shape index: {}]
  %s1 = inlined_call_operand.vmem [shape: f32[2,1,32], index: 1, kind: input, shape index: {}]
  %s2 = inlined_call_operand.vmem [shape: f32[2,1,32], index: 2, kind: input, shape index: {}]
  %s3 = inlined_call_operand.vmem [shape: f32[2,32,96], index: 3, kind: input, shape index: {}]
  %s4 = inlined_call_operand.vmem [shape: f32[2,32,32], index: 4, kind: input, shape index: {}]
  %s5 = inlined_call_operand.vmem [shape: f32[2,1,32], index: 5, kind: input, shape index: {}]
  %s6 = inlined_call_operand.vmem [shape: f32[2,1,32], index: 6, kind: input, shape index: {}]
  %s7 = inlined_call_operand.vmem [shape: f32[2,32,128], index: 7, kind: input, shape index: {}]
  %s8 = inlined_call_operand.vmem [shape: f32[2,1,128], index: 8, kind: input, shape index: {}]
  %s9 = inlined_call_operand.vmem [shape: f32[2,128,32], index: 9, kind: input, shape index: {}]
  %s10 = inlined_call_operand.vmem [shape: f32[2,1,32], index: 10, kind: input, shape index: {}]
  %s11 = inlined_call_operand.vmem [shape: f32[1,32], index: 11, kind: input, shape index: {}]
  %s12 = inlined_call_operand.vmem [shape: f32[1,32], index: 12, kind: input, shape index: {}]
  %s13 = inlined_call_operand.vmem [shape: f32[32,128], index: 13, kind: input, shape index: {}]
  %s14 = inlined_call_operand.hbm [shape: f32[16,128], index: 14, kind: output, shape index: {}]
  %s15 = sld [smem:[#allocation0]]
  $region66: #{gpt_forward.1} parent=0
    _
  %s17 = ssub.s32 1, %s15
  %s18 = scalar_select 0, %s17, %s15
  $region1: #{gpt_forward.1} parent=0
    #allocation2 [shape = 'u8[8192]{0}', space=vmem, size = 0x2000, scoped, tag = 'output window, operand 0, single buffered']
    #allocation3 [shape = 's32[1]{0}', space=sflag, size = 0x4, scoped, tag = 'scoped memory for gpt_forward.1']
    %19 = vsyncpa [#allocation3], 0
    // Predicated region
    $region2: #{gpt_forward.1} parent=1 // pred_check
      _
    $region3: #{gpt_forward.1} parent=1 // pred_check_branch
      %21 = sbr.rel (0) target = $region5
    $region4: #{gpt_forward.1} parent=1 // pred_region
      _
    $region5: #{gpt_forward.1} parent=1 // pred_fallthru
      _
    // Predicated region
    $region6: #{gpt_forward.1} parent=1 // pred_check
      _
    $region7: #{gpt_forward.1} parent=1 // pred_check_branch
      %23 = sbr.rel (0) target = $region9
    $region8: #{gpt_forward.1} parent=1 // pred_region
      _
    $region9: #{gpt_forward.1} parent=1 // pred_fallthru
      _
    // Predicated region
    $region10: #{gpt_forward.1} parent=1 // pred_check
      _
    $region11: #{gpt_forward.1} parent=1 // pred_check_branch
      %25 = sbr.rel (0) target = $region13
    $region12: #{gpt_forward.1} parent=1 // pred_region
      _
    $region13: #{gpt_forward.1} parent=1 // pred_fallthru
      _
    // Predicated region
    $region14: #{gpt_forward.1} parent=1 // pred_check
      _
    $region15: #{gpt_forward.1} parent=1 // pred_check_branch
      %27 = sbr.rel (0) target = $region17
    $region16: #{gpt_forward.1} parent=1 // pred_region
      _
    $region17: #{gpt_forward.1} parent=1 // pred_fallthru
      _
    // Predicated region
    $region18: #{gpt_forward.1} parent=1 // pred_check
      _
    $region19: #{gpt_forward.1} parent=1 // pred_check_branch
      %29 = sbr.rel (0) target = $region21
    $region20: #{gpt_forward.1} parent=1 // pred_region
      _
    $region21: #{gpt_forward.1} parent=1 // pred_fallthru
      _
    // Predicated region
    $region22: #{gpt_forward.1} parent=1 // pred_check
      _
    $region23: #{gpt_forward.1} parent=1 // pred_check_branch
      %31 = sbr.rel (0) target = $region25
    $region24: #{gpt_forward.1} parent=1 // pred_region
      _
    $region25: #{gpt_forward.1} parent=1 // pred_fallthru
      _
    // Predicated region
    $region26: #{gpt_forward.1} parent=1 // pred_check
      _
    $region27: #{gpt_forward.1} parent=1 // pred_check_branch
      %33 = sbr.rel (0) target = $region29
    $region28: #{gpt_forward.1} parent=1 // pred_region
      _
    $region29: #{gpt_forward.1} parent=1 // pred_fallthru
      _
    // Predicated region
    $region30: #{gpt_forward.1} parent=1 // pred_check
      _
    $region31: #{gpt_forward.1} parent=1 // pred_check_branch
      %35 = sbr.rel (0) target = $region33
    $region32: #{gpt_forward.1} parent=1 // pred_region
      _
    $region33: #{gpt_forward.1} parent=1 // pred_fallthru
      _
    // Predicated region
    $region34: #{gpt_forward.1} parent=1 // pred_check
      _
    $region35: #{gpt_forward.1} parent=1 // pred_check_branch
      %37 = sbr.rel (0) target = $region37
    $region36: #{gpt_forward.1} parent=1 // pred_region
      _
    $region37: #{gpt_forward.1} parent=1 // pred_fallthru
      _
    // Predicated region
    $region38: #{gpt_forward.1} parent=1 // pred_check
      _
    $region39: #{gpt_forward.1} parent=1 // pred_check_branch
      %39 = sbr.rel (0) target = $region41
    $region40: #{gpt_forward.1} parent=1 // pred_region
      _
    $region41: #{gpt_forward.1} parent=1 // pred_fallthru
      _
    // Predicated region
    $region42: #{gpt_forward.1} parent=1 // pred_check
      _
    $region43: #{gpt_forward.1} parent=1 // pred_check_branch
      %41 = sbr.rel (0) target = $region45
    $region44: #{gpt_forward.1} parent=1 // pred_region
      _
    $region45: #{gpt_forward.1} parent=1 // pred_fallthru
      _
    // Predicated region
    $region46: #{gpt_forward.1} parent=1 // pred_check
      _
    $region47: #{gpt_forward.1} parent=1 // pred_check_branch
      %43 = sbr.rel (0) target = $region49
    $region48: #{gpt_forward.1} parent=1 // pred_region
      _
    $region49: #{gpt_forward.1} parent=1 // pred_fallthru
      _
    // Predicated region
    $region50: #{gpt_forward.1} parent=1 // pred_check
      _
    $region51: #{gpt_forward.1} parent=1 // pred_check_branch
      %45 = sbr.rel (0) target = $region53
    $region52: #{gpt_forward.1} parent=1 // pred_region
      _
    $region53: #{gpt_forward.1} parent=1 // pred_fallthru
      _
    // Predicated region
    $region54: #{gpt_forward.1} parent=1 // pred_check
      _
    $region55: #{gpt_forward.1} parent=1 // pred_check_branch
      %47 = sbr.rel (0) target = $region57
    $region56: #{gpt_forward.1} parent=1 // pred_region
      _
    $region57: #{gpt_forward.1} parent=1 // pred_fallthru
      _
    %v48 = vld [vmem:[%s0] sm:$0xff]
    %v49 = vld [vmem:[%s0 + $0x8] sm:$0xff]
    %v50 = vlaneseq
    %v51 = vshrl.u32 %v50, 7
    %v52 = vlaneseq
    %v53 = vand.u32 %v52, 127
    %vm54 = vcmp.gt.s32.totalorder %v53, %v51
    %v55 = vsel %vm54, -1e+30, 0.0
    %v56 = vld [vmem:[%s1] sm:$0x1]
    %v57 = vld [vmem:[%s2] sm:$0x1]
    %vm58 = vcmask 261120
    %v59 = vsel %vm58, %v48, 0.0
    %60 = vadd.xlane.f32.xlu0 %v59
    %v61 = vpop.xlane.xlu0 %60
    %v62 = vsel %vm58, %v49, 0.0
    %63 = vadd.xlane.f32.xlu0 %v62
    %v64 = vpop.xlane.xlu0 %63
    %v65 = vrcp.pop 32.0
    %v66 = vmul.f32 %v61, %v65
    %v67 = vmul.f32 %v64, %v65
    %v68 = vsub.f32 %v48, %v66
    %v69 = vsub.f32 %v49, %v67
    %v70 = vmul.f32 %v68, %v68
    %v71 = vmul.f32 %v69, %v69
    %v72 = vsel %vm58, %v70, 0.0
    %73 = vadd.xlane.f32.xlu0 %v72
    %v74 = vpop.xlane.xlu0 %73
    %v75 = vsel %vm58, %v71, 0.0
    %76 = vadd.xlane.f32.xlu0 %v75
    %v77 = vpop.xlane.xlu0 %76
    %v78 = vmul.f32 %v74, %v65
    %v79 = vmul.f32 %v77, %v65
    %v80 = vadd.f32 %v78, 1e-05
    %v81 = vadd.f32 %v79, 1e-05
    %v82 = vrsqrt.pop %v80
    %v83 = vrsqrt.pop %v81
    %v84 = vmul.f32 %v68, %v82
    %v85 = vmul.f32 %v69, %v83
    %v87 = vlaneseq
    %v88 = vshrl.u32 %v87, 7
    %v89 = vsub.s32 0, %v88
    %v90 = vrot.slane %v56, %v89
    %v92 = vmul.f32 %v84, %v90
    %v93 = vmul.f32 %v85, %v90
    %v95 = vlaneseq
    %v96 = vshrl.u32 %v95, 7
    %v97 = vsub.s32 0, %v96
    %v98 = vrot.slane %v57, %v97
    %v100 = vadd.f32 %v92, %v98
    %v101 = vadd.f32 %v93, %v98
    %v102 = vld [vmem:[%s3] sm:$0xff]
    %v103 = vld [vmem:[%s3 + $0x8] sm:$0xff]
    %v104 = vld [vmem:[%s3 + $0x10] sm:$0xff]
    %v105 = vld [vmem:[%s3 + $0x18] sm:$0xff]
    %v107 = vsel %vm58, %v100, 0
    %v110 = vsel %vm58, %v101, 0
    %112 = vmatprep.subr.mxu0 0.0
    %113 = vmatpush1.msra.mxu0 0.0
    %114 = vmatprep.subr.mxu0 0.0
    %115 = vmatpush1.msra.mxu0 0.0
    %116 = vmatprep.subr.mxu0 0.0
    %117 = vmatpush1.msra.mxu0 0.0
    %118 = vmatprep.subr.mxu0 0.0
    %119 = vmatpush1.msra.mxu0 0.0
    %120 = vmatprep.subr.mxu0 0.0
    %121 = vmatpush1.msra.mxu0 0.0
    %122 = vmatprep.subr.mxu0 0.0
    %123 = vmatpush1.msra.mxu0 0.0
    %124 = vmatprep.subr.mxu0 0.0
    %125 = vmatpush1.msra.mxu0 0.0
    %126 = vmatprep.subr.mxu0 0.0
    %127 = vmatpush1.msra.mxu0 0.0
    %128 = vmatprep.subr.mxu0 0.0
    %129 = vmatpush1.msra.mxu0 0.0
    %130 = vmatprep.subr.mxu0 0.0
    %131 = vmatpush1.msra.mxu0 0.0
    %132 = vmatprep.subr.mxu0 0.0
    %133 = vmatpush1.msra.mxu0 0.0
    %134 = vmatprep.subr.mxu0 0.0
    %135 = vmatpush1.msra.mxu0 0.0
    %136 = vmatprep.subr.mxu0 0.0
    %137 = vmatpush1.msra.mxu0 %v105
    %138 = vmatprep.subr.mxu0 0.0
    %139 = vmatpush1.msra.mxu0 %v104
    %140 = vmatprep.subr.mxu0 0.0
    %141 = vmatpush1.msra.mxu0 %v103
    %142 = vmatprep.subr.mxu0 0.0
    %143 = vmatpush1.msra.mxu0 %v102
    %144 = vmatprep.subr.mxu0 0.0
    %145 = vmatpush2.msra.mxu0 0.0
    %146 = vmatprep.subr.mxu0 0.0
    %147 = vmatpush2.msra.mxu0 0.0
    %148 = vmatprep.subr.mxu0 0.0
    %149 = vmatpush2.msra.mxu0 0.0
    %150 = vmatprep.subr.mxu0 0.0
    %151 = vmatpush2.msra.mxu0 0.0
    %152 = vmatprep.subr.mxu0 0.0
    %153 = vmatpush2.msra.mxu0 0.0
    %154 = vmatprep.subr.mxu0 0.0
    %155 = vmatpush2.msra.mxu0 0.0
    %156 = vmatprep.subr.mxu0 0.0
    %157 = vmatpush2.msra.mxu0 0.0
    %158 = vmatprep.subr.mxu0 0.0
    %159 = vmatpush2.msra.mxu0 0.0
    %160 = vmatprep.subr.mxu0 0.0
    %161 = vmatpush2.msra.mxu0 0.0
    %162 = vmatprep.subr.mxu0 0.0
    %163 = vmatpush2.msra.mxu0 0.0
    %164 = vmatprep.subr.mxu0 0.0
    %165 = vmatpush2.msra.mxu0 0.0
    %166 = vmatprep.subr.mxu0 0.0
    %167 = vmatpush2.msra.mxu0 0.0
    %168 = vmatprep.subr.mxu0 0.0
    %169 = vmatpush2.msra.mxu0 0.0
    %170 = vmatprep.subr.mxu0 0.0
    %171 = vmatpush2.msra.mxu0 0.0
    %172 = vmatprep.subr.mxu0 0.0
    %173 = vmatpush2.msra.mxu0 0.0
    %174 = vmatprep.subr.mxu0 0.0
    %175 = vmatpush2.msra.mxu0 0.0
    %176 = vmatprep.mubr.f32.mxu0 0.0
    %177 = vmatmul.mubr.f32.gmra.mxu0 %v107
    %v178 = vpop.f32.mrf.mxu0
    %v179 = vadd.f32 0.0, %v178
    %v180 = vpop.f32.mrf.mxu0
    %181 = vmatprep.mubr.f32.mxu0 0.0
    %182 = vmatmul.mubr.f32.gmra.mxu0 %v110
    %v183 = vpop.f32.mrf.mxu0
    %v184 = vadd.f32 0.0, %v183
    %v185 = vpop.f32.mrf.mxu0
    %186 = vdwg.mxu0
    %188 = vrot.lane.b32.xlu0 %v179, 96
    %v189 = vpop.permute.xlu0 %188
    %vm190 = vcmask 64512
    %v191 = vsel %vm190, %v179, 0
    %v193 = vsel %vm190, %v189, 0
    %195 = vmatprep.subr.mxu0 0.0
    %196 = vmatpush1.xpose.msra.mxu0 0.0
    %197 = vmatprep.subr.mxu0 0.0
    %198 = vmatpush1.xpose.msra.mxu0 0.0
    %199 = vmatprep.subr.mxu0 0.0
    %200 = vmatpush1.xpose.msra.mxu0 0.0
    %201 = vmatprep.subr.mxu0 0.0
    %202 = vmatpush1.xpose.msra.mxu0 0.0
    %203 = vmatprep.subr.mxu0 0.0
    %204 = vmatpush1.xpose.msra.mxu0 0.0
    %205 = vmatprep.subr.mxu0 0.0
    %206 = vmatpush1.xpose.msra.mxu0 0.0
    %207 = vmatprep.subr.mxu0 0.0
    %208 = vmatpush1.xpose.msra.mxu0 0.0
    %209 = vmatprep.subr.mxu0 0.0
    %210 = vmatpush1.xpose.msra.mxu0 0.0
    %211 = vmatprep.subr.mxu0 0.0
    %212 = vmatpush1.xpose.msra.mxu0 0.0
    %213 = vmatprep.subr.mxu0 0.0
    %214 = vmatpush1.xpose.msra.mxu0 0.0
    %215 = vmatprep.subr.mxu0 0.0
    %216 = vmatpush1.xpose.msra.mxu0 0.0
    %217 = vmatprep.subr.mxu0 0.0
    %218 = vmatpush1.xpose.msra.mxu0 0.0
    %219 = vmatprep.subr.mxu0 0.0
    %220 = vmatpush1.xpose.msra.mxu0 0.0
    %221 = vmatprep.subr.mxu0 0.0
    %222 = vmatpush1.xpose.msra.mxu0 0.0
    %223 = vmatprep.subr.mxu0 0.0
    %224 = vmatpush1.xpose.msra.mxu0 0.0
    %225 = vmatprep.subr.mxu0 0.0
    %226 = vmatpush1.xpose.msra.mxu0 %v193
    %227 = vmatprep.subr.mxu0 0.0
    %228 = vmatpush2.xpose.msra.mxu0 0.0
    %229 = vmatprep.subr.mxu0 0.0
    %230 = vmatpush2.xpose.msra.mxu0 0.0
    %231 = vmatprep.subr.mxu0 0.0
    %232 = vmatpush2.xpose.msra.mxu0 0.0
    %233 = vmatprep.subr.mxu0 0.0
    %234 = vmatpush2.xpose.msra.mxu0 0.0
    %235 = vmatprep.subr.mxu0 0.0
    %236 = vmatpush2.xpose.msra.mxu0 0.0
    %237 = vmatprep.subr.mxu0 0.0
    %238 = vmatpush2.xpose.msra.mxu0 0.0
    %239 = vmatprep.subr.mxu0 0.0
    %240 = vmatpush2.xpose.msra.mxu0 0.0
    %241 = vmatprep.subr.mxu0 0.0
    %242 = vmatpush2.xpose.msra.mxu0 0.0
    %243 = vmatprep.subr.mxu0 0.0
    %244 = vmatpush2.xpose.msra.mxu0 0.0
    %245 = vmatprep.subr.mxu0 0.0
    %246 = vmatpush2.xpose.msra.mxu0 0.0
    %247 = vmatprep.subr.mxu0 0.0
    %248 = vmatpush2.xpose.msra.mxu0 0.0
    %249 = vmatprep.subr.mxu0 0.0
    %250 = vmatpush2.xpose.msra.mxu0 0.0
    %251 = vmatprep.subr.mxu0 0.0
    %252 = vmatpush2.xpose.msra.mxu0 0.0
    %253 = vmatprep.subr.mxu0 0.0
    %254 = vmatpush2.xpose.msra.mxu0 0.0
    %255 = vmatprep.subr.mxu0 0.0
    %256 = vmatpush2.xpose.msra.mxu0 0.0
    %257 = vmatprep.subr.mxu0 0.0
    %258 = vmatpush2.xpose.msra.mxu0 0.0
    %259 = vmatprep.mubr.f32.mxu0 0.0
    %260 = vmatmul.mubr.f32.gmra.mxu0 %v191
    %v261 = vpop.f32.mrf.mxu0
    %v262 = vadd.f32 0.0, %v261
    %v263 = vpop.f32.mrf.mxu0
    %264 = vdwg.mxu0
    %266 = vrot.lane.b32.xlu0 %v184, 96
    %v267 = vpop.permute.xlu0 %266
    %v268 = vsel %vm190, %v184, 0
    %v270 = vsel %vm190, %v267, 0
    %272 = vmatprep.subr.mxu0 0.0
    %273 = vmatpush1.xpose.msra.mxu0 0.0
    %274 = vmatprep.subr.mxu0 0.0
    %275 = vmatpush1.xpose.msra.mxu0 0.0
    %276 = vmatprep.subr.mxu0 0.0
    %277 = vmatpush1.xpose.msra.mxu0 0.0
    %278 = vmatprep.subr.mxu0 0.0
    %279 = vmatpush1.xpose.msra.mxu0 0.0
    %280 = vmatprep.subr.mxu0 0.0
    %281 = vmatpush1.xpose.msra.mxu0 0.0
    %282 = vmatprep.subr.mxu0 0.0
    %283 = vmatpush1.xpose.msra.mxu0 0.0
    %284 = vmatprep.subr.mxu0 0.0
    %285 = vmatpush1.xpose.msra.mxu0 0.0
    %286 = vmatprep.subr.mxu0 0.0
    %287 = vmatpush1.xpose.msra.mxu0 0.0
    %288 = vmatprep.subr.mxu0 0.0
    %289 = vmatpush1.xpose.msra.mxu0 0.0
    %290 = vmatprep.subr.mxu0 0.0
    %291 = vmatpush1.xpose.msra.mxu0 0.0
    %292 = vmatprep.subr.mxu0 0.0
    %293 = vmatpush1.xpose.msra.mxu0 0.0
    %294 = vmatprep.subr.mxu0 0.0
    %295 = vmatpush1.xpose.msra.mxu0 0.0
    %296 = vmatprep.subr.mxu0 0.0
    %297 = vmatpush1.xpose.msra.mxu0 0.0
    %298 = vmatprep.subr.mxu0 0.0
    %299 = vmatpush1.xpose.msra.mxu0 0.0
    %300 = vmatprep.subr.mxu0 0.0
    %301 = vmatpush1.xpose.msra.mxu0 0.0
    %302 = vmatprep.subr.mxu0 0.0
    %303 = vmatpush1.xpose.msra.mxu0 %v270
    %304 = vmatprep.subr.mxu0 0.0
    %305 = vmatpush2.xpose.msra.mxu0 0.0
    %306 = vmatprep.subr.mxu0 0.0
    %307 = vmatpush2.xpose.msra.mxu0 0.0
    %308 = vmatprep.subr.mxu0 0.0
    %309 = vmatpush2.xpose.msra.mxu0 0.0
    %310 = vmatprep.subr.mxu0 0.0
    %311 = vmatpush2.xpose.msra.mxu0 0.0
    %312 = vmatprep.subr.mxu0 0.0
    %313 = vmatpush2.xpose.msra.mxu0 0.0
    %314 = vmatprep.subr.mxu0 0.0
    %315 = vmatpush2.xpose.msra.mxu0 0.0
    %316 = vmatprep.subr.mxu0 0.0
    %317 = vmatpush2.xpose.msra.mxu0 0.0
    %318 = vmatprep.subr.mxu0 0.0
    %319 = vmatpush2.xpose.msra.mxu0 0.0
    %320 = vmatprep.subr.mxu0 0.0
    %321 = vmatpush2.xpose.msra.mxu0 0.0
    %322 = vmatprep.subr.mxu0 0.0
    %323 = vmatpush2.xpose.msra.mxu0 0.0
    %324 = vmatprep.subr.mxu0 0.0
    %325 = vmatpush2.xpose.msra.mxu0 0.0
    %326 = vmatprep.subr.mxu0 0.0
    %327 = vmatpush2.xpose.msra.mxu0 0.0
    %328 = vmatprep.subr.mxu0 0.0
    %329 = vmatpush2.xpose.msra.mxu0 0.0
    %330 = vmatprep.subr.mxu0 0.0
    %331 = vmatpush2.xpose.msra.mxu0 0.0
    %332 = vmatprep.subr.mxu0 0.0
    %333 = vmatpush2.xpose.msra.mxu0 0.0
    %334 = vmatprep.subr.mxu0 0.0
    %335 = vmatpush2.xpose.msra.mxu0 0.0
    %336 = vmatprep.mubr.f32.mxu0 0.0
    %337 = vmatmul.mubr.f32.gmra.mxu0 %v268
    %v338 = vpop.f32.mrf.mxu0
    %v339 = vadd.f32 0.0, %v338
    %v340 = vpop.f32.mrf.mxu0
    %341 = vdwg.mxu0
    %v342 = vmul.f32 %v262, 0.35355338
    %v343 = vmul.f32 %v339, 0.35355338
    %v344 = vadd.f32 %v342, %v55
    %v345 = vadd.f32 %v343, %v55
    %v346 = vsel %vm190, %v344, -inf
    %347 = vmax.xlane.f32.xlu0 %v346
    %v348 = vpop.xlane.xlu0 %347
    %v349 = vsel %vm190, %v345, -inf
    %350 = vmax.xlane.f32.xlu0 %v349
    %v351 = vpop.xlane.xlu0 %350
    %v352 = vsub.f32 %v344, %v348
    %v353 = vsub.f32 %v345, %v351
    %v354 = vmul.f32 %v352, 1.442695
    %v355 = vpow.pop %v354
    %v356 = vmul.f32 %v353, 1.442695
    %v357 = vpow.pop %v356
    %v358 = vsel %vm190, %v355, 0.0
    %359 = vadd.xlane.f32.xlu0 %v358
    %v360 = vpop.xlane.xlu0 %359
    %v361 = vsel %vm190, %v357, 0.0
    %362 = vadd.xlane.f32.xlu0 %v361
    %v363 = vpop.xlane.xlu0 %362
    %v364 = vrcp.pop %v360
    %v365 = vrcp.pop %v363
    %v366 = vmul.f32 %v355, %v364
    %v367 = vmul.f32 %v357, %v365
    %368 = vrot.lane.b32.xlu0 %v179, 64
    %v369 = vpop.permute.xlu0 %368
    %v372 = vsel %vm190, %v366, 0
    %374 = vmatprep.subr.mxu0 0.0
    %375 = vmatpush1.msra.mxu0 0.0
    %376 = vmatprep.subr.mxu0 0.0
    %377 = vmatpush1.msra.mxu0 0.0
    %378 = vmatprep.subr.mxu0 0.0
    %379 = vmatpush1.msra.mxu0 0.0
    %380 = vmatprep.subr.mxu0 0.0
    %381 = vmatpush1.msra.mxu0 0.0
    %382 = vmatprep.subr.mxu0 0.0
    %383 = vmatpush1.msra.mxu0 0.0
    %384 = vmatprep.subr.mxu0 0.0
    %385 = vmatpush1.msra.mxu0 0.0
    %386 = vmatprep.subr.mxu0 0.0
    %387 = vmatpush1.msra.mxu0 0.0
    %388 = vmatprep.subr.mxu0 0.0
    %389 = vmatpush1.msra.mxu0 0.0
    %390 = vmatprep.subr.mxu0 0.0
    %391 = vmatpush1.msra.mxu0 0.0
    %392 = vmatprep.subr.mxu0 0.0
    %393 = vmatpush1.msra.mxu0 0.0
    %394 = vmatprep.subr.mxu0 0.0
    %395 = vmatpush1.msra.mxu0 0.0
    %396 = vmatprep.subr.mxu0 0.0
    %397 = vmatpush1.msra.mxu0 0.0
    %398 = vmatprep.subr.mxu0 0.0
    %399 = vmatpush1.msra.mxu0 0.0
    %400 = vmatprep.subr.mxu0 0.0
    %401 = vmatpush1.msra.mxu0 0.0
    %402 = vmatprep.subr.mxu0 0.0
    %403 = vmatpush1.msra.mxu0 0.0
    %404 = vmatprep.subr.mxu0 0.0
    %405 = vmatpush1.msra.mxu0 %v369
    %406 = vmatprep.subr.mxu0 0.0
    %407 = vmatpush2.msra.mxu0 0.0
    %408 = vmatprep.subr.mxu0 0.0
    %409 = vmatpush2.msra.mxu0 0.0
    %410 = vmatprep.subr.mxu0 0.0
    %411 = vmatpush2.msra.mxu0 0.0
    %412 = vmatprep.subr.mxu0 0.0
    %413 = vmatpush2.msra.mxu0 0.0
    %414 = vmatprep.subr.mxu0 0.0
    %415 = vmatpush2.msra.mxu0 0.0
    %416 = vmatprep.subr.mxu0 0.0
    %417 = vmatpush2.msra.mxu0 0.0
    %418 = vmatprep.subr.mxu0 0.0
    %419 = vmatpush2.msra.mxu0 0.0
    %420 = vmatprep.subr.mxu0 0.0
    %421 = vmatpush2.msra.mxu0 0.0
    %422 = vmatprep.subr.mxu0 0.0
    %423 = vmatpush2.msra.mxu0 0.0
    %424 = vmatprep.subr.mxu0 0.0
    %425 = vmatpush2.msra.mxu0 0.0
    %426 = vmatprep.subr.mxu0 0.0
    %427 = vmatpush2.msra.mxu0 0.0
    %428 = vmatprep.subr.mxu0 0.0
    %429 = vmatpush2.msra.mxu0 0.0
    %430 = vmatprep.subr.mxu0 0.0
    %431 = vmatpush2.msra.mxu0 0.0
    %432 = vmatprep.subr.mxu0 0.0
    %433 = vmatpush2.msra.mxu0 0.0
    %434 = vmatprep.subr.mxu0 0.0
    %435 = vmatpush2.msra.mxu0 0.0
    %436 = vmatprep.subr.mxu0 0.0
    %437 = vmatpush2.msra.mxu0 0.0
    %438 = vmatprep.mubr.f32.mxu0 0.0
    %439 = vmatmul.mubr.f32.gmra.mxu0 %v372
    %v440 = vpop.f32.mrf.mxu0
    %v441 = vadd.f32 0.0, %v440
    %v442 = vpop.f32.mrf.mxu0
    %443 = vdwg.mxu0
    %444 = vrot.lane.b32.xlu0 %v184, 64
    %v445 = vpop.permute.xlu0 %444
    %v448 = vsel %vm190, %v367, 0
    %450 = vmatprep.subr.mxu0 0.0
    %451 = vmatpush1.msra.mxu0 0.0
    %452 = vmatprep.subr.mxu0 0.0
    %453 = vmatpush1.msra.mxu0 0.0
    %454 = vmatprep.subr.mxu0 0.0
    %455 = vmatpush1.msra.mxu0 0.0
    %456 = vmatprep.subr.mxu0 0.0
    %457 = vmatpush1.msra.mxu0 0.0
    %458 = vmatprep.subr.mxu0 0.0
    %459 = vmatpush1.msra.mxu0 0.0
    %460 = vmatprep.subr.mxu0 0.0
    %461 = vmatpush1.msra.mxu0 0.0
    %462 = vmatprep.subr.mxu0 0.0
    %463 = vmatpush1.msra.mxu0 0.0
    %464 = vmatprep.subr.mxu0 0.0
    %465 = vmatpush1.msra.mxu0 0.0
    %466 = vmatprep.subr.mxu0 0.0
    %467 = vmatpush1.msra.mxu0 0.0
    %468 = vmatprep.subr.mxu0 0.0
    %469 = vmatpush1.msra.mxu0 0.0
    %470 = vmatprep.subr.mxu0 0.0
    %471 = vmatpush1.msra.mxu0 0.0
    %472 = vmatprep.subr.mxu0 0.0
    %473 = vmatpush1.msra.mxu0 0.0
    %474 = vmatprep.subr.mxu0 0.0
    %475 = vmatpush1.msra.mxu0 0.0
    %476 = vmatprep.subr.mxu0 0.0
    %477 = vmatpush1.msra.mxu0 0.0
    %478 = vmatprep.subr.mxu0 0.0
    %479 = vmatpush1.msra.mxu0 0.0
    %480 = vmatprep.subr.mxu0 0.0
    %481 = vmatpush1.msra.mxu0 %v445
    %482 = vmatprep.subr.mxu0 0.0
    %483 = vmatpush2.msra.mxu0 0.0
    %484 = vmatprep.subr.mxu0 0.0
    %485 = vmatpush2.msra.mxu0 0.0
    %486 = vmatprep.subr.mxu0 0.0
    %487 = vmatpush2.msra.mxu0 0.0
    %488 = vmatprep.subr.mxu0 0.0
    %489 = vmatpush2.msra.mxu0 0.0
    %490 = vmatprep.subr.mxu0 0.0
    %491 = vmatpush2.msra.mxu0 0.0
    %492 = vmatprep.subr.mxu0 0.0
    %493 = vmatpush2.msra.mxu0 0.0
    %494 = vmatprep.subr.mxu0 0.0
    %495 = vmatpush2.msra.mxu0 0.0
    %496 = vmatprep.subr.mxu0 0.0
    %497 = vmatpush2.msra.mxu0 0.0
    %498 = vmatprep.subr.mxu0 0.0
    %499 = vmatpush2.msra.mxu0 0.0
    %500 = vmatprep.subr.mxu0 0.0
    %501 = vmatpush2.msra.mxu0 0.0
    %502 = vmatprep.subr.mxu0 0.0
    %503 = vmatpush2.msra.mxu0 0.0
    %504 = vmatprep.subr.mxu0 0.0
    %505 = vmatpush2.msra.mxu0 0.0
    %506 = vmatprep.subr.mxu0 0.0
    %507 = vmatpush2.msra.mxu0 0.0
    %508 = vmatprep.subr.mxu0 0.0
    %509 = vmatpush2.msra.mxu0 0.0
    %510 = vmatprep.subr.mxu0 0.0
    %511 = vmatpush2.msra.mxu0 0.0
    %512 = vmatprep.subr.mxu0 0.0
    %513 = vmatpush2.msra.mxu0 0.0
    %514 = vmatprep.mubr.f32.mxu0 0.0
    %515 = vmatmul.mubr.f32.gmra.mxu0 %v448
    %v516 = vpop.f32.mrf.mxu0
    %v517 = vadd.f32 0.0, %v516
    %v518 = vpop.f32.mrf.mxu0
    %519 = vdwg.mxu0
    %520 = vrot.lane.b32.xlu0 %v179, 120
    %v521 = vpop.permute.xlu0 %520
    %522 = vrot.lane.b32.xlu0 %v179, 88
    %v523 = vpop.permute.xlu0 %522
    %v524 = vsel %vm190, %v521, 0
    %v526 = vsel %vm190, %v523, 0
    %528 = vmatprep.subr.mxu0 0.0
    %529 = vmatpush1.xpose.msra.mxu0 0.0
    %530 = vmatprep.subr.mxu0 0.0
    %531 = vmatpush1.xpose.msra.mxu0 0.0
    %532 = vmatprep.subr.mxu0 0.0
    %533 = vmatpush1.xpose.msra.mxu0 0.0
    %534 = vmatprep.subr.mxu0 0.0
    %535 = vmatpush1.xpose.msra.mxu0 0.0
    %536 = vmatprep.subr.mxu0 0.0
    %537 = vmatpush1.xpose.msra.mxu0 0.0
    %538 = vmatprep.subr.mxu0 0.0
    %539 = vmatpush1.xpose.msra.mxu0 0.0
    %540 = vmatprep.subr.mxu0 0.0
    %541 = vmatpush1.xpose.msra.mxu0 0.0
    %542 = vmatprep.subr.mxu0 0.0
    %543 = vmatpush1.xpose.msra.mxu0 0.0
    %544 = vmatprep.subr.mxu0 0.0
    %545 = vmatpush1.xpose.msra.mxu0 0.0
    %546 = vmatprep.subr.mxu0 0.0
    %547 = vmatpush1.xpose.msra.mxu0 0.0
    %548 = vmatprep.subr.mxu0 0.0
    %549 = vmatpush1.xpose.msra.mxu0 0.0
    %550 = vmatprep.subr.mxu0 0.0
    %551 = vmatpush1.xpose.msra.mxu0 0.0
    %552 = vmatprep.subr.mxu0 0.0
    %553 = vmatpush1.xpose.msra.mxu0 0.0
    %554 = vmatprep.subr.mxu0 0.0
    %555 = vmatpush1.xpose.msra.mxu0 0.0
    %556 = vmatprep.subr.mxu0 0.0
    %557 = vmatpush1.xpose.msra.mxu0 0.0
    %558 = vmatprep.subr.mxu0 0.0
    %559 = vmatpush1.xpose.msra.mxu0 %v526
    %560 = vmatprep.subr.mxu0 0.0
    %561 = vmatpush2.xpose.msra.mxu0 0.0
    %562 = vmatprep.subr.mxu0 0.0
    %563 = vmatpush2.xpose.msra.mxu0 0.0
    %564 = vmatprep.subr.mxu0 0.0
    %565 = vmatpush2.xpose.msra.mxu0 0.0
    %566 = vmatprep.subr.mxu0 0.0
    %567 = vmatpush2.xpose.msra.mxu0 0.0
    %568 = vmatprep.subr.mxu0 0.0
    %569 = vmatpush2.xpose.msra.mxu0 0.0
    %570 = vmatprep.subr.mxu0 0.0
    %571 = vmatpush2.xpose.msra.mxu0 0.0
    %572 = vmatprep.subr.mxu0 0.0
    %573 = vmatpush2.xpose.msra.mxu0 0.0
    %574 = vmatprep.subr.mxu0 0.0
    %575 = vmatpush2.xpose.msra.mxu0 0.0
    %576 = vmatprep.subr.mxu0 0.0
    %577 = vmatpush2.xpose.msra.mxu0 0.0
    %578 = vmatprep.subr.mxu0 0.0
    %579 = vmatpush2.xpose.msra.mxu0 0.0
    %580 = vmatprep.subr.mxu0 0.0
    %581 = vmatpush2.xpose.msra.mxu0 0.0
    %582 = vmatprep.subr.mxu0 0.0
    %583 = vmatpush2.xpose.msra.mxu0 0.0
    %584 = vmatprep.subr.mxu0 0.0
    %585 = vmatpush2.xpose.msra.mxu0 0.0
    %586 = vmatprep.subr.mxu0 0.0
    %587 = vmatpush2.xpose.msra.mxu0 0.0
    %588 = vmatprep.subr.mxu0 0.0
    %589 = vmatpush2.xpose.msra.mxu0 0.0
    %590 = vmatprep.subr.mxu0 0.0
    %591 = vmatpush2.xpose.msra.mxu0 0.0
    %592 = vmatprep.mubr.f32.mxu0 0.0
    %593 = vmatmul.mubr.f32.gmra.mxu0 %v524
    %v594 = vpop.f32.mrf.mxu0
    %v595 = vadd.f32 0.0, %v594
    %v596 = vpop.f32.mrf.mxu0
    %597 = vdwg.mxu0
    %598 = vrot.lane.b32.xlu0 %v184, 120
    %v599 = vpop.permute.xlu0 %598
    %600 = vrot.lane.b32.xlu0 %v184, 88
    %v601 = vpop.permute.xlu0 %600
    %v602 = vsel %vm190, %v599, 0
    %v604 = vsel %vm190, %v601, 0
    %606 = vmatprep.subr.mxu0 0.0
    %607 = vmatpush1.xpose.msra.mxu0 0.0
    %608 = vmatprep.subr.mxu0 0.0
    %609 = vmatpush1.xpose.msra.mxu0 0.0
    %610 = vmatprep.subr.mxu0 0.0
    %611 = vmatpush1.xpose.msra.mxu0 0.0
    %612 = vmatprep.subr.mxu0 0.0
    %613 = vmatpush1.xpose.msra.mxu0 0.0
    %614 = vmatprep.subr.mxu0 0.0
    %615 = vmatpush1.xpose.msra.mxu0 0.0
    %616 = vmatprep.subr.mxu0 0.0
    %617 = vmatpush1.xpose.msra.mxu0 0.0
    %618 = vmatprep.subr.mxu0 0.0
    %619 = vmatpush1.xpose.msra.mxu0 0.0
    %620 = vmatprep.subr.mxu0 0.0
    %621 = vmatpush1.xpose.msra.mxu0 0.0
    %622 = vmatprep.subr.mxu0 0.0
    %623 = vmatpush1.xpose.msra.mxu0 0.0
    %624 = vmatprep.subr.mxu0 0.0
    %625 = vmatpush1.xpose.msra.mxu0 0.0
    %626 = vmatprep.subr.mxu0 0.0
    %627 = vmatpush1.xpose.msra.mxu0 0.0
    %628 = vmatprep.subr.mxu0 0.0
    %629 = vmatpush1.xpose.msra.mxu0 0.0
    %630 = vmatprep.subr.mxu0 0.0
    %631 = vmatpush1.xpose.msra.mxu0 0.0
    %632 = vmatprep.subr.mxu0 0.0
    %633 = vmatpush1.xpose.msra.mxu0 0.0
    %634 = vmatprep.subr.mxu0 0.0
    %635 = vmatpush1.xpose.msra.mxu0 0.0
    %636 = vmatprep.subr.mxu0 0.0
    %637 = vmatpush1.xpose.msra.mxu0 %v604
    %638 = vmatprep.subr.mxu0 0.0
    %639 = vmatpush2.xpose.msra.mxu0 0.0
    %640 = vmatprep.subr.mxu0 0.0
    %641 = vmatpush2.xpose.msra.mxu0 0.0
    %642 = vmatprep.subr.mxu0 0.0
    %643 = vmatpush2.xpose.msra.mxu0 0.0
    %644 = vmatprep.subr.mxu0 0.0
    %645 = vmatpush2.xpose.msra.mxu0 0.0
    %646 = vmatprep.subr.mxu0 0.0
    %647 = vmatpush2.xpose.msra.mxu0 0.0
    %648 = vmatprep.subr.mxu0 0.0
    %649 = vmatpush2.xpose.msra.mxu0 0.0
    %650 = vmatprep.subr.mxu0 0.0
    %651 = vmatpush2.xpose.msra.mxu0 0.0
    %652 = vmatprep.subr.mxu0 0.0
    %653 = vmatpush2.xpose.msra.mxu0 0.0
    %654 = vmatprep.subr.mxu0 0.0
    %655 = vmatpush2.xpose.msra.mxu0 0.0
    %656 = vmatprep.subr.mxu0 0.0
    %657 = vmatpush2.xpose.msra.mxu0 0.0
    %658 = vmatprep.subr.mxu0 0.0
    %659 = vmatpush2.xpose.msra.mxu0 0.0
    %660 = vmatprep.subr.mxu0 0.0
    %661 = vmatpush2.xpose.msra.mxu0 0.0
    %662 = vmatprep.subr.mxu0 0.0
    %663 = vmatpush2.xpose.msra.mxu0 0.0
    %664 = vmatprep.subr.mxu0 0.0
    %665 = vmatpush2.xpose.msra.mxu0 0.0
    %666 = vmatprep.subr.mxu0 0.0
    %667 = vmatpush2.xpose.msra.mxu0 0.0
    %668 = vmatprep.subr.mxu0 0.0
    %669 = vmatpush2.xpose.msra.mxu0 0.0
    %670 = vmatprep.mubr.f32.mxu0 0.0
    %671 = vmatmul.mubr.f32.gmra.mxu0 %v602
    %v672 = vpop.f32.mrf.mxu0
    %v673 = vadd.f32 0.0, %v672
    %v674 = vpop.f32.mrf.mxu0
    %675 = vdwg.mxu0
    %v676 = vmul.f32 %v595, 0.35355338
    %v677 = vmul.f32 %v673, 0.35355338
    %v678 = vadd.f32 %v676, %v55
    %v679 = vadd.f32 %v677, %v55
    %v680 = vsel %vm190, %v678, -inf
    %681 = vmax.xlane.f32.xlu0 %v680
    %v682 = vpop.xlane.xlu0 %681
    %v683 = vsel %vm190, %v679, -inf
    %684 = vmax.xlane.f32.xlu0 %v683
    %v685 = vpop.xlane.xlu0 %684
    %v686 = vsub.f32 %v678, %v682
    %v687 = vsub.f32 %v679, %v685
    %v688 = vmul.f32 %v686, 1.442695
    %v689 = vpow.pop %v688
    %v690 = vmul.f32 %v687, 1.442695
    %v691 = vpow.pop %v690
    %v692 = vsel %vm190, %v689, 0.0
    %693 = vadd.xlane.f32.xlu0 %v692
    %v694 = vpop.xlane.xlu0 %693
    %v695 = vsel %vm190, %v691, 0.0
    %696 = vadd.xlane.f32.xlu0 %v695
    %v697 = vpop.xlane.xlu0 %696
    %v698 = vrcp.pop %v694
    %v699 = vrcp.pop %v697
    %v700 = vmul.f32 %v689, %v698
    %v701 = vmul.f32 %v691, %v699
    %702 = vrot.lane.b32.xlu0 %v179, 56
    %v703 = vpop.permute.xlu0 %702
    %v706 = vsel %vm190, %v700, 0
    %708 = vmatprep.subr.mxu0 0.0
    %709 = vmatpush1.msra.mxu0 0.0
    %710 = vmatprep.subr.mxu0 0.0
    %711 = vmatpush1.msra.mxu0 0.0
    %712 = vmatprep.subr.mxu0 0.0
    %713 = vmatpush1.msra.mxu0 0.0
    %714 = vmatprep.subr.mxu0 0.0
    %715 = vmatpush1.msra.mxu0 0.0
    %716 = vmatprep.subr.mxu0 0.0
    %717 = vmatpush1.msra.mxu0 0.0
    %718 = vmatprep.subr.mxu0 0.0
    %719 = vmatpush1.msra.mxu0 0.0
    %720 = vmatprep.subr.mxu0 0.0
    %721 = vmatpush1.msra.mxu0 0.0
    %722 = vmatprep.subr.mxu0 0.0
    %723 = vmatpush1.msra.mxu0 0.0
    %724 = vmatprep.subr.mxu0 0.0
    %725 = vmatpush1.msra.mxu0 0.0
    %726 = vmatprep.subr.mxu0 0.0
    %727 = vmatpush1.msra.mxu0 0.0
    %728 = vmatprep.subr.mxu0 0.0
    %729 = vmatpush1.msra.mxu0 0.0
    %730 = vmatprep.subr.mxu0 0.0
    %731 = vmatpush1.msra.mxu0 0.0
    %732 = vmatprep.subr.mxu0 0.0
    %733 = vmatpush1.msra.mxu0 0.0
    %734 = vmatprep.subr.mxu0 0.0
    %735 = vmatpush1.msra.mxu0 0.0
    %736 = vmatprep.subr.mxu0 0.0
    %737 = vmatpush1.msra.mxu0 0.0
    %738 = vmatprep.subr.mxu0 0.0
    %739 = vmatpush1.msra.mxu0 %v703
    %740 = vmatprep.subr.mxu0 0.0
    %741 = vmatpush2.msra.mxu0 0.0
    %742 = vmatprep.subr.mxu0 0.0
    %743 = vmatpush2.msra.mxu0 0.0
    %744 = vmatprep.subr.mxu0 0.0
    %745 = vmatpush2.msra.mxu0 0.0
    %746 = vmatprep.subr.mxu0 0.0
    %747 = vmatpush2.msra.mxu0 0.0
    %748 = vmatprep.subr.mxu0 0.0
    %749 = vmatpush2.msra.mxu0 0.0
    %750 = vmatprep.subr.mxu0 0.0
    %751 = vmatpush2.msra.mxu0 0.0
    %752 = vmatprep.subr.mxu0 0.0
    %753 = vmatpush2.msra.mxu0 0.0
    %754 = vmatprep.subr.mxu0 0.0
    %755 = vmatpush2.msra.mxu0 0.0
    %756 = vmatprep.subr.mxu0 0.0
    %757 = vmatpush2.msra.mxu0 0.0
    %758 = vmatprep.subr.mxu0 0.0
    %759 = vmatpush2.msra.mxu0 0.0
    %760 = vmatprep.subr.mxu0 0.0
    %761 = vmatpush2.msra.mxu0 0.0
    %762 = vmatprep.subr.mxu0 0.0
    %763 = vmatpush2.msra.mxu0 0.0
    %764 = vmatprep.subr.mxu0 0.0
    %765 = vmatpush2.msra.mxu0 0.0
    %766 = vmatprep.subr.mxu0 0.0
    %767 = vmatpush2.msra.mxu0 0.0
    %768 = vmatprep.subr.mxu0 0.0
    %769 = vmatpush2.msra.mxu0 0.0
    %770 = vmatprep.subr.mxu0 0.0
    %771 = vmatpush2.msra.mxu0 0.0
    %772 = vmatprep.mubr.f32.mxu0 0.0
    %773 = vmatmul.mubr.f32.gmra.mxu0 %v706
    %v774 = vpop.f32.mrf.mxu0
    %v775 = vadd.f32 0.0, %v774
    %v776 = vpop.f32.mrf.mxu0
    %777 = vdwg.mxu0
    %778 = vrot.lane.b32.xlu0 %v184, 56
    %v779 = vpop.permute.xlu0 %778
    %v782 = vsel %vm190, %v701, 0
    %784 = vmatprep.subr.mxu0 0.0
    %785 = vmatpush1.msra.mxu0 0.0
    %786 = vmatprep.subr.mxu0 0.0
    %787 = vmatpush1.msra.mxu0 0.0
    %788 = vmatprep.subr.mxu0 0.0
    %789 = vmatpush1.msra.mxu0 0.0
    %790 = vmatprep.subr.mxu0 0.0
    %791 = vmatpush1.msra.mxu0 0.0
    %792 = vmatprep.subr.mxu0 0.0
    %793 = vmatpush1.msra.mxu0 0.0
    %794 = vmatprep.subr.mxu0 0.0
    %795 = vmatpush1.msra.mxu0 0.0
    %796 = vmatprep.subr.mxu0 0.0
    %797 = vmatpush1.msra.mxu0 0.0
    %798 = vmatprep.subr.mxu0 0.0
    %799 = vmatpush1.msra.mxu0 0.0
    %800 = vmatprep.subr.mxu0 0.0
    %801 = vmatpush1.msra.mxu0 0.0
    %802 = vmatprep.subr.mxu0 0.0
    %803 = vmatpush1.msra.mxu0 0.0
    %804 = vmatprep.subr.mxu0 0.0
    %805 = vmatpush1.msra.mxu0 0.0
    %806 = vmatprep.subr.mxu0 0.0
    %807 = vmatpush1.msra.mxu0 0.0
    %808 = vmatprep.subr.mxu0 0.0
    %809 = vmatpush1.msra.mxu0 0.0
    %810 = vmatprep.subr.mxu0 0.0
    %811 = vmatpush1.msra.mxu0 0.0
    %812 = vmatprep.subr.mxu0 0.0
    %813 = vmatpush1.msra.mxu0 0.0
    %814 = vmatprep.subr.mxu0 0.0
    %815 = vmatpush1.msra.mxu0 %v779
    %816 = vmatprep.subr.mxu0 0.0
    %817 = vmatpush2.msra.mxu0 0.0
    %818 = vmatprep.subr.mxu0 0.0
    %819 = vmatpush2.msra.mxu0 0.0
    %820 = vmatprep.subr.mxu0 0.0
    %821 = vmatpush2.msra.mxu0 0.0
    %822 = vmatprep.subr.mxu0 0.0
    %823 = vmatpush2.msra.mxu0 0.0
    %824 = vmatprep.subr.mxu0 0.0
    %825 = vmatpush2.msra.mxu0 0.0
    %826 = vmatprep.subr.mxu0 0.0
    %827 = vmatpush2.msra.mxu0 0.0
    %828 = vmatprep.subr.mxu0 0.0
    %829 = vmatpush2.msra.mxu0 0.0
    %830 = vmatprep.subr.mxu0 0.0
    %831 = vmatpush2.msra.mxu0 0.0
    %832 = vmatprep.subr.mxu0 0.0
    %833 = vmatpush2.msra.mxu0 0.0
    %834 = vmatprep.subr.mxu0 0.0
    %835 = vmatpush2.msra.mxu0 0.0
    %836 = vmatprep.subr.mxu0 0.0
    %837 = vmatpush2.msra.mxu0 0.0
    %838 = vmatprep.subr.mxu0 0.0
    %839 = vmatpush2.msra.mxu0 0.0
    %840 = vmatprep.subr.mxu0 0.0
    %841 = vmatpush2.msra.mxu0 0.0
    %842 = vmatprep.subr.mxu0 0.0
    %843 = vmatpush2.msra.mxu0 0.0
    %844 = vmatprep.subr.mxu0 0.0
    %845 = vmatpush2.msra.mxu0 0.0
    %846 = vmatprep.subr.mxu0 0.0
    %847 = vmatpush2.msra.mxu0 0.0
    %848 = vmatprep.mubr.f32.mxu0 0.0
    %849 = vmatmul.mubr.f32.gmra.mxu0 %v782
    %v850 = vpop.f32.mrf.mxu0
    %v851 = vadd.f32 0.0, %v850
    %v852 = vpop.f32.mrf.mxu0
    %853 = vdwg.mxu0
    %854 = vrot.lane.b32.xlu0 %v179, 112
    %v855 = vpop.permute.xlu0 %854
    %856 = vrot.lane.b32.xlu0 %v179, 80
    %v857 = vpop.permute.xlu0 %856
    %v858 = vsel %vm190, %v855, 0
    %v860 = vsel %vm190, %v857, 0
    %862 = vmatprep.subr.mxu0 0.0
    %863 = vmatpush1.xpose.msra.mxu0 0.0
    %864 = vmatprep.subr.mxu0 0.0
    %865 = vmatpush1.xpose.msra.mxu0 0.0
    %866 = vmatprep.subr.mxu0 0.0
    %867 = vmatpush1.xpose.msra.mxu0 0.0
    %868 = vmatprep.subr.mxu0 0.0
    %869 = vmatpush1.xpose.msra.mxu0 0.0
    %870 = vmatprep.subr.mxu0 0.0
    %871 = vmatpush1.xpose.msra.mxu0 0.0
    %872 = vmatprep.subr.mxu0 0.0
    %873 = vmatpush1.xpose.msra.mxu0 0.0
    %874 = vmatprep.subr.mxu0 0.0
    %875 = vmatpush1.xpose.msra.mxu0 0.0
    %876 = vmatprep.subr.mxu0 0.0
    %877 = vmatpush1.xpose.msra.mxu0 0.0
    %878 = vmatprep.subr.mxu0 0.0
    %879 = vmatpush1.xpose.msra.mxu0 0.0
    %880 = vmatprep.subr.mxu0 0.0
    %881 = vmatpush1.xpose.msra.mxu0 0.0
    %882 = vmatprep.subr.mxu0 0.0
    %883 = vmatpush1.xpose.msra.mxu0 0.0
    %884 = vmatprep.subr.mxu0 0.0
    %885 = vmatpush1.xpose.msra.mxu0 0.0
    %886 = vmatprep.subr.mxu0 0.0
    %887 = vmatpush1.xpose.msra.mxu0 0.0
    %888 = vmatprep.subr.mxu0 0.0
    %889 = vmatpush1.xpose.msra.mxu0 0.0
    %890 = vmatprep.subr.mxu0 0.0
    %891 = vmatpush1.xpose.msra.mxu0 0.0
    %892 = vmatprep.subr.mxu0 0.0
    %893 = vmatpush1.xpose.msra.mxu0 %v860
    %894 = vmatprep.subr.mxu0 0.0
    %895 = vmatpush2.xpose.msra.mxu0 0.0
    %896 = vmatprep.subr.mxu0 0.0
    %897 = vmatpush2.xpose.msra.mxu0 0.0
    %898 = vmatprep.subr.mxu0 0.0
    %899 = vmatpush2.xpose.msra.mxu0 0.0
    %900 = vmatprep.subr.mxu0 0.0
    %901 = vmatpush2.xpose.msra.mxu0 0.0
    %902 = vmatprep.subr.mxu0 0.0
    %903 = vmatpush2.xpose.msra.mxu0 0.0
    %904 = vmatprep.subr.mxu0 0.0
    %905 = vmatpush2.xpose.msra.mxu0 0.0
    %906 = vmatprep.subr.mxu0 0.0
    %907 = vmatpush2.xpose.msra.mxu0 0.0
    %908 = vmatprep.subr.mxu0 0.0
    %909 = vmatpush2.xpose.msra.mxu0 0.0
    %910 = vmatprep.subr.mxu0 0.0
    %911 = vmatpush2.xpose.msra.mxu0 0.0
    %912 = vmatprep.subr.mxu0 0.0
    %913 = vmatpush2.xpose.msra.mxu0 0.0
    %914 = vmatprep.subr.mxu0 0.0
    %915 = vmatpush2.xpose.msra.mxu0 0.0
    %916 = vmatprep.subr.mxu0 0.0
    %917 = vmatpush2.xpose.msra.mxu0 0.0
    %918 = vmatprep.subr.mxu0 0.0
    %919 = vmatpush2.xpose.msra.mxu0 0.0
    %920 = vmatprep.subr.mxu0 0.0
    %921 = vmatpush2.xpose.msra.mxu0 0.0
    %922 = vmatprep.subr.mxu0 0.0
    %923 = vmatpush2.xpose.msra.mxu0 0.0
    %924 = vmatprep.subr.mxu0 0.0
    %925 = vmatpush2.xpose.msra.mxu0 0.0
    %926 = vmatprep.mubr.f32.mxu0 0.0
    %927 = vmatmul.mubr.f32.gmra.mxu0 %v858
    %v928 = vpop.f32.mrf.mxu0
    %v929 = vadd.f32 0.0, %v928
    %v930 = vpop.f32.mrf.mxu0
    %931 = vdwg.mxu0
    %932 = vrot.lane.b32.xlu0 %v184, 112
    %v933 = vpop.permute.xlu0 %932
    %934 = vrot.lane.b32.xlu0 %v184, 80
    %v935 = vpop.permute.xlu0 %934
    %v936 = vsel %vm190, %v933, 0
    %v938 = vsel %vm190, %v935, 0
    %940 = vmatprep.subr.mxu0 0.0
    %941 = vmatpush1.xpose.msra.mxu0 0.0
    %942 = vmatprep.subr.mxu0 0.0
    %943 = vmatpush1.xpose.msra.mxu0 0.0
    %944 = vmatprep.subr.mxu0 0.0
    %945 = vmatpush1.xpose.msra.mxu0 0.0
    %946 = vmatprep.subr.mxu0 0.0
    %947 = vmatpush1.xpose.msra.mxu0 0.0
    %948 = vmatprep.subr.mxu0 0.0
    %949 = vmatpush1.xpose.msra.mxu0 0.0
    %950 = vmatprep.subr.mxu0 0.0
    %951 = vmatpush1.xpose.msra.mxu0 0.0
    %952 = vmatprep.subr.mxu0 0.0
    %953 = vmatpush1.xpose.msra.mxu0 0.0
    %954 = vmatprep.subr.mxu0 0.0
    %955 = vmatpush1.xpose.msra.mxu0 0.0
    %956 = vmatprep.subr.mxu0 0.0
    %957 = vmatpush1.xpose.msra.mxu0 0.0
    %958 = vmatprep.subr.mxu0 0.0
    %959 = vmatpush1.xpose.msra.mxu0 0.0
    %960 = vmatprep.subr.mxu0 0.0
    %961 = vmatpush1.xpose.msra.mxu0 0.0
    %962 = vmatprep.subr.mxu0 0.0
    %963 = vmatpush1.xpose.msra.mxu0 0.0
    %964 = vmatprep.subr.mxu0 0.0
    %965 = vmatpush1.xpose.msra.mxu0 0.0
    %966 = vmatprep.subr.mxu0 0.0
    %967 = vmatpush1.xpose.msra.mxu0 0.0
    %968 = vmatprep.subr.mxu0 0.0
    %969 = vmatpush1.xpose.msra.mxu0 0.0
    %970 = vmatprep.subr.mxu0 0.0
    %971 = vmatpush1.xpose.msra.mxu0 %v938
    %972 = vmatprep.subr.mxu0 0.0
    %973 = vmatpush2.xpose.msra.mxu0 0.0
    %974 = vmatprep.subr.mxu0 0.0
    %975 = vmatpush2.xpose.msra.mxu0 0.0
    %976 = vmatprep.subr.mxu0 0.0
    %977 = vmatpush2.xpose.msra.mxu0 0.0
    %978 = vmatprep.subr.mxu0 0.0
    %979 = vmatpush2.xpose.msra.mxu0 0.0
    %980 = vmatprep.subr.mxu0 0.0
    %981 = vmatpush2.xpose.msra.mxu0 0.0
    %982 = vmatprep.subr.mxu0 0.0
    %983 = vmatpush2.xpose.msra.mxu0 0.0
    %984 = vmatprep.subr.mxu0 0.0
    %985 = vmatpush2.xpose.msra.mxu0 0.0
    %986 = vmatprep.subr.mxu0 0.0
    %987 = vmatpush2.xpose.msra.mxu0 0.0
    %988 = vmatprep.subr.mxu0 0.0
    %989 = vmatpush2.xpose.msra.mxu0 0.0
    %990 = vmatprep.subr.mxu0 0.0
    %991 = vmatpush2.xpose.msra.mxu0 0.0
    %992 = vmatprep.subr.mxu0 0.0
    %993 = vmatpush2.xpose.msra.mxu0 0.0
    %994 = vmatprep.subr.mxu0 0.0
    %995 = vmatpush2.xpose.msra.mxu0 0.0
    %996 = vmatprep.subr.mxu0 0.0
    %997 = vmatpush2.xpose.msra.mxu0 0.0
    %998 = vmatprep.subr.mxu0 0.0
    %999 = vmatpush2.xpose.msra.mxu0 0.0
    %1000 = vmatprep.subr.mxu0 0.0
    %1001 = vmatpush2.xpose.msra.mxu0 0.0
    %1002 = vmatprep.subr.mxu0 0.0
    %1003 = vmatpush2.xpose.msra.mxu0 0.0
    %1004 = vmatprep.mubr.f32.mxu0 0.0
    %1005 = vmatmul.mubr.f32.gmra.mxu0 %v936
    %v1006 = vpop.f32.mrf.mxu0
    %v1007 = vadd.f32 0.0, %v1006
    %v1008 = vpop.f32.mrf.mxu0
    %1009 = vdwg.mxu0
    %v1010 = vmul.f32 %v929, 0.35355338
    %v1011 = vmul.f32 %v1007, 0.35355338
    %v1012 = vadd.f32 %v1010, %v55
    %v1013 = vadd.f32 %v1011, %v55
    %v1014 = vsel %vm190, %v1012, -inf
    %1015 = vmax.xlane.f32.xlu0 %v1014
    %v1016 = vpop.xlane.xlu0 %1015
    %v1017 = vsel %vm190, %v1013, -inf
    %1018 = vmax.xlane.f32.xlu0 %v1017
    %v1019 = vpop.xlane.xlu0 %1018
    %v1020 = vsub.f32 %v1012, %v1016
    %v1021 = vsub.f32 %v1013, %v1019
    %v1022 = vmul.f32 %v1020, 1.442695
    %v1023 = vpow.pop %v1022
    %v1024 = vmul.f32 %v1021, 1.442695
    %v1025 = vpow.pop %v1024
    %v1026 = vsel %vm190, %v1023, 0.0
    %1027 = vadd.xlane.f32.xlu0 %v1026
    %v1028 = vpop.xlane.xlu0 %1027
    %v1029 = vsel %vm190, %v1025, 0.0
    %1030 = vadd.xlane.f32.xlu0 %v1029
    %v1031 = vpop.xlane.xlu0 %1030
    %v1032 = vrcp.pop %v1028
    %v1033 = vrcp.pop %v1031
    %v1034 = vmul.f32 %v1023, %v1032
    %v1035 = vmul.f32 %v1025, %v1033
    %1036 = vrot.lane.b32.xlu0 %v179, 48
    %v1037 = vpop.permute.xlu0 %1036
    %v1040 = vsel %vm190, %v1034, 0
    %1042 = vmatprep.subr.mxu0 0.0
    %1043 = vmatpush1.msra.mxu0 0.0
    %1044 = vmatprep.subr.mxu0 0.0
    %1045 = vmatpush1.msra.mxu0 0.0
    %1046 = vmatprep.subr.mxu0 0.0
    %1047 = vmatpush1.msra.mxu0 0.0
    %1048 = vmatprep.subr.mxu0 0.0
    %1049 = vmatpush1.msra.mxu0 0.0
    %1050 = vmatprep.subr.mxu0 0.0
    %1051 = vmatpush1.msra.mxu0 0.0
    %1052 = vmatprep.subr.mxu0 0.0
    %1053 = vmatpush1.msra.mxu0 0.0
    %1054 = vmatprep.subr.mxu0 0.0
    %1055 = vmatpush1.msra.mxu0 0.0
    %1056 = vmatprep.subr.mxu0 0.0
    %1057 = vmatpush1.msra.mxu0 0.0
    %1058 = vmatprep.subr.mxu0 0.0
    %1059 = vmatpush1.msra.mxu0 0.0
    %1060 = vmatprep.subr.mxu0 0.0
    %1061 = vmatpush1.msra.mxu0 0.0
    %1062 = vmatprep.subr.mxu0 0.0
    %1063 = vmatpush1.msra.mxu0 0.0
    %1064 = vmatprep.subr.mxu0 0.0
    %1065 = vmatpush1.msra.mxu0 0.0
    %1066 = vmatprep.subr.mxu0 0.0
    %1067 = vmatpush1.msra.mxu0 0.0
    %1068 = vmatprep.subr.mxu0 0.0
    %1069 = vmatpush1.msra.mxu0 0.0
    %1070 = vmatprep.subr.mxu0 0.0
    %1071 = vmatpush1.msra.mxu0 0.0
    %1072 = vmatprep.subr.mxu0 0.0
    %1073 = vmatpush1.msra.mxu0 %v1037
    %1074 = vmatprep.subr.mxu0 0.0
    %1075 = vmatpush2.msra.mxu0 0.0
    %1076 = vmatprep.subr.mxu0 0.0
    %1077 = vmatpush2.msra.mxu0 0.0
    %1078 = vmatprep.subr.mxu0 0.0
    %1079 = vmatpush2.msra.mxu0 0.0
    %1080 = vmatprep.subr.mxu0 0.0
    %1081 = vmatpush2.msra.mxu0 0.0
    %1082 = vmatprep.subr.mxu0 0.0
    %1083 = vmatpush2.msra.mxu0 0.0
    %1084 = vmatprep.subr.mxu0 0.0
    %1085 = vmatpush2.msra.mxu0 0.0
    %1086 = vmatprep.subr.mxu0 0.0
    %1087 = vmatpush2.msra.mxu0 0.0
    %1088 = vmatprep.subr.mxu0 0.0
    %1089 = vmatpush2.msra.mxu0 0.0
    %1090 = vmatprep.subr.mxu0 0.0
    %1091 = vmatpush2.msra.mxu0 0.0
    %1092 = vmatprep.subr.mxu0 0.0
    %1093 = vmatpush2.msra.mxu0 0.0
    %1094 = vmatprep.subr.mxu0 0.0
    %1095 = vmatpush2.msra.mxu0 0.0
    %1096 = vmatprep.subr.mxu0 0.0
    %1097 = vmatpush2.msra.mxu0 0.0
    %1098 = vmatprep.subr.mxu0 0.0
    %1099 = vmatpush2.msra.mxu0 0.0
    %1100 = vmatprep.subr.mxu0 0.0
    %1101 = vmatpush2.msra.mxu0 0.0
    %1102 = vmatprep.subr.mxu0 0.0
    %1103 = vmatpush2.msra.mxu0 0.0
    %1104 = vmatprep.subr.mxu0 0.0
    %1105 = vmatpush2.msra.mxu0 0.0
    %1106 = vmatprep.mubr.f32.mxu0 0.0
    %1107 = vmatmul.mubr.f32.gmra.mxu0 %v1040
    %v1108 = vpop.f32.mrf.mxu0
    %v1109 = vadd.f32 0.0, %v1108
    %v1110 = vpop.f32.mrf.mxu0
    %1111 = vdwg.mxu0
    %1112 = vrot.lane.b32.xlu0 %v184, 48
    %v1113 = vpop.permute.xlu0 %1112
    %v1116 = vsel %vm190, %v1035, 0
    %1118 = vmatprep.subr.mxu0 0.0
    %1119 = vmatpush1.msra.mxu0 0.0
    %1120 = vmatprep.subr.mxu0 0.0
    %1121 = vmatpush1.msra.mxu0 0.0
    %1122 = vmatprep.subr.mxu0 0.0
    %1123 = vmatpush1.msra.mxu0 0.0
    %1124 = vmatprep.subr.mxu0 0.0
    %1125 = vmatpush1.msra.mxu0 0.0
    %1126 = vmatprep.subr.mxu0 0.0
    %1127 = vmatpush1.msra.mxu0 0.0
    %1128 = vmatprep.subr.mxu0 0.0
    %1129 = vmatpush1.msra.mxu0 0.0
    %1130 = vmatprep.subr.mxu0 0.0
    %1131 = vmatpush1.msra.mxu0 0.0
    %1132 = vmatprep.subr.mxu0 0.0
    %1133 = vmatpush1.msra.mxu0 0.0
    %1134 = vmatprep.subr.mxu0 0.0
    %1135 = vmatpush1.msra.mxu0 0.0
    %1136 = vmatprep.subr.mxu0 0.0
    %1137 = vmatpush1.msra.mxu0 0.0
    %1138 = vmatprep.subr.mxu0 0.0
    %1139 = vmatpush1.msra.mxu0 0.0
    %1140 = vmatprep.subr.mxu0 0.0
    %1141 = vmatpush1.msra.mxu0 0.0
    %1142 = vmatprep.subr.mxu0 0.0
    %1143 = vmatpush1.msra.mxu0 0.0
    %1144 = vmatprep.subr.mxu0 0.0
    %1145 = vmatpush1.msra.mxu0 0.0
    %1146 = vmatprep.subr.mxu0 0.0
    %1147 = vmatpush1.msra.mxu0 0.0
    %1148 = vmatprep.subr.mxu0 0.0
    %1149 = vmatpush1.msra.mxu0 %v1113
    %1150 = vmatprep.subr.mxu0 0.0
    %1151 = vmatpush2.msra.mxu0 0.0
    %1152 = vmatprep.subr.mxu0 0.0
    %1153 = vmatpush2.msra.mxu0 0.0
    %1154 = vmatprep.subr.mxu0 0.0
    %1155 = vmatpush2.msra.mxu0 0.0
    %1156 = vmatprep.subr.mxu0 0.0
    %1157 = vmatpush2.msra.mxu0 0.0
    %1158 = vmatprep.subr.mxu0 0.0
    %1159 = vmatpush2.msra.mxu0 0.0
    %1160 = vmatprep.subr.mxu0 0.0
    %1161 = vmatpush2.msra.mxu0 0.0
    %1162 = vmatprep.subr.mxu0 0.0
    %1163 = vmatpush2.msra.mxu0 0.0
    %1164 = vmatprep.subr.mxu0 0.0
    %1165 = vmatpush2.msra.mxu0 0.0
    %1166 = vmatprep.subr.mxu0 0.0
    %1167 = vmatpush2.msra.mxu0 0.0
    %1168 = vmatprep.subr.mxu0 0.0
    %1169 = vmatpush2.msra.mxu0 0.0
    %1170 = vmatprep.subr.mxu0 0.0
    %1171 = vmatpush2.msra.mxu0 0.0
    %1172 = vmatprep.subr.mxu0 0.0
    %1173 = vmatpush2.msra.mxu0 0.0
    %1174 = vmatprep.subr.mxu0 0.0
    %1175 = vmatpush2.msra.mxu0 0.0
    %1176 = vmatprep.subr.mxu0 0.0
    %1177 = vmatpush2.msra.mxu0 0.0
    %1178 = vmatprep.subr.mxu0 0.0
    %1179 = vmatpush2.msra.mxu0 0.0
    %1180 = vmatprep.subr.mxu0 0.0
    %1181 = vmatpush2.msra.mxu0 0.0
    %1182 = vmatprep.mubr.f32.mxu0 0.0
    %1183 = vmatmul.mubr.f32.gmra.mxu0 %v1116
    %v1184 = vpop.f32.mrf.mxu0
    %v1185 = vadd.f32 0.0, %v1184
    %v1186 = vpop.f32.mrf.mxu0
    %1187 = vdwg.mxu0
    %1188 = vrot.lane.b32.xlu0 %v179, 104
    %v1189 = vpop.permute.xlu0 %1188
    %1190 = vrot.lane.b32.xlu0 %v179, 72
    %v1191 = vpop.permute.xlu0 %1190
    %v1192 = vsel %vm190, %v1189, 0
    %v1194 = vsel %vm190, %v1191, 0
    %1196 = vmatprep.subr.mxu0 0.0
    %1197 = vmatpush1.xpose.msra.mxu0 0.0
    %1198 = vmatprep.subr.mxu0 0.0
    %1199 = vmatpush1.xpose.msra.mxu0 0.0
    %1200 = vmatprep.subr.mxu0 0.0
    %1201 = vmatpush1.xpose.msra.mxu0 0.0
    %1202 = vmatprep.subr.mxu0 0.0
    %1203 = vmatpush1.xpose.msra.mxu0 0.0
    %1204 = vmatprep.subr.mxu0 0.0
    %1205 = vmatpush1.xpose.msra.mxu0 0.0
    %1206 = vmatprep.subr.mxu0 0.0
    %1207 = vmatpush1.xpose.msra.mxu0 0.0
    %1208 = vmatprep.subr.mxu0 0.0
    %1209 = vmatpush1.xpose.msra.mxu0 0.0
    %1210 = vmatprep.subr.mxu0 0.0
    %1211 = vmatpush1.xpose.msra.mxu0 0.0
    %1212 = vmatprep.subr.mxu0 0.0
    %1213 = vmatpush1.xpose.msra.mxu0 0.0
    %1214 = vmatprep.subr.mxu0 0.0
    %1215 = vmatpush1.xpose.msra.mxu0 0.0
    %1216 = vmatprep.subr.mxu0 0.0
    %1217 = vmatpush1.xpose.msra.mxu0 0.0
    %1218 = vmatprep.subr.mxu0 0.0
    %1219 = vmatpush1.xpose.msra.mxu0 0.0
    %1220 = vmatprep.subr.mxu0 0.0
    %1221 = vmatpush1.xpose.msra.mxu0 0.0
    %1222 = vmatprep.subr.mxu0 0.0
    %1223 = vmatpush1.xpose.msra.mxu0 0.0
    %1224 = vmatprep.subr.mxu0 0.0
    %1225 = vmatpush1.xpose.msra.mxu0 0.0
    %1226 = vmatprep.subr.mxu0 0.0
    %1227 = vmatpush1.xpose.msra.mxu0 %v1194
    %1228 = vmatprep.subr.mxu0 0.0
    %1229 = vmatpush2.xpose.msra.mxu0 0.0
    %1230 = vmatprep.subr.mxu0 0.0
    %1231 = vmatpush2.xpose.msra.mxu0 0.0
    %1232 = vmatprep.subr.mxu0 0.0
    %1233 = vmatpush2.xpose.msra.mxu0 0.0
    %1234 = vmatprep.subr.mxu0 0.0
    %1235 = vmatpush2.xpose.msra.mxu0 0.0
    %1236 = vmatprep.subr.mxu0 0.0
    %1237 = vmatpush2.xpose.msra.mxu0 0.0
    %1238 = vmatprep.subr.mxu0 0.0
    %1239 = vmatpush2.xpose.msra.mxu0 0.0
    %1240 = vmatprep.subr.mxu0 0.0
    %1241 = vmatpush2.xpose.msra.mxu0 0.0
    %1242 = vmatprep.subr.mxu0 0.0
    %1243 = vmatpush2.xpose.msra.mxu0 0.0
    %1244 = vmatprep.subr.mxu0 0.0
    %1245 = vmatpush2.xpose.msra.mxu0 0.0
    %1246 = vmatprep.subr.mxu0 0.0
    %1247 = vmatpush2.xpose.msra.mxu0 0.0
    %1248 = vmatprep.subr.mxu0 0.0
    %1249 = vmatpush2.xpose.msra.mxu0 0.0
    %1250 = vmatprep.subr.mxu0 0.0
    %1251 = vmatpush2.xpose.msra.mxu0 0.0
    %1252 = vmatprep.subr.mxu0 0.0
    %1253 = vmatpush2.xpose.msra.mxu0 0.0
    %1254 = vmatprep.subr.mxu0 0.0
    %1255 = vmatpush2.xpose.msra.mxu0 0.0
    %1256 = vmatprep.subr.mxu0 0.0
    %1257 = vmatpush2.xpose.msra.mxu0 0.0
    %1258 = vmatprep.subr.mxu0 0.0
    %1259 = vmatpush2.xpose.msra.mxu0 0.0
    %1260 = vmatprep.mubr.f32.mxu0 0.0
    %1261 = vmatmul.mubr.f32.gmra.mxu0 %v1192
    %v1262 = vpop.f32.mrf.mxu0
    %v1263 = vadd.f32 0.0, %v1262
    %v1264 = vpop.f32.mrf.mxu0
    %1265 = vdwg.mxu0
    %1266 = vrot.lane.b32.xlu0 %v184, 104
    %v1267 = vpop.permute.xlu0 %1266
    %1268 = vrot.lane.b32.xlu0 %v184, 72
    %v1269 = vpop.permute.xlu0 %1268
    %v1270 = vsel %vm190, %v1267, 0
    %v1272 = vsel %vm190, %v1269, 0
    %1274 = vmatprep.subr.mxu0 0.0
    %1275 = vmatpush1.xpose.msra.mxu0 0.0
    %1276 = vmatprep.subr.mxu0 0.0
    %1277 = vmatpush1.xpose.msra.mxu0 0.0
    %1278 = vmatprep.subr.mxu0 0.0
    %1279 = vmatpush1.xpose.msra.mxu0 0.0
    %1280 = vmatprep.subr.mxu0 0.0
    %1281 = vmatpush1.xpose.msra.mxu0 0.0
    %1282 = vmatprep.subr.mxu0 0.0
    %1283 = vmatpush1.xpose.msra.mxu0 0.0
    %1284 = vmatprep.subr.mxu0 0.0
    %1285 = vmatpush1.xpose.msra.mxu0 0.0
    %1286 = vmatprep.subr.mxu0 0.0
    %1287 = vmatpush1.xpose.msra.mxu0 0.0
    %1288 = vmatprep.subr.mxu0 0.0
    %1289 = vmatpush1.xpose.msra.mxu0 0.0
    %1290 = vmatprep.subr.mxu0 0.0
    %1291 = vmatpush1.xpose.msra.mxu0 0.0
    %1292 = vmatprep.subr.mxu0 0.0
    %1293 = vmatpush1.xpose.msra.mxu0 0.0
    %1294 = vmatprep.subr.mxu0 0.0
    %1295 = vmatpush1.xpose.msra.mxu0 0.0
    %1296 = vmatprep.subr.mxu0 0.0
    %1297 = vmatpush1.xpose.msra.mxu0 0.0
    %1298 = vmatprep.subr.mxu0 0.0
    %1299 = vmatpush1.xpose.msra.mxu0 0.0
    %1300 = vmatprep.subr.mxu0 0.0
    %1301 = vmatpush1.xpose.msra.mxu0 0.0
    %1302 = vmatprep.subr.mxu0 0.0
    %1303 = vmatpush1.xpose.msra.mxu0 0.0
    %1304 = vmatprep.subr.mxu0 0.0
    %1305 = vmatpush1.xpose.msra.mxu0 %v1272
    %1306 = vmatprep.subr.mxu0 0.0
    %1307 = vmatpush2.xpose.msra.mxu0 0.0
    %1308 = vmatprep.subr.mxu0 0.0
    %1309 = vmatpush2.xpose.msra.mxu0 0.0
    %1310 = vmatprep.subr.mxu0 0.0
    %1311 = vmatpush2.xpose.msra.mxu0 0.0
    %1312 = vmatprep.subr.mxu0 0.0
    %1313 = vmatpush2.xpose.msra.mxu0 0.0
    %1314 = vmatprep.subr.mxu0 0.0
    %1315 = vmatpush2.xpose.msra.mxu0 0.0
    %1316 = vmatprep.subr.mxu0 0.0
    %1317 = vmatpush2.xpose.msra.mxu0 0.0
    %1318 = vmatprep.subr.mxu0 0.0
    %1319 = vmatpush2.xpose.msra.mxu0 0.0
    %1320 = vmatprep.subr.mxu0 0.0
    %1321 = vmatpush2.xpose.msra.mxu0 0.0
    %1322 = vmatprep.subr.mxu0 0.0
    %1323 = vmatpush2.xpose.msra.mxu0 0.0
    %1324 = vmatprep.subr.mxu0 0.0
    %1325 = vmatpush2.xpose.msra.mxu0 0.0
    %1326 = vmatprep.subr.mxu0 0.0
    %1327 = vmatpush2.xpose.msra.mxu0 0.0
    %1328 = vmatprep.subr.mxu0 0.0
    %1329 = vmatpush2.xpose.msra.mxu0 0.0
    %1330 = vmatprep.subr.mxu0 0.0
    %1331 = vmatpush2.xpose.msra.mxu0 0.0
    %1332 = vmatprep.subr.mxu0 0.0
    %1333 = vmatpush2.xpose.msra.mxu0 0.0
    %1334 = vmatprep.subr.mxu0 0.0
    %1335 = vmatpush2.xpose.msra.mxu0 0.0
    %1336 = vmatprep.subr.mxu0 0.0
    %1337 = vmatpush2.xpose.msra.mxu0 0.0
    %1338 = vmatprep.mubr.f32.mxu0 0.0
    %1339 = vmatmul.mubr.f32.gmra.mxu0 %v1270
    %v1340 = vpop.f32.mrf.mxu0
    %v1341 = vadd.f32 0.0, %v1340
    %v1342 = vpop.f32.mrf.mxu0
    %1343 = vdwg.mxu0
    %v1344 = vmul.f32 %v1263, 0.35355338
    %v1345 = vmul.f32 %v1341, 0.35355338
    %v1346 = vadd.f32 %v1344, %v55
    %v1347 = vadd.f32 %v1345, %v55
    %v1348 = vsel %vm190, %v1346, -inf
    %1349 = vmax.xlane.f32.xlu0 %v1348
    %v1350 = vpop.xlane.xlu0 %1349
    %v1351 = vsel %vm190, %v1347, -inf
    %1352 = vmax.xlane.f32.xlu0 %v1351
    %v1353 = vpop.xlane.xlu0 %1352
    %v1354 = vsub.f32 %v1346, %v1350
    %v1355 = vsub.f32 %v1347, %v1353
    %v1356 = vmul.f32 %v1354, 1.442695
    %v1357 = vpow.pop %v1356
    %v1358 = vmul.f32 %v1355, 1.442695
    %v1359 = vpow.pop %v1358
    %v1360 = vsel %vm190, %v1357, 0.0
    %1361 = vadd.xlane.f32.xlu0 %v1360
    %v1362 = vpop.xlane.xlu0 %1361
    %v1363 = vsel %vm190, %v1359, 0.0
    %1364 = vadd.xlane.f32.xlu0 %v1363
    %v1365 = vpop.xlane.xlu0 %1364
    %v1366 = vrcp.pop %v1362
    %v1367 = vrcp.pop %v1365
    %v1368 = vmul.f32 %v1357, %v1366
    %v1369 = vmul.f32 %v1359, %v1367
    %1370 = vrot.lane.b32.xlu0 %v179, 40
    %v1371 = vpop.permute.xlu0 %1370
    %v1374 = vsel %vm190, %v1368, 0
    %1376 = vmatprep.subr.mxu0 0.0
    %1377 = vmatpush1.msra.mxu0 0.0
    %1378 = vmatprep.subr.mxu0 0.0
    %1379 = vmatpush1.msra.mxu0 0.0
    %1380 = vmatprep.subr.mxu0 0.0
    %1381 = vmatpush1.msra.mxu0 0.0
    %1382 = vmatprep.subr.mxu0 0.0
    %1383 = vmatpush1.msra.mxu0 0.0
    %1384 = vmatprep.subr.mxu0 0.0
    %1385 = vmatpush1.msra.mxu0 0.0
    %1386 = vmatprep.subr.mxu0 0.0
    %1387 = vmatpush1.msra.mxu0 0.0
    %1388 = vmatprep.subr.mxu0 0.0
    %1389 = vmatpush1.msra.mxu0 0.0
    %1390 = vmatprep.subr.mxu0 0.0
    %1391 = vmatpush1.msra.mxu0 0.0
    %1392 = vmatprep.subr.mxu0 0.0
    %1393 = vmatpush1.msra.mxu0 0.0
    %1394 = vmatprep.subr.mxu0 0.0
    %1395 = vmatpush1.msra.mxu0 0.0
    %1396 = vmatprep.subr.mxu0 0.0
    %1397 = vmatpush1.msra.mxu0 0.0
    %1398 = vmatprep.subr.mxu0 0.0
    %1399 = vmatpush1.msra.mxu0 0.0
    %1400 = vmatprep.subr.mxu0 0.0
    %1401 = vmatpush1.msra.mxu0 0.0
    %1402 = vmatprep.subr.mxu0 0.0
    %1403 = vmatpush1.msra.mxu0 0.0
    %1404 = vmatprep.subr.mxu0 0.0
    %1405 = vmatpush1.msra.mxu0 0.0
    %1406 = vmatprep.subr.mxu0 0.0
    %1407 = vmatpush1.msra.mxu0 %v1371
    %1408 = vmatprep.subr.mxu0 0.0
    %1409 = vmatpush2.msra.mxu0 0.0
    %1410 = vmatprep.subr.mxu0 0.0
    %1411 = vmatpush2.msra.mxu0 0.0
    %1412 = vmatprep.subr.mxu0 0.0
    %1413 = vmatpush2.msra.mxu0 0.0
    %1414 = vmatprep.subr.mxu0 0.0
    %1415 = vmatpush2.msra.mxu0 0.0
    %1416 = vmatprep.subr.mxu0 0.0
    %1417 = vmatpush2.msra.mxu0 0.0
    %1418 = vmatprep.subr.mxu0 0.0
    %1419 = vmatpush2.msra.mxu0 0.0
    %1420 = vmatprep.subr.mxu0 0.0
    %1421 = vmatpush2.msra.mxu0 0.0
    %1422 = vmatprep.subr.mxu0 0.0
    %1423 = vmatpush2.msra.mxu0 0.0
    %1424 = vmatprep.subr.mxu0 0.0
    %1425 = vmatpush2.msra.mxu0 0.0
    %1426 = vmatprep.subr.mxu0 0.0
    %1427 = vmatpush2.msra.mxu0 0.0
    %1428 = vmatprep.subr.mxu0 0.0
    %1429 = vmatpush2.msra.mxu0 0.0
    %1430 = vmatprep.subr.mxu0 0.0
    %1431 = vmatpush2.msra.mxu0 0.0
    %1432 = vmatprep.subr.mxu0 0.0
    %1433 = vmatpush2.msra.mxu0 0.0
    %1434 = vmatprep.subr.mxu0 0.0
    %1435 = vmatpush2.msra.mxu0 0.0
    %1436 = vmatprep.subr.mxu0 0.0
    %1437 = vmatpush2.msra.mxu0 0.0
    %1438 = vmatprep.subr.mxu0 0.0
    %1439 = vmatpush2.msra.mxu0 0.0
    %1440 = vmatprep.mubr.f32.mxu0 0.0
    %1441 = vmatmul.mubr.f32.gmra.mxu0 %v1374
    %v1442 = vpop.f32.mrf.mxu0
    %v1443 = vadd.f32 0.0, %v1442
    %v1444 = vpop.f32.mrf.mxu0
    %1445 = vdwg.mxu0
    %1446 = vrot.lane.b32.xlu0 %v184, 40
    %v1447 = vpop.permute.xlu0 %1446
    %v1450 = vsel %vm190, %v1369, 0
    %1452 = vmatprep.subr.mxu0 0.0
    %1453 = vmatpush1.msra.mxu0 0.0
    %1454 = vmatprep.subr.mxu0 0.0
    %1455 = vmatpush1.msra.mxu0 0.0
    %1456 = vmatprep.subr.mxu0 0.0
    %1457 = vmatpush1.msra.mxu0 0.0
    %1458 = vmatprep.subr.mxu0 0.0
    %1459 = vmatpush1.msra.mxu0 0.0
    %1460 = vmatprep.subr.mxu0 0.0
    %1461 = vmatpush1.msra.mxu0 0.0
    %1462 = vmatprep.subr.mxu0 0.0
    %1463 = vmatpush1.msra.mxu0 0.0
    %1464 = vmatprep.subr.mxu0 0.0
    %1465 = vmatpush1.msra.mxu0 0.0
    %1466 = vmatprep.subr.mxu0 0.0
    %1467 = vmatpush1.msra.mxu0 0.0
    %1468 = vmatprep.subr.mxu0 0.0
    %1469 = vmatpush1.msra.mxu0 0.0
    %1470 = vmatprep.subr.mxu0 0.0
    %1471 = vmatpush1.msra.mxu0 0.0
    %1472 = vmatprep.subr.mxu0 0.0
    %1473 = vmatpush1.msra.mxu0 0.0
    %1474 = vmatprep.subr.mxu0 0.0
    %1475 = vmatpush1.msra.mxu0 0.0
    %1476 = vmatprep.subr.mxu0 0.0
    %1477 = vmatpush1.msra.mxu0 0.0
    %1478 = vmatprep.subr.mxu0 0.0
    %1479 = vmatpush1.msra.mxu0 0.0
    %1480 = vmatprep.subr.mxu0 0.0
    %1481 = vmatpush1.msra.mxu0 0.0
    %1482 = vmatprep.subr.mxu0 0.0
    %1483 = vmatpush1.msra.mxu0 %v1447
    %1484 = vmatprep.subr.mxu0 0.0
    %1485 = vmatpush2.msra.mxu0 0.0
    %1486 = vmatprep.subr.mxu0 0.0
    %1487 = vmatpush2.msra.mxu0 0.0
    %1488 = vmatprep.subr.mxu0 0.0
    %1489 = vmatpush2.msra.mxu0 0.0
    %1490 = vmatprep.subr.mxu0 0.0
    %1491 = vmatpush2.msra.mxu0 0.0
    %1492 = vmatprep.subr.mxu0 0.0
    %1493 = vmatpush2.msra.mxu0 0.0
    %1494 = vmatprep.subr.mxu0 0.0
    %1495 = vmatpush2.msra.mxu0 0.0
    %1496 = vmatprep.subr.mxu0 0.0
    %1497 = vmatpush2.msra.mxu0 0.0
    %1498 = vmatprep.subr.mxu0 0.0
    %1499 = vmatpush2.msra.mxu0 0.0
    %1500 = vmatprep.subr.mxu0 0.0
    %1501 = vmatpush2.msra.mxu0 0.0
    %1502 = vmatprep.subr.mxu0 0.0
    %1503 = vmatpush2.msra.mxu0 0.0
    %1504 = vmatprep.subr.mxu0 0.0
    %1505 = vmatpush2.msra.mxu0 0.0
    %1506 = vmatprep.subr.mxu0 0.0
    %1507 = vmatpush2.msra.mxu0 0.0
    %1508 = vmatprep.subr.mxu0 0.0
    %1509 = vmatpush2.msra.mxu0 0.0
    %1510 = vmatprep.subr.mxu0 0.0
    %1511 = vmatpush2.msra.mxu0 0.0
    %1512 = vmatprep.subr.mxu0 0.0
    %1513 = vmatpush2.msra.mxu0 0.0
    %1514 = vmatprep.subr.mxu0 0.0
    %1515 = vmatpush2.msra.mxu0 0.0
    %1516 = vmatprep.mubr.f32.mxu0 0.0
    %1517 = vmatmul.mubr.f32.gmra.mxu0 %v1450
    %v1518 = vpop.f32.mrf.mxu0
    %v1519 = vadd.f32 0.0, %v1518
    %v1520 = vpop.f32.mrf.mxu0
    %1521 = vdwg.mxu0
    %1524 = vrot.lane.b32.xlu0 %v775, 8
    %v1525 = vpop.permute.xlu0 %1524
    %1526 = vrot.lane.b32.xlu0 %v851, 8
    %v1527 = vpop.permute.xlu0 %1526
    %1532 = vrot.lane.b32.xlu0 %v1109, 16
    %v1533 = vpop.permute.xlu0 %1532
    %1534 = vrot.lane.b32.xlu0 %v1185, 16
    %v1535 = vpop.permute.xlu0 %1534
    %1540 = vrot.lane.b32.xlu0 %v1443, 24
    %v1541 = vpop.permute.xlu0 %1540
    %1542 = vrot.lane.b32.xlu0 %v1519, 24
    %v1543 = vpop.permute.xlu0 %1542
    %v1546 = vsel %vm190, %v441, %v1525
    %v1547 = vsel %vm190, %v517, %v1527
    %vm1548 = vcmask 130048
    %v1549 = vsel %vm1548, %v1546, %v1533
    %v1550 = vsel %vm1548, %v1547, %v1535
    %vm1551 = vcmask 195584
    %v1552 = vsel %vm1551, %v1549, %v1541
    %v1553 = vsel %vm1551, %v1550, %v1543
    %v1554 = vld [vmem:[%s4] sm:$0xff]
    %v1555 = vld [vmem:[%s4 + $0x8] sm:$0xff]
    %v1556 = vld [vmem:[%s4 + $0x10] sm:$0xff]
    %v1557 = vld [vmem:[%s4 + $0x18] sm:$0xff]
    %v1559 = vsel %vm58, %v1552, 0
    %v1562 = vsel %vm58, %v1553, 0
    %1564 = vmatprep.subr.mxu0 0.0
    %1565 = vmatpush1.msra.mxu0 0.0
    %1566 = vmatprep.subr.mxu0 0.0
    %1567 = vmatpush1.msra.mxu0 0.0
    %1568 = vmatprep.subr.mxu0 0.0
    %1569 = vmatpush1.msra.mxu0 0.0
    %1570 = vmatprep.subr.mxu0 0.0
    %1571 = vmatpush1.msra.mxu0 0.0
    %1572 = vmatprep.subr.mxu0 0.0
    %1573 = vmatpush1.msra.mxu0 0.0
    %1574 = vmatprep.subr.mxu0 0.0
    %1575 = vmatpush1.msra.mxu0 0.0
    %1576 = vmatprep.subr.mxu0 0.0
    %1577 = vmatpush1.msra.mxu0 0.0
    %1578 = vmatprep.subr.mxu0 0.0
    %1579 = vmatpush1.msra.mxu0 0.0
    %1580 = vmatprep.subr.mxu0 0.0
    %1581 = vmatpush1.msra.mxu0 0.0
    %1582 = vmatprep.subr.mxu0 0.0
    %1583 = vmatpush1.msra.mxu0 0.0
    %1584 = vmatprep.subr.mxu0 0.0
    %1585 = vmatpush1.msra.mxu0 0.0
    %1586 = vmatprep.subr.mxu0 0.0
    %1587 = vmatpush1.msra.mxu0 0.0
    %1588 = vmatprep.subr.mxu0 0.0
    %1589 = vmatpush1.msra.mxu0 %v1557
    %1590 = vmatprep.subr.mxu0 0.0
    %1591 = vmatpush1.msra.mxu0 %v1556
    %1592 = vmatprep.subr.mxu0 0.0
    %1593 = vmatpush1.msra.mxu0 %v1555
    %1594 = vmatprep.subr.mxu0 0.0
    %1595 = vmatpush1.msra.mxu0 %v1554
    %1596 = vmatprep.subr.mxu0 0.0
    %1597 = vmatpush2.msra.mxu0 0.0
    %1598 = vmatprep.subr.mxu0 0.0
    %1599 = vmatpush2.msra.mxu0 0.0
    %1600 = vmatprep.subr.mxu0 0.0
    %1601 = vmatpush2.msra.mxu0 0.0
    %1602 = vmatprep.subr.mxu0 0.0
    %1603 = vmatpush2.msra.mxu0 0.0
    %1604 = vmatprep.subr.mxu0 0.0
    %1605 = vmatpush2.msra.mxu0 0.0
    %1606 = vmatprep.subr.mxu0 0.0
    %1607 = vmatpush2.msra.mxu0 0.0
    %1608 = vmatprep.subr.mxu0 0.0
    %1609 = vmatpush2.msra.mxu0 0.0
    %1610 = vmatprep.subr.mxu0 0.0
    %1611 = vmatpush2.msra.mxu0 0.0
    %1612 = vmatprep.subr.mxu0 0.0
    %1613 = vmatpush2.msra.mxu0 0.0
    %1614 = vmatprep.subr.mxu0 0.0
    %1615 = vmatpush2.msra.mxu0 0.0
    %1616 = vmatprep.subr.mxu0 0.0
    %1617 = vmatpush2.msra.mxu0 0.0
    %1618 = vmatprep.subr.mxu0 0.0
    %1619 = vmatpush2.msra.mxu0 0.0
    %1620 = vmatprep.subr.mxu0 0.0
    %1621 = vmatpush2.msra.mxu0 0.0
    %1622 = vmatprep.subr.mxu0 0.0
    %1623 = vmatpush2.msra.mxu0 0.0
    %1624 = vmatprep.subr.mxu0 0.0
    %1625 = vmatpush2.msra.mxu0 0.0
    %1626 = vmatprep.subr.mxu0 0.0
    %1627 = vmatpush2.msra.mxu0 0.0
    %1628 = vmatprep.mubr.f32.mxu0 0.0
    %1629 = vmatmul.mubr.f32.gmra.mxu0 %v1559
    %v1630 = vpop.f32.mrf.mxu0
    %v1631 = vadd.f32 0.0, %v1630
    %v1632 = vpop.f32.mrf.mxu0
    %1633 = vmatprep.mubr.f32.mxu0 0.0
    %1634 = vmatmul.mubr.f32.gmra.mxu0 %v1562
    %v1635 = vpop.f32.mrf.mxu0
    %v1636 = vadd.f32 0.0, %v1635
    %v1637 = vpop.f32.mrf.mxu0
    %1638 = vdwg.mxu0
    %v1639 = vadd.f32 %v48, %v1631
    %v1640 = vadd.f32 %v49, %v1636
    %v1641 = vld [vmem:[%s5] sm:$0x1]
    %v1642 = vld [vmem:[%s6] sm:$0x1]
    %v1643 = vsel %vm58, %v1639, 0.0
    %1644 = vadd.xlane.f32.xlu0 %v1643
    %v1645 = vpop.xlane.xlu0 %1644
    %v1646 = vsel %vm58, %v1640, 0.0
    %1647 = vadd.xlane.f32.xlu0 %v1646
    %v1648 = vpop.xlane.xlu0 %1647
    %v1649 = vmul.f32 %v1645, %v65
    %v1650 = vmul.f32 %v1648, %v65
    %v1651 = vsub.f32 %v1639, %v1649
    %v1652 = vsub.f32 %v1640, %v1650
    %v1653 = vmul.f32 %v1651, %v1651
    %v1654 = vmul.f32 %v1652, %v1652
    %v1655 = vsel %vm58, %v1653, 0.0
    %1656 = vadd.xlane.f32.xlu0 %v1655
    %v1657 = vpop.xlane.xlu0 %1656
    %v1658 = vsel %vm58, %v1654, 0.0
    %1659 = vadd.xlane.f32.xlu0 %v1658
    %v1660 = vpop.xlane.xlu0 %1659
    %v1661 = vmul.f32 %v1657, %v65
    %v1662 = vmul.f32 %v1660, %v65
    %v1663 = vadd.f32 %v1661, 1e-05
    %v1664 = vadd.f32 %v1662, 1e-05
    %v1665 = vrsqrt.pop %v1663
    %v1666 = vrsqrt.pop %v1664
    %v1667 = vmul.f32 %v1651, %v1665
    %v1668 = vmul.f32 %v1652, %v1666
    %v1670 = vlaneseq
    %v1671 = vshrl.u32 %v1670, 7
    %v1672 = vsub.s32 0, %v1671
    %v1673 = vrot.slane %v1641, %v1672
    %v1675 = vmul.f32 %v1667, %v1673
    %v1676 = vmul.f32 %v1668, %v1673
    %v1678 = vlaneseq
    %v1679 = vshrl.u32 %v1678, 7
    %v1680 = vsub.s32 0, %v1679
    %v1681 = vrot.slane %v1642, %v1680
    %v1683 = vadd.f32 %v1675, %v1681
    %v1684 = vadd.f32 %v1676, %v1681
    %v1685 = vld [vmem:[%s7] sm:$0xff]
    %v1686 = vld [vmem:[%s7 + $0x8] sm:$0xff]
    %v1687 = vld [vmem:[%s7 + $0x10] sm:$0xff]
    %v1688 = vld [vmem:[%s7 + $0x18] sm:$0xff]
    %v1689 = vld [vmem:[%s8] sm:$0x1]
    %v1691 = vlaneseq
    %v1692 = vshrl.u32 %v1691, 7
    %v1693 = vsub.s32 0, %v1692
    %v1694 = vrot.slane %v1689, %v1693
    %v1697 = vsel %vm58, %v1683, 0
    %v1700 = vsel %vm58, %v1684, 0
    %1702 = vmatprep.subr.mxu0 0.0
    %1703 = vmatpush1.msra.mxu0 0.0
    %1704 = vmatprep.subr.mxu0 0.0
    %1705 = vmatpush1.msra.mxu0 0.0
    %1706 = vmatprep.subr.mxu0 0.0
    %1707 = vmatpush1.msra.mxu0 0.0
    %1708 = vmatprep.subr.mxu0 0.0
    %1709 = vmatpush1.msra.mxu0 0.0
    %1710 = vmatprep.subr.mxu0 0.0
    %1711 = vmatpush1.msra.mxu0 0.0
    %1712 = vmatprep.subr.mxu0 0.0
    %1713 = vmatpush1.msra.mxu0 0.0
    %1714 = vmatprep.subr.mxu0 0.0
    %1715 = vmatpush1.msra.mxu0 0.0
    %1716 = vmatprep.subr.mxu0 0.0
    %1717 = vmatpush1.msra.mxu0 0.0
    %1718 = vmatprep.subr.mxu0 0.0
    %1719 = vmatpush1.msra.mxu0 0.0
    %1720 = vmatprep.subr.mxu0 0.0
    %1721 = vmatpush1.msra.mxu0 0.0
    %1722 = vmatprep.subr.mxu0 0.0
    %1723 = vmatpush1.msra.mxu0 0.0
    %1724 = vmatprep.subr.mxu0 0.0
    %1725 = vmatpush1.msra.mxu0 0.0
    %1726 = vmatprep.subr.mxu0 0.0
    %1727 = vmatpush1.msra.mxu0 %v1688
    %1728 = vmatprep.subr.mxu0 0.0
    %1729 = vmatpush1.msra.mxu0 %v1687
    %1730 = vmatprep.subr.mxu0 0.0
    %1731 = vmatpush1.msra.mxu0 %v1686
    %1732 = vmatprep.subr.mxu0 0.0
    %1733 = vmatpush1.msra.mxu0 %v1685
    %1734 = vmatprep.subr.mxu0 0.0
    %1735 = vmatpush2.msra.mxu0 0.0
    %1736 = vmatprep.subr.mxu0 0.0
    %1737 = vmatpush2.msra.mxu0 0.0
    %1738 = vmatprep.subr.mxu0 0.0
    %1739 = vmatpush2.msra.mxu0 0.0
    %1740 = vmatprep.subr.mxu0 0.0
    %1741 = vmatpush2.msra.mxu0 0.0
    %1742 = vmatprep.subr.mxu0 0.0
    %1743 = vmatpush2.msra.mxu0 0.0
    %1744 = vmatprep.subr.mxu0 0.0
    %1745 = vmatpush2.msra.mxu0 0.0
    %1746 = vmatprep.subr.mxu0 0.0
    %1747 = vmatpush2.msra.mxu0 0.0
    %1748 = vmatprep.subr.mxu0 0.0
    %1749 = vmatpush2.msra.mxu0 0.0
    %1750 = vmatprep.subr.mxu0 0.0
    %1751 = vmatpush2.msra.mxu0 0.0
    %1752 = vmatprep.subr.mxu0 0.0
    %1753 = vmatpush2.msra.mxu0 0.0
    %1754 = vmatprep.subr.mxu0 0.0
    %1755 = vmatpush2.msra.mxu0 0.0
    %1756 = vmatprep.subr.mxu0 0.0
    %1757 = vmatpush2.msra.mxu0 0.0
    %1758 = vmatprep.subr.mxu0 0.0
    %1759 = vmatpush2.msra.mxu0 0.0
    %1760 = vmatprep.subr.mxu0 0.0
    %1761 = vmatpush2.msra.mxu0 0.0
    %1762 = vmatprep.subr.mxu0 0.0
    %1763 = vmatpush2.msra.mxu0 0.0
    %1764 = vmatprep.subr.mxu0 0.0
    %1765 = vmatpush2.msra.mxu0 0.0
    %1766 = vmatprep.mubr.f32.mxu0 0.0
    %1767 = vmatmul.mubr.f32.gmra.mxu0 %v1697
    %v1768 = vpop.f32.mrf.mxu0
    %v1769 = vadd.f32 %v1694, %v1768
    %v1770 = vpop.f32.mrf.mxu0
    %1771 = vmatprep.mubr.f32.mxu0 0.0
    %1772 = vmatmul.mubr.f32.gmra.mxu0 %v1700
    %v1773 = vpop.f32.mrf.mxu0
    %v1774 = vadd.f32 %v1694, %v1773
    %v1775 = vpop.f32.mrf.mxu0
    %1776 = vdwg.mxu0
    %v1777 = vmul.f32 %v1769, 0.5
    %v1778 = vmul.f32 %v1774, 0.5
    %v1779 = vmul.f32 %v1769, 0.044715
    %v1780 = vmul.f32 %v1774, 0.044715
    %v1781 = vmul.f32 %v1779, %v1769
    %v1782 = vmul.f32 %v1780, %v1774
    %v1783 = vmul.f32 %v1781, %v1769
    %v1784 = vmul.f32 %v1782, %v1774
    %v1785 = vadd.f32 %v1769, %v1783
    %v1786 = vadd.f32 %v1774, %v1784
    %v1787 = vmul.f32 %v1785, 0.7978846
    %v1788 = vmul.f32 %v1786, 0.7978846
    %v1789 = vtanh.pop %v1787
    %v1790 = vtanh.pop %v1788
    %v1791 = vadd.f32 %v1789, 1.0
    %v1792 = vadd.f32 %v1790, 1.0
    %v1793 = vmul.f32 %v1777, %v1791
    %v1794 = vmul.f32 %v1778, %v1792
    %v1795 = vld [vmem:[%s9] sm:$0xff]
    %v1796 = vld [vmem:[%s9 + $0x8] sm:$0xff]
    %v1797 = vld [vmem:[%s9 + $0x10] sm:$0xff]
    %v1798 = vld [vmem:[%s9 + $0x18] sm:$0xff]
    %v1799 = vld [vmem:[%s9 + $0x20] sm:$0xff]
    %v1800 = vld [vmem:[%s9 + $0x28] sm:$0xff]
    %v1801 = vld [vmem:[%s9 + $0x30] sm:$0xff]
    %v1802 = vld [vmem:[%s9 + $0x38] sm:$0xff]
    %v1803 = vld [vmem:[%s9 + $0x40] sm:$0xff]
    %v1804 = vld [vmem:[%s9 + $0x48] sm:$0xff]
    %v1805 = vld [vmem:[%s9 + $0x50] sm:$0xff]
    %v1806 = vld [vmem:[%s9 + $0x58] sm:$0xff]
    %v1807 = vld [vmem:[%s9 + $0x60] sm:$0xff]
    %v1808 = vld [vmem:[%s9 + $0x68] sm:$0xff]
    %v1809 = vld [vmem:[%s9 + $0x70] sm:$0xff]
    %v1810 = vld [vmem:[%s9 + $0x78] sm:$0xff]
    %1811 = vmatprep.subr.mxu0 0.0
    %1812 = vmatpush1.msra.mxu0 %v1810
    %1813 = vmatprep.subr.mxu0 0.0
    %1814 = vmatpush1.msra.mxu0 %v1809
    %1815 = vmatprep.subr.mxu0 0.0
    %1816 = vmatpush1.msra.mxu0 %v1808
    %1817 = vmatprep.subr.mxu0 0.0
    %1818 = vmatpush1.msra.mxu0 %v1807
    %1819 = vmatprep.subr.mxu0 0.0
    %1820 = vmatpush1.msra.mxu0 %v1806
    %1821 = vmatprep.subr.mxu0 0.0
    %1822 = vmatpush1.msra.mxu0 %v1805
    %1823 = vmatprep.subr.mxu0 0.0
    %1824 = vmatpush1.msra.mxu0 %v1804
    %1825 = vmatprep.subr.mxu0 0.0
    %1826 = vmatpush1.msra.mxu0 %v1803
    %1827 = vmatprep.subr.mxu0 0.0
    %1828 = vmatpush1.msra.mxu0 %v1802
    %1829 = vmatprep.subr.mxu0 0.0
    %1830 = vmatpush1.msra.mxu0 %v1801
    %1831 = vmatprep.subr.mxu0 0.0
    %1832 = vmatpush1.msra.mxu0 %v1800
    %1833 = vmatprep.subr.mxu0 0.0
    %1834 = vmatpush1.msra.mxu0 %v1799
    %1835 = vmatprep.subr.mxu0 0.0
    %1836 = vmatpush1.msra.mxu0 %v1798
    %1837 = vmatprep.subr.mxu0 0.0
    %1838 = vmatpush1.msra.mxu0 %v1797
    %1839 = vmatprep.subr.mxu0 0.0
    %1840 = vmatpush1.msra.mxu0 %v1796
    %1841 = vmatprep.subr.mxu0 0.0
    %1842 = vmatpush1.msra.mxu0 %v1795
    %1843 = vmatprep.subr.mxu0 0.0
    %1844 = vmatpush2.msra.mxu0 0.0
    %1845 = vmatprep.subr.mxu0 0.0
    %1846 = vmatpush2.msra.mxu0 0.0
    %1847 = vmatprep.subr.mxu0 0.0
    %1848 = vmatpush2.msra.mxu0 0.0
    %1849 = vmatprep.subr.mxu0 0.0
    %1850 = vmatpush2.msra.mxu0 0.0
    %1851 = vmatprep.subr.mxu0 0.0
    %1852 = vmatpush2.msra.mxu0 0.0
    %1853 = vmatprep.subr.mxu0 0.0
    %1854 = vmatpush2.msra.mxu0 0.0
    %1855 = vmatprep.subr.mxu0 0.0
    %1856 = vmatpush2.msra.mxu0 0.0
    %1857 = vmatprep.subr.mxu0 0.0
    %1858 = vmatpush2.msra.mxu0 0.0
    %1859 = vmatprep.subr.mxu0 0.0
    %1860 = vmatpush2.msra.mxu0 0.0
    %1861 = vmatprep.subr.mxu0 0.0
    %1862 = vmatpush2.msra.mxu0 0.0
    %1863 = vmatprep.subr.mxu0 0.0
    %1864 = vmatpush2.msra.mxu0 0.0
    %1865 = vmatprep.subr.mxu0 0.0
    %1866 = vmatpush2.msra.mxu0 0.0
    %1867 = vmatprep.subr.mxu0 0.0
    %1868 = vmatpush2.msra.mxu0 0.0
    %1869 = vmatprep.subr.mxu0 0.0
    %1870 = vmatpush2.msra.mxu0 0.0
    %1871 = vmatprep.subr.mxu0 0.0
    %1872 = vmatpush2.msra.mxu0 0.0
    %1873 = vmatprep.subr.mxu0 0.0
    %1874 = vmatpush2.msra.mxu0 0.0
    %1875 = vmatprep.mubr.f32.mxu0 0.0
    %1876 = vmatmul.mubr.f32.gmra.mxu0 %v1793
    %v1877 = vpop.f32.mrf.mxu0
    %v1878 = vadd.f32 0.0, %v1877
    %v1879 = vpop.f32.mrf.mxu0
    %1880 = vmatprep.mubr.f32.mxu0 0.0
    %1881 = vmatmul.mubr.f32.gmra.mxu0 %v1794
    %v1882 = vpop.f32.mrf.mxu0
    %v1883 = vadd.f32 0.0, %v1882
    %v1884 = vpop.f32.mrf.mxu0
    %1885 = vdwg.mxu0
    %v1886 = vadd.f32 %v1639, %v1878
    %v1887 = vadd.f32 %v1640, %v1883
    %v1888 = vld [vmem:[%s10] sm:$0x1]
    %v1890 = vlaneseq
    %v1891 = vshrl.u32 %v1890, 7
    %v1892 = vsub.s32 0, %v1891
    %v1893 = vrot.slane %v1888, %v1892
    %v1895 = vadd.f32 %v1886, %v1893
    %v1896 = vadd.f32 %v1887, %v1893
    %s1897 = scalar_lea.vmem %s1, 1
    %v1898 = vld [vmem:[%s1897] sm:$0x1]
    %s1899 = scalar_lea.vmem %s2, 1
    %v1900 = vld [vmem:[%s1899] sm:$0x1]
    %v1901 = vsel %vm58, %v1895, 0.0
    %1902 = vadd.xlane.f32.xlu0 %v1901
    %v1903 = vpop.xlane.xlu0 %1902
    %v1904 = vsel %vm58, %v1896, 0.0
    %1905 = vadd.xlane.f32.xlu0 %v1904
    %v1906 = vpop.xlane.xlu0 %1905
    %v1907 = vmul.f32 %v1903, %v65
    %v1908 = vmul.f32 %v1906, %v65
    %v1909 = vsub.f32 %v1895, %v1907
    %v1910 = vsub.f32 %v1896, %v1908
    %v1911 = vmul.f32 %v1909, %v1909
    %v1912 = vmul.f32 %v1910, %v1910
    %v1913 = vsel %vm58, %v1911, 0.0
    %1914 = vadd.xlane.f32.xlu0 %v1913
    %v1915 = vpop.xlane.xlu0 %1914
    %v1916 = vsel %vm58, %v1912, 0.0
    %1917 = vadd.xlane.f32.xlu0 %v1916
    %v1918 = vpop.xlane.xlu0 %1917
    %v1919 = vmul.f32 %v1915, %v65
    %v1920 = vmul.f32 %v1918, %v65
    %v1921 = vadd.f32 %v1919, 1e-05
    %v1922 = vadd.f32 %v1920, 1e-05
    %v1923 = vrsqrt.pop %v1921
    %v1924 = vrsqrt.pop %v1922
    %v1925 = vmul.f32 %v1909, %v1923
    %v1926 = vmul.f32 %v1910, %v1924
    %v1928 = vlaneseq
    %v1929 = vshrl.u32 %v1928, 7
    %v1930 = vsub.s32 0, %v1929
    %v1931 = vrot.slane %v1898, %v1930
    %v1933 = vmul.f32 %v1925, %v1931
    %v1934 = vmul.f32 %v1926, %v1931
    %v1936 = vlaneseq
    %v1937 = vshrl.u32 %v1936, 7
    %v1938 = vsub.s32 0, %v1937
    %v1939 = vrot.slane %v1900, %v1938
    %v1941 = vadd.f32 %v1933, %v1939
    %v1942 = vadd.f32 %v1934, %v1939
    %s1943 = scalar_lea.vmem %s3, 32
    %v1944 = vld [vmem:[%s1943] sm:$0xff]
    %v1945 = vld [vmem:[%s1943 + $0x8] sm:$0xff]
    %v1946 = vld [vmem:[%s1943 + $0x10] sm:$0xff]
    %v1947 = vld [vmem:[%s1943 + $0x18] sm:$0xff]
    %v1949 = vsel %vm58, %v1941, 0
    %v1952 = vsel %vm58, %v1942, 0
    %1954 = vmatprep.subr.mxu0 0.0
    %1955 = vmatpush1.msra.mxu0 0.0
    %1956 = vmatprep.subr.mxu0 0.0
    %1957 = vmatpush1.msra.mxu0 0.0
    %1958 = vmatprep.subr.mxu0 0.0
    %1959 = vmatpush1.msra.mxu0 0.0
    %1960 = vmatprep.subr.mxu0 0.0
    %1961 = vmatpush1.msra.mxu0 0.0
    %1962 = vmatprep.subr.mxu0 0.0
    %1963 = vmatpush1.msra.mxu0 0.0
    %1964 = vmatprep.subr.mxu0 0.0
    %1965 = vmatpush1.msra.mxu0 0.0
    %1966 = vmatprep.subr.mxu0 0.0
    %1967 = vmatpush1.msra.mxu0 0.0
    %1968 = vmatprep.subr.mxu0 0.0
    %1969 = vmatpush1.msra.mxu0 0.0
    %1970 = vmatprep.subr.mxu0 0.0
    %1971 = vmatpush1.msra.mxu0 0.0
    %1972 = vmatprep.subr.mxu0 0.0
    %1973 = vmatpush1.msra.mxu0 0.0
    %1974 = vmatprep.subr.mxu0 0.0
    %1975 = vmatpush1.msra.mxu0 0.0
    %1976 = vmatprep.subr.mxu0 0.0
    %1977 = vmatpush1.msra.mxu0 0.0
    %1978 = vmatprep.subr.mxu0 0.0
    %1979 = vmatpush1.msra.mxu0 %v1947
    %1980 = vmatprep.subr.mxu0 0.0
    %1981 = vmatpush1.msra.mxu0 %v1946
    %1982 = vmatprep.subr.mxu0 0.0
    %1983 = vmatpush1.msra.mxu0 %v1945
    %1984 = vmatprep.subr.mxu0 0.0
    %1985 = vmatpush1.msra.mxu0 %v1944
    %1986 = vmatprep.subr.mxu0 0.0
    %1987 = vmatpush2.msra.mxu0 0.0
    %1988 = vmatprep.subr.mxu0 0.0
    %1989 = vmatpush2.msra.mxu0 0.0
    %1990 = vmatprep.subr.mxu0 0.0
    %1991 = vmatpush2.msra.mxu0 0.0
    %1992 = vmatprep.subr.mxu0 0.0
    %1993 = vmatpush2.msra.mxu0 0.0
    %1994 = vmatprep.subr.mxu0 0.0
    %1995 = vmatpush2.msra.mxu0 0.0
    %1996 = vmatprep.subr.mxu0 0.0
    %1997 = vmatpush2.msra.mxu0 0.0
    %1998 = vmatprep.subr.mxu0 0.0
    %1999 = vmatpush2.msra.mxu0 0.0
    %2000 = vmatprep.subr.mxu0 0.0
    %2001 = vmatpush2.msra.mxu0 0.0
    %2002 = vmatprep.subr.mxu0 0.0
    %2003 = vmatpush2.msra.mxu0 0.0
    %2004 = vmatprep.subr.mxu0 0.0
    %2005 = vmatpush2.msra.mxu0 0.0
    %2006 = vmatprep.subr.mxu0 0.0
    %2007 = vmatpush2.msra.mxu0 0.0
    %2008 = vmatprep.subr.mxu0 0.0
    %2009 = vmatpush2.msra.mxu0 0.0
    %2010 = vmatprep.subr.mxu0 0.0
    %2011 = vmatpush2.msra.mxu0 0.0
    %2012 = vmatprep.subr.mxu0 0.0
    %2013 = vmatpush2.msra.mxu0 0.0
    %2014 = vmatprep.subr.mxu0 0.0
    %2015 = vmatpush2.msra.mxu0 0.0
    %2016 = vmatprep.subr.mxu0 0.0
    %2017 = vmatpush2.msra.mxu0 0.0
    %2018 = vmatprep.mubr.f32.mxu0 0.0
    %2019 = vmatmul.mubr.f32.gmra.mxu0 %v1949
    %v2020 = vpop.f32.mrf.mxu0
    %v2021 = vadd.f32 0.0, %v2020
    %v2022 = vpop.f32.mrf.mxu0
    %2023 = vmatprep.mubr.f32.mxu0 0.0
    %2024 = vmatmul.mubr.f32.gmra.mxu0 %v1952
    %v2025 = vpop.f32.mrf.mxu0
    %v2026 = vadd.f32 0.0, %v2025
    %v2027 = vpop.f32.mrf.mxu0
    %2028 = vdwg.mxu0
    %2030 = vrot.lane.b32.xlu0 %v2021, 96
    %v2031 = vpop.permute.xlu0 %2030
    %v2032 = vsel %vm190, %v2021, 0
    %v2034 = vsel %vm190, %v2031, 0
    %2036 = vmatprep.subr.mxu0 0.0
    %2037 = vmatpush1.xpose.msra.mxu0 0.0
    %2038 = vmatprep.subr.mxu0 0.0
    %2039 = vmatpush1.xpose.msra.mxu0 0.0
    %2040 = vmatprep.subr.mxu0 0.0
    %2041 = vmatpush1.xpose.msra.mxu0 0.0
    %2042 = vmatprep.subr.mxu0 0.0
    %2043 = vmatpush1.xpose.msra.mxu0 0.0
    %2044 = vmatprep.subr.mxu0 0.0
    %2045 = vmatpush1.xpose.msra.mxu0 0.0
    %2046 = vmatprep.subr.mxu0 0.0
    %2047 = vmatpush1.xpose.msra.mxu0 0.0
    %2048 = vmatprep.subr.mxu0 0.0
    %2049 = vmatpush1.xpose.msra.mxu0 0.0
    %2050 = vmatprep.subr.mxu0 0.0
    %2051 = vmatpush1.xpose.msra.mxu0 0.0
    %2052 = vmatprep.subr.mxu0 0.0
    %2053 = vmatpush1.xpose.msra.mxu0 0.0
    %2054 = vmatprep.subr.mxu0 0.0
    %2055 = vmatpush1.xpose.msra.mxu0 0.0
    %2056 = vmatprep.subr.mxu0 0.0
    %2057 = vmatpush1.xpose.msra.mxu0 0.0
    %2058 = vmatprep.subr.mxu0 0.0
    %2059 = vmatpush1.xpose.msra.mxu0 0.0
    %2060 = vmatprep.subr.mxu0 0.0
    %2061 = vmatpush1.xpose.msra.mxu0 0.0
    %2062 = vmatprep.subr.mxu0 0.0
    %2063 = vmatpush1.xpose.msra.mxu0 0.0
    %2064 = vmatprep.subr.mxu0 0.0
    %2065 = vmatpush1.xpose.msra.mxu0 0.0
    %2066 = vmatprep.subr.mxu0 0.0
    %2067 = vmatpush1.xpose.msra.mxu0 %v2034
    %2068 = vmatprep.subr.mxu0 0.0
    %2069 = vmatpush2.xpose.msra.mxu0 0.0
    %2070 = vmatprep.subr.mxu0 0.0
    %2071 = vmatpush2.xpose.msra.mxu0 0.0
    %2072 = vmatprep.subr.mxu0 0.0
    %2073 = vmatpush2.xpose.msra.mxu0 0.0
    %2074 = vmatprep.subr.mxu0 0.0
    %2075 = vmatpush2.xpose.msra.mxu0 0.0
    %2076 = vmatprep.subr.mxu0 0.0
    %2077 = vmatpush2.xpose.msra.mxu0 0.0
    %2078 = vmatprep.subr.mxu0 0.0
    %2079 = vmatpush2.xpose.msra.mxu0 0.0
    %2080 = vmatprep.subr.mxu0 0.0
    %2081 = vmatpush2.xpose.msra.mxu0 0.0
    %2082 = vmatprep.subr.mxu0 0.0
    %2083 = vmatpush2.xpose.msra.mxu0 0.0
    %2084 = vmatprep.subr.mxu0 0.0
    %2085 = vmatpush2.xpose.msra.mxu0 0.0
    %2086 = vmatprep.subr.mxu0 0.0
    %2087 = vmatpush2.xpose.msra.mxu0 0.0
    %2088 = vmatprep.subr.mxu0 0.0
    %2089 = vmatpush2.xpose.msra.mxu0 0.0
    %2090 = vmatprep.subr.mxu0 0.0
    %2091 = vmatpush2.xpose.msra.mxu0 0.0
    %2092 = vmatprep.subr.mxu0 0.0
    %2093 = vmatpush2.xpose.msra.mxu0 0.0
    %2094 = vmatprep.subr.mxu0 0.0
    %2095 = vmatpush2.xpose.msra.mxu0 0.0
    %2096 = vmatprep.subr.mxu0 0.0
    %2097 = vmatpush2.xpose.msra.mxu0 0.0
    %2098 = vmatprep.subr.mxu0 0.0
    %2099 = vmatpush2.xpose.msra.mxu0 0.0
    %2100 = vmatprep.mubr.f32.mxu0 0.0
    %2101 = vmatmul.mubr.f32.gmra.mxu0 %v2032
    %v2102 = vpop.f32.mrf.mxu0
    %v2103 = vadd.f32 0.0, %v2102
    %v2104 = vpop.f32.mrf.mxu0
    %2105 = vdwg.mxu0
    %2107 = vrot.lane.b32.xlu0 %v2026, 96
    %v2108 = vpop.permute.xlu0 %2107
    %v2109 = vsel %vm190, %v2026, 0
    %v2111 = vsel %vm190, %v2108, 0
    %2113 = vmatprep.subr.mxu0 0.0
    %2114 = vmatpush1.xpose.msra.mxu0 0.0
    %2115 = vmatprep.subr.mxu0 0.0
    %2116 = vmatpush1.xpose.msra.mxu0 0.0
    %2117 = vmatprep.subr.mxu0 0.0
    %2118 = vmatpush1.xpose.msra.mxu0 0.0
    %2119 = vmatprep.subr.mxu0 0.0
    %2120 = vmatpush1.xpose.msra.mxu0 0.0
    %2121 = vmatprep.subr.mxu0 0.0
    %2122 = vmatpush1.xpose.msra.mxu0 0.0
    %2123 = vmatprep.subr.mxu0 0.0
    %2124 = vmatpush1.xpose.msra.mxu0 0.0
    %2125 = vmatprep.subr.mxu0 0.0
    %2126 = vmatpush1.xpose.msra.mxu0 0.0
    %2127 = vmatprep.subr.mxu0 0.0
    %2128 = vmatpush1.xpose.msra.mxu0 0.0
    %2129 = vmatprep.subr.mxu0 0.0
    %2130 = vmatpush1.xpose.msra.mxu0 0.0
    %2131 = vmatprep.subr.mxu0 0.0
    %2132 = vmatpush1.xpose.msra.mxu0 0.0
    %2133 = vmatprep.subr.mxu0 0.0
    %2134 = vmatpush1.xpose.msra.mxu0 0.0
    %2135 = vmatprep.subr.mxu0 0.0
    %2136 = vmatpush1.xpose.msra.mxu0 0.0
    %2137 = vmatprep.subr.mxu0 0.0
    %2138 = vmatpush1.xpose.msra.mxu0 0.0
    %2139 = vmatprep.subr.mxu0 0.0
    %2140 = vmatpush1.xpose.msra.mxu0 0.0
    %2141 = vmatprep.subr.mxu0 0.0
    %2142 = vmatpush1.xpose.msra.mxu0 0.0
    %2143 = vmatprep.subr.mxu0 0.0
    %2144 = vmatpush1.xpose.msra.mxu0 %v2111
    %2145 = vmatprep.subr.mxu0 0.0
    %2146 = vmatpush2.xpose.msra.mxu0 0.0
    %2147 = vmatprep.subr.mxu0 0.0
    %2148 = vmatpush2.xpose.msra.mxu0 0.0
    %2149 = vmatprep.subr.mxu0 0.0
    %2150 = vmatpush2.xpose.msra.mxu0 0.0
    %2151 = vmatprep.subr.mxu0 0.0
    %2152 = vmatpush2.xpose.msra.mxu0 0.0
    %2153 = vmatprep.subr.mxu0 0.0
    %2154 = vmatpush2.xpose.msra.mxu0 0.0
    %2155 = vmatprep.subr.mxu0 0.0
    %2156 = vmatpush2.xpose.msra.mxu0 0.0
    %2157 = vmatprep.subr.mxu0 0.0
    %2158 = vmatpush2.xpose.msra.mxu0 0.0
    %2159 = vmatprep.subr.mxu0 0.0
    %2160 = vmatpush2.xpose.msra.mxu0 0.0
    %2161 = vmatprep.subr.mxu0 0.0
    %2162 = vmatpush2.xpose.msra.mxu0 0.0
    %2163 = vmatprep.subr.mxu0 0.0
    %2164 = vmatpush2.xpose.msra.mxu0 0.0
    %2165 = vmatprep.subr.mxu0 0.0
    %2166 = vmatpush2.xpose.msra.mxu0 0.0
    %2167 = vmatprep.subr.mxu0 0.0
    %2168 = vmatpush2.xpose.msra.mxu0 0.0
    %2169 = vmatprep.subr.mxu0 0.0
    %2170 = vmatpush2.xpose.msra.mxu0 0.0
    %2171 = vmatprep.subr.mxu0 0.0
    %2172 = vmatpush2.xpose.msra.mxu0 0.0
    %2173 = vmatprep.subr.mxu0 0.0
    %2174 = vmatpush2.xpose.msra.mxu0 0.0
    %2175 = vmatprep.subr.mxu0 0.0
    %2176 = vmatpush2.xpose.msra.mxu0 0.0
    %2177 = vmatprep.mubr.f32.mxu0 0.0
    %2178 = vmatmul.mubr.f32.gmra.mxu0 %v2109
    %v2179 = vpop.f32.mrf.mxu0
    %v2180 = vadd.f32 0.0, %v2179
    %v2181 = vpop.f32.mrf.mxu0
    %2182 = vdwg.mxu0
    %v2183 = vmul.f32 %v2103, 0.35355338
    %v2184 = vmul.f32 %v2180, 0.35355338
    %v2185 = vadd.f32 %v2183, %v55
    %v2186 = vadd.f32 %v2184, %v55
    %v2187 = vsel %vm190, %v2185, -inf
    %2188 = vmax.xlane.f32.xlu0 %v2187
    %v2189 = vpop.xlane.xlu0 %2188
    %v2190 = vsel %vm190, %v2186, -inf
    %2191 = vmax.xlane.f32.xlu0 %v2190
    %v2192 = vpop.xlane.xlu0 %2191
    %v2193 = vsub.f32 %v2185, %v2189
    %v2194 = vsub.f32 %v2186, %v2192
    %v2195 = vmul.f32 %v2193, 1.442695
    %v2196 = vpow.pop %v2195
    %v2197 = vmul.f32 %v2194, 1.442695
    %v2198 = vpow.pop %v2197
    %v2199 = vsel %vm190, %v2196, 0.0
    %2200 = vadd.xlane.f32.xlu0 %v2199
    %v2201 = vpop.xlane.xlu0 %2200
    %v2202 = vsel %vm190, %v2198, 0.0
    %2203 = vadd.xlane.f32.xlu0 %v2202
    %v2204 = vpop.xlane.xlu0 %2203
    %v2205 = vrcp.pop %v2201
    %v2206 = vrcp.pop %v2204
    %v2207 = vmul.f32 %v2196, %v2205
    %v2208 = vmul.f32 %v2198, %v2206
    %2209 = vrot.lane.b32.xlu0 %v2021, 64
    %v2210 = vpop.permute.xlu0 %2209
    %v2213 = vsel %vm190, %v2207, 0
    %2215 = vmatprep.subr.mxu0 0.0
    %2216 = vmatpush1.msra.mxu0 0.0
    %2217 = vmatprep.subr.mxu0 0.0
    %2218 = vmatpush1.msra.mxu0 0.0
    %2219 = vmatprep.subr.mxu0 0.0
    %2220 = vmatpush1.msra.mxu0 0.0
    %2221 = vmatprep.subr.mxu0 0.0
    %2222 = vmatpush1.msra.mxu0 0.0
    %2223 = vmatprep.subr.mxu0 0.0
    %2224 = vmatpush1.msra.mxu0 0.0
    %2225 = vmatprep.subr.mxu0 0.0
    %2226 = vmatpush1.msra.mxu0 0.0
    %2227 = vmatprep.subr.mxu0 0.0
    %2228 = vmatpush1.msra.mxu0 0.0
    %2229 = vmatprep.subr.mxu0 0.0
    %2230 = vmatpush1.msra.mxu0 0.0
    %2231 = vmatprep.subr.mxu0 0.0
    %2232 = vmatpush1.msra.mxu0 0.0
    %2233 = vmatprep.subr.mxu0 0.0
    %2234 = vmatpush1.msra.mxu0 0.0
    %2235 = vmatprep.subr.mxu0 0.0
    %2236 = vmatpush1.msra.mxu0 0.0
    %2237 = vmatprep.subr.mxu0 0.0
    %2238 = vmatpush1.msra.mxu0 0.0
    %2239 = vmatprep.subr.mxu0 0.0
    %2240 = vmatpush1.msra.mxu0 0.0
    %2241 = vmatprep.subr.mxu0 0.0
    %2242 = vmatpush1.msra.mxu0 0.0
    %2243 = vmatprep.subr.mxu0 0.0
    %2244 = vmatpush1.msra.mxu0 0.0
    %2245 = vmatprep.subr.mxu0 0.0
    %2246 = vmatpush1.msra.mxu0 %v2210
    %2247 = vmatprep.subr.mxu0 0.0
    %2248 = vmatpush2.msra.mxu0 0.0
    %2249 = vmatprep.subr.mxu0 0.0
    %2250 = vmatpush2.msra.mxu0 0.0
    %2251 = vmatprep.subr.mxu0 0.0
    %2252 = vmatpush2.msra.mxu0 0.0
    %2253 = vmatprep.subr.mxu0 0.0
    %2254 = vmatpush2.msra.mxu0 0.0
    %2255 = vmatprep.subr.mxu0 0.0
    %2256 = vmatpush2.msra.mxu0 0.0
    %2257 = vmatprep.subr.mxu0 0.0
    %2258 = vmatpush2.msra.mxu0 0.0
    %2259 = vmatprep.subr.mxu0 0.0
    %2260 = vmatpush2.msra.mxu0 0.0
    %2261 = vmatprep.subr.mxu0 0.0
    %2262 = vmatpush2.msra.mxu0 0.0
    %2263 = vmatprep.subr.mxu0 0.0
    %2264 = vmatpush2.msra.mxu0 0.0
    %2265 = vmatprep.subr.mxu0 0.0
    %2266 = vmatpush2.msra.mxu0 0.0
    %2267 = vmatprep.subr.mxu0 0.0
    %2268 = vmatpush2.msra.mxu0 0.0
    %2269 = vmatprep.subr.mxu0 0.0
    %2270 = vmatpush2.msra.mxu0 0.0
    %2271 = vmatprep.subr.mxu0 0.0
    %2272 = vmatpush2.msra.mxu0 0.0
    %2273 = vmatprep.subr.mxu0 0.0
    %2274 = vmatpush2.msra.mxu0 0.0
    %2275 = vmatprep.subr.mxu0 0.0
    %2276 = vmatpush2.msra.mxu0 0.0
    %2277 = vmatprep.subr.mxu0 0.0
    %2278 = vmatpush2.msra.mxu0 0.0
    %2279 = vmatprep.mubr.f32.mxu0 0.0
    %2280 = vmatmul.mubr.f32.gmra.mxu0 %v2213
    %v2281 = vpop.f32.mrf.mxu0
    %v2282 = vadd.f32 0.0, %v2281
    %v2283 = vpop.f32.mrf.mxu0
    %2284 = vdwg.mxu0
    %2285 = vrot.lane.b32.xlu0 %v2026, 64
    %v2286 = vpop.permute.xlu0 %2285
    %v2289 = vsel %vm190, %v2208, 0
    %2291 = vmatprep.subr.mxu0 0.0
    %2292 = vmatpush1.msra.mxu0 0.0
    %2293 = vmatprep.subr.mxu0 0.0
    %2294 = vmatpush1.msra.mxu0 0.0
    %2295 = vmatprep.subr.mxu0 0.0
    %2296 = vmatpush1.msra.mxu0 0.0
    %2297 = vmatprep.subr.mxu0 0.0
    %2298 = vmatpush1.msra.mxu0 0.0
    %2299 = vmatprep.subr.mxu0 0.0
    %2300 = vmatpush1.msra.mxu0 0.0
    %2301 = vmatprep.subr.mxu0 0.0
    %2302 = vmatpush1.msra.mxu0 0.0
    %2303 = vmatprep.subr.mxu0 0.0
    %2304 = vmatpush1.msra.mxu0 0.0
    %2305 = vmatprep.subr.mxu0 0.0
    %2306 = vmatpush1.msra.mxu0 0.0
    %2307 = vmatprep.subr.mxu0 0.0
    %2308 = vmatpush1.msra.mxu0 0.0
    %2309 = vmatprep.subr.mxu0 0.0
    %2310 = vmatpush1.msra.mxu0 0.0
    %2311 = vmatprep.subr.mxu0 0.0
    %2312 = vmatpush1.msra.mxu0 0.0
    %2313 = vmatprep.subr.mxu0 0.0
    %2314 = vmatpush1.msra.mxu0 0.0
    %2315 = vmatprep.subr.mxu0 0.0
    %2316 = vmatpush1.msra.mxu0 0.0
    %2317 = vmatprep.subr.mxu0 0.0
    %2318 = vmatpush1.msra.mxu0 0.0
    %2319 = vmatprep.subr.mxu0 0.0
    %2320 = vmatpush1.msra.mxu0 0.0
    %2321 = vmatprep.subr.mxu0 0.0
    %2322 = vmatpush1.msra.mxu0 %v2286
    %2323 = vmatprep.subr.mxu0 0.0
    %2324 = vmatpush2.msra.mxu0 0.0
    %2325 = vmatprep.subr.mxu0 0.0
    %2326 = vmatpush2.msra.mxu0 0.0
    %2327 = vmatprep.subr.mxu0 0.0
    %2328 = vmatpush2.msra.mxu0 0.0
    %2329 = vmatprep.subr.mxu0 0.0
    %2330 = vmatpush2.msra.mxu0 0.0
    %2331 = vmatprep.subr.mxu0 0.0
    %2332 = vmatpush2.msra.mxu0 0.0
    %2333 = vmatprep.subr.mxu0 0.0
    %2334 = vmatpush2.msra.mxu0 0.0
    %2335 = vmatprep.subr.mxu0 0.0
    %2336 = vmatpush2.msra.mxu0 0.0
    %2337 = vmatprep.subr.mxu0 0.0
    %2338 = vmatpush2.msra.mxu0 0.0
    %2339 = vmatprep.subr.mxu0 0.0
    %2340 = vmatpush2.msra.mxu0 0.0
    %2341 = vmatprep.subr.mxu0 0.0
    %2342 = vmatpush2.msra.mxu0 0.0
    %2343 = vmatprep.subr.mxu0 0.0
    %2344 = vmatpush2.msra.mxu0 0.0
    %2345 = vmatprep.subr.mxu0 0.0
    %2346 = vmatpush2.msra.mxu0 0.0
    %2347 = vmatprep.subr.mxu0 0.0
    %2348 = vmatpush2.msra.mxu0 0.0
    %2349 = vmatprep.subr.mxu0 0.0
    %2350 = vmatpush2.msra.mxu0 0.0
    %2351 = vmatprep.subr.mxu0 0.0
    %2352 = vmatpush2.msra.mxu0 0.0
    %2353 = vmatprep.subr.mxu0 0.0
    %2354 = vmatpush2.msra.mxu0 0.0
    %2355 = vmatprep.mubr.f32.mxu0 0.0
    %2356 = vmatmul.mubr.f32.gmra.mxu0 %v2289
    %v2357 = vpop.f32.mrf.mxu0
    %v2358 = vadd.f32 0.0, %v2357
    %v2359 = vpop.f32.mrf.mxu0
    %2360 = vdwg.mxu0
    %2361 = vrot.lane.b32.xlu0 %v2021, 120
    %v2362 = vpop.permute.xlu0 %2361
    %2363 = vrot.lane.b32.xlu0 %v2021, 88
    %v2364 = vpop.permute.xlu0 %2363
    %v2365 = vsel %vm190, %v2362, 0
    %v2367 = vsel %vm190, %v2364, 0
    %2369 = vmatprep.subr.mxu0 0.0
    %2370 = vmatpush1.xpose.msra.mxu0 0.0
    %2371 = vmatprep.subr.mxu0 0.0
    %2372 = vmatpush1.xpose.msra.mxu0 0.0
    %2373 = vmatprep.subr.mxu0 0.0
    %2374 = vmatpush1.xpose.msra.mxu0 0.0
    %2375 = vmatprep.subr.mxu0 0.0
    %2376 = vmatpush1.xpose.msra.mxu0 0.0
    %2377 = vmatprep.subr.mxu0 0.0
    %2378 = vmatpush1.xpose.msra.mxu0 0.0
    %2379 = vmatprep.subr.mxu0 0.0
    %2380 = vmatpush1.xpose.msra.mxu0 0.0
    %2381 = vmatprep.subr.mxu0 0.0
    %2382 = vmatpush1.xpose.msra.mxu0 0.0
    %2383 = vmatprep.subr.mxu0 0.0
    %2384 = vmatpush1.xpose.msra.mxu0 0.0
    %2385 = vmatprep.subr.mxu0 0.0
    %2386 = vmatpush1.xpose.msra.mxu0 0.0
    %2387 = vmatprep.subr.mxu0 0.0
    %2388 = vmatpush1.xpose.msra.mxu0 0.0
    %2389 = vmatprep.subr.mxu0 0.0
    %2390 = vmatpush1.xpose.msra.mxu0 0.0
    %2391 = vmatprep.subr.mxu0 0.0
    %2392 = vmatpush1.xpose.msra.mxu0 0.0
    %2393 = vmatprep.subr.mxu0 0.0
    %2394 = vmatpush1.xpose.msra.mxu0 0.0
    %2395 = vmatprep.subr.mxu0 0.0
    %2396 = vmatpush1.xpose.msra.mxu0 0.0
    %2397 = vmatprep.subr.mxu0 0.0
    %2398 = vmatpush1.xpose.msra.mxu0 0.0
    %2399 = vmatprep.subr.mxu0 0.0
    %2400 = vmatpush1.xpose.msra.mxu0 %v2367
    %2401 = vmatprep.subr.mxu0 0.0
    %2402 = vmatpush2.xpose.msra.mxu0 0.0
    %2403 = vmatprep.subr.mxu0 0.0
    %2404 = vmatpush2.xpose.msra.mxu0 0.0
    %2405 = vmatprep.subr.mxu0 0.0
    %2406 = vmatpush2.xpose.msra.mxu0 0.0
    %2407 = vmatprep.subr.mxu0 0.0
    %2408 = vmatpush2.xpose.msra.mxu0 0.0
    %2409 = vmatprep.subr.mxu0 0.0
    %2410 = vmatpush2.xpose.msra.mxu0 0.0
    %2411 = vmatprep.subr.mxu0 0.0
    %2412 = vmatpush2.xpose.msra.mxu0 0.0
    %2413 = vmatprep.subr.mxu0 0.0
    %2414 = vmatpush2.xpose.msra.mxu0 0.0
    %2415 = vmatprep.subr.mxu0 0.0
    %2416 = vmatpush2.xpose.msra.mxu0 0.0
    %2417 = vmatprep.subr.mxu0 0.0
    %2418 = vmatpush2.xpose.msra.mxu0 0.0
    %2419 = vmatprep.subr.mxu0 0.0
    %2420 = vmatpush2.xpose.msra.mxu0 0.0
    %2421 = vmatprep.subr.mxu0 0.0
    %2422 = vmatpush2.xpose.msra.mxu0 0.0
    %2423 = vmatprep.subr.mxu0 0.0
    %2424 = vmatpush2.xpose.msra.mxu0 0.0
    %2425 = vmatprep.subr.mxu0 0.0
    %2426 = vmatpush2.xpose.msra.mxu0 0.0
    %2427 = vmatprep.subr.mxu0 0.0
    %2428 = vmatpush2.xpose.msra.mxu0 0.0
    %2429 = vmatprep.subr.mxu0 0.0
    %2430 = vmatpush2.xpose.msra.mxu0 0.0
    %2431 = vmatprep.subr.mxu0 0.0
    %2432 = vmatpush2.xpose.msra.mxu0 0.0
    %2433 = vmatprep.mubr.f32.mxu0 0.0
    %2434 = vmatmul.mubr.f32.gmra.mxu0 %v2365
    %v2435 = vpop.f32.mrf.mxu0
    %v2436 = vadd.f32 0.0, %v2435
    %v2437 = vpop.f32.mrf.mxu0
    %2438 = vdwg.mxu0
    %2439 = vrot.lane.b32.xlu0 %v2026, 120
    %v2440 = vpop.permute.xlu0 %2439
    %2441 = vrot.lane.b32.xlu0 %v2026, 88
    %v2442 = vpop.permute.xlu0 %2441
    %v2443 = vsel %vm190, %v2440, 0
    %v2445 = vsel %vm190, %v2442, 0
    %2447 = vmatprep.subr.mxu0 0.0
    %2448 = vmatpush1.xpose.msra.mxu0 0.0
    %2449 = vmatprep.subr.mxu0 0.0
    %2450 = vmatpush1.xpose.msra.mxu0 0.0
    %2451 = vmatprep.subr.mxu0 0.0
    %2452 = vmatpush1.xpose.msra.mxu0 0.0
    %2453 = vmatprep.subr.mxu0 0.0
    %2454 = vmatpush1.xpose.msra.mxu0 0.0
    %2455 = vmatprep.subr.mxu0 0.0
    %2456 = vmatpush1.xpose.msra.mxu0 0.0
    %2457 = vmatprep.subr.mxu0 0.0
    %2458 = vmatpush1.xpose.msra.mxu0 0.0
    %2459 = vmatprep.subr.mxu0 0.0
    %2460 = vmatpush1.xpose.msra.mxu0 0.0
    %2461 = vmatprep.subr.mxu0 0.0
    %2462 = vmatpush1.xpose.msra.mxu0 0.0
    %2463 = vmatprep.subr.mxu0 0.0
    %2464 = vmatpush1.xpose.msra.mxu0 0.0
    %2465 = vmatprep.subr.mxu0 0.0
    %2466 = vmatpush1.xpose.msra.mxu0 0.0
    %2467 = vmatprep.subr.mxu0 0.0
    %2468 = vmatpush1.xpose.msra.mxu0 0.0
    %2469 = vmatprep.subr.mxu0 0.0
    %2470 = vmatpush1.xpose.msra.mxu0 0.0
    %2471 = vmatprep.subr.mxu0 0.0
    %2472 = vmatpush1.xpose.msra.mxu0 0.0
    %2473 = vmatprep.subr.mxu0 0.0
    %2474 = vmatpush1.xpose.msra.mxu0 0.0
    %2475 = vmatprep.subr.mxu0 0.0
    %2476 = vmatpush1.xpose.msra.mxu0 0.0
    %2477 = vmatprep.subr.mxu0 0.0
    %2478 = vmatpush1.xpose.msra.mxu0 %v2445
    %2479 = vmatprep.subr.mxu0 0.0
    %2480 = vmatpush2.xpose.msra.mxu0 0.0
    %2481 = vmatprep.subr.mxu0 0.0
    %2482 = vmatpush2.xpose.msra.mxu0 0.0
    %2483 = vmatprep.subr.mxu0 0.0
    %2484 = vmatpush2.xpose.msra.mxu0 0.0
    %2485 = vmatprep.subr.mxu0 0.0
    %2486 = vmatpush2.xpose.msra.mxu0 0.0
    %2487 = vmatprep.subr.mxu0 0.0
    %2488 = vmatpush2.xpose.msra.mxu0 0.0
    %2489 = vmatprep.subr.mxu0 0.0
    %2490 = vmatpush2.xpose.msra.mxu0 0.0
    %2491 = vmatprep.subr.mxu0 0.0
    %2492 = vmatpush2.xpose.msra.mxu0 0.0
    %2493 = vmatprep.subr.mxu0 0.0
    %2494 = vmatpush2.xpose.msra.mxu0 0.0
    %2495 = vmatprep.subr.mxu0 0.0
    %2496 = vmatpush2.xpose.msra.mxu0 0.0
    %2497 = vmatprep.subr.mxu0 0.0
    %2498 = vmatpush2.xpose.msra.mxu0 0.0
    %2499 = vmatprep.subr.mxu0 0.0
    %2500 = vmatpush2.xpose.msra.mxu0 0.0
    %2501 = vmatprep.subr.mxu0 0.0
    %2502 = vmatpush2.xpose.msra.mxu0 0.0
    %2503 = vmatprep.subr.mxu0 0.0
    %2504 = vmatpush2.xpose.msra.mxu0 0.0
    %2505 = vmatprep.subr.mxu0 0.0
    %2506 = vmatpush2.xpose.msra.mxu0 0.0
    %2507 = vmatprep.subr.mxu0 0.0
    %2508 = vmatpush2.xpose.msra.mxu0 0.0
    %2509 = vmatprep.subr.mxu0 0.0
    %2510 = vmatpush2.xpose.msra.mxu0 0.0
    %2511 = vmatprep.mubr.f32.mxu0 0.0
    %2512 = vmatmul.mubr.f32.gmra.mxu0 %v2443
    %v2513 = vpop.f32.mrf.mxu0
    %v2514 = vadd.f32 0.0, %v2513
    %v2515 = vpop.f32.mrf.mxu0
    %2516 = vdwg.mxu0
    %v2517 = vmul.f32 %v2436, 0.35355338
    %v2518 = vmul.f32 %v2514, 0.35355338
    %v2519 = vadd.f32 %v2517, %v55
    %v2520 = vadd.f32 %v2518, %v55
    %v2521 = vsel %vm190, %v2519, -inf
    %2522 = vmax.xlane.f32.xlu0 %v2521
    %v2523 = vpop.xlane.xlu0 %2522
    %v2524 = vsel %vm190, %v2520, -inf
    %2525 = vmax.xlane.f32.xlu0 %v2524
    %v2526 = vpop.xlane.xlu0 %2525
    %v2527 = vsub.f32 %v2519, %v2523
    %v2528 = vsub.f32 %v2520, %v2526
    %v2529 = vmul.f32 %v2527, 1.442695
    %v2530 = vpow.pop %v2529
    %v2531 = vmul.f32 %v2528, 1.442695
    %v2532 = vpow.pop %v2531
    %v2533 = vsel %vm190, %v2530, 0.0
    %2534 = vadd.xlane.f32.xlu0 %v2533
    %v2535 = vpop.xlane.xlu0 %2534
    %v2536 = vsel %vm190, %v2532, 0.0
    %2537 = vadd.xlane.f32.xlu0 %v2536
    %v2538 = vpop.xlane.xlu0 %2537
    %v2539 = vrcp.pop %v2535
    %v2540 = vrcp.pop %v2538
    %v2541 = vmul.f32 %v2530, %v2539
    %v2542 = vmul.f32 %v2532, %v2540
    %2543 = vrot.lane.b32.xlu0 %v2021, 56
    %v2544 = vpop.permute.xlu0 %2543
    %v2547 = vsel %vm190, %v2541, 0
    %2549 = vmatprep.subr.mxu0 0.0
    %2550 = vmatpush1.msra.mxu0 0.0
    %2551 = vmatprep.subr.mxu0 0.0
    %2552 = vmatpush1.msra.mxu0 0.0
    %2553 = vmatprep.subr.mxu0 0.0
    %2554 = vmatpush1.msra.mxu0 0.0
    %2555 = vmatprep.subr.mxu0 0.0
    %2556 = vmatpush1.msra.mxu0 0.0
    %2557 = vmatprep.subr.mxu0 0.0
    %2558 = vmatpush1.msra.mxu0 0.0
    %2559 = vmatprep.subr.mxu0 0.0
    %2560 = vmatpush1.msra.mxu0 0.0
    %2561 = vmatprep.subr.mxu0 0.0
    %2562 = vmatpush1.msra.mxu0 0.0
    %2563 = vmatprep.subr.mxu0 0.0
    %2564 = vmatpush1.msra.mxu0 0.0
    %2565 = vmatprep.subr.mxu0 0.0
    %2566 = vmatpush1.msra.mxu0 0.0
    %2567 = vmatprep.subr.mxu0 0.0
    %2568 = vmatpush1.msra.mxu0 0.0
    %2569 = vmatprep.subr.mxu0 0.0
    %2570 = vmatpush1.msra.mxu0 0.0
    %2571 = vmatprep.subr.mxu0 0.0
    %2572 = vmatpush1.msra.mxu0 0.0
    %2573 = vmatprep.subr.mxu0 0.0
    %2574 = vmatpush1.msra.mxu0 0.0
    %2575 = vmatprep.subr.mxu0 0.0
    %2576 = vmatpush1.msra.mxu0 0.0
    %2577 = vmatprep.subr.mxu0 0.0
    %2578 = vmatpush1.msra.mxu0 0.0
    %2579 = vmatprep.subr.mxu0 0.0
    %2580 = vmatpush1.msra.mxu0 %v2544
    %2581 = vmatprep.subr.mxu0 0.0
    %2582 = vmatpush2.msra.mxu0 0.0
    %2583 = vmatprep.subr.mxu0 0.0
    %2584 = vmatpush2.msra.mxu0 0.0
    %2585 = vmatprep.subr.mxu0 0.0
    %2586 = vmatpush2.msra.mxu0 0.0
    %2587 = vmatprep.subr.mxu0 0.0
    %2588 = vmatpush2.msra.mxu0 0.0
    %2589 = vmatprep.subr.mxu0 0.0
    %2590 = vmatpush2.msra.mxu0 0.0
    %2591 = vmatprep.subr.mxu0 0.0
    %2592 = vmatpush2.msra.mxu0 0.0
    %2593 = vmatprep.subr.mxu0 0.0
    %2594 = vmatpush2.msra.mxu0 0.0
    %2595 = vmatprep.subr.mxu0 0.0
    %2596 = vmatpush2.msra.mxu0 0.0
    %2597 = vmatprep.subr.mxu0 0.0
    %2598 = vmatpush2.msra.mxu0 0.0
    %2599 = vmatprep.subr.mxu0 0.0
    %2600 = vmatpush2.msra.mxu0 0.0
    %2601 = vmatprep.subr.mxu0 0.0
    %2602 = vmatpush2.msra.mxu0 0.0
    %2603 = vmatprep.subr.mxu0 0.0
    %2604 = vmatpush2.msra.mxu0 0.0
    %2605 = vmatprep.subr.mxu0 0.0
    %2606 = vmatpush2.msra.mxu0 0.0
    %2607 = vmatprep.subr.mxu0 0.0
    %2608 = vmatpush2.msra.mxu0 0.0
    %2609 = vmatprep.subr.mxu0 0.0
    %2610 = vmatpush2.msra.mxu0 0.0
    %2611 = vmatprep.subr.mxu0 0.0
    %2612 = vmatpush2.msra.mxu0 0.0
    %2613 = vmatprep.mubr.f32.mxu0 0.0
    %2614 = vmatmul.mubr.f32.gmra.mxu0 %v2547
    %v2615 = vpop.f32.mrf.mxu0
    %v2616 = vadd.f32 0.0, %v2615
    %v2617 = vpop.f32.mrf.mxu0
    %2618 = vdwg.mxu0
    %2619 = vrot.lane.b32.xlu0 %v2026, 56
    %v2620 = vpop.permute.xlu0 %2619
    %v2623 = vsel %vm190, %v2542, 0
    %2625 = vmatprep.subr.mxu0 0.0
    %2626 = vmatpush1.msra.mxu0 0.0
    %2627 = vmatprep.subr.mxu0 0.0
    %2628 = vmatpush1.msra.mxu0 0.0
    %2629 = vmatprep.subr.mxu0 0.0
    %2630 = vmatpush1.msra.mxu0 0.0
    %2631 = vmatprep.subr.mxu0 0.0
    %2632 = vmatpush1.msra.mxu0 0.0
    %2633 = vmatprep.subr.mxu0 0.0
    %2634 = vmatpush1.msra.mxu0 0.0
    %2635 = vmatprep.subr.mxu0 0.0
    %2636 = vmatpush1.msra.mxu0 0.0
    %2637 = vmatprep.subr.mxu0 0.0
    %2638 = vmatpush1.msra.mxu0 0.0
    %2639 = vmatprep.subr.mxu0 0.0
    %2640 = vmatpush1.msra.mxu0 0.0
    %2641 = vmatprep.subr.mxu0 0.0
    %2642 = vmatpush1.msra.mxu0 0.0
    %2643 = vmatprep.subr.mxu0 0.0
    %2644 = vmatpush1.msra.mxu0 0.0
    %2645 = vmatprep.subr.mxu0 0.0
    %2646 = vmatpush1.msra.mxu0 0.0
    %2647 = vmatprep.subr.mxu0 0.0
    %2648 = vmatpush1.msra.mxu0 0.0
    %2649 = vmatprep.subr.mxu0 0.0
    %2650 = vmatpush1.msra.mxu0 0.0
    %2651 = vmatprep.subr.mxu0 0.0
    %2652 = vmatpush1.msra.mxu0 0.0
    %2653 = vmatprep.subr.mxu0 0.0
    %2654 = vmatpush1.msra.mxu0 0.0
    %2655 = vmatprep.subr.mxu0 0.0
    %2656 = vmatpush1.msra.mxu0 %v2620
    %2657 = vmatprep.subr.mxu0 0.0
    %2658 = vmatpush2.msra.mxu0 0.0
    %2659 = vmatprep.subr.mxu0 0.0
    %2660 = vmatpush2.msra.mxu0 0.0
    %2661 = vmatprep.subr.mxu0 0.0
    %2662 = vmatpush2.msra.mxu0 0.0
    %2663 = vmatprep.subr.mxu0 0.0
    %2664 = vmatpush2.msra.mxu0 0.0
    %2665 = vmatprep.subr.mxu0 0.0
    %2666 = vmatpush2.msra.mxu0 0.0
    %2667 = vmatprep.subr.mxu0 0.0
    %2668 = vmatpush2.msra.mxu0 0.0
    %2669 = vmatprep.subr.mxu0 0.0
    %2670 = vmatpush2.msra.mxu0 0.0
    %2671 = vmatprep.subr.mxu0 0.0
    %2672 = vmatpush2.msra.mxu0 0.0
    %2673 = vmatprep.subr.mxu0 0.0
    %2674 = vmatpush2.msra.mxu0 0.0
    %2675 = vmatprep.subr.mxu0 0.0
    %2676 = vmatpush2.msra.mxu0 0.0
    %2677 = vmatprep.subr.mxu0 0.0
    %2678 = vmatpush2.msra.mxu0 0.0
    %2679 = vmatprep.subr.mxu0 0.0
    %2680 = vmatpush2.msra.mxu0 0.0
    %2681 = vmatprep.subr.mxu0 0.0
    %2682 = vmatpush2.msra.mxu0 0.0
    %2683 = vmatprep.subr.mxu0 0.0
    %2684 = vmatpush2.msra.mxu0 0.0
    %2685 = vmatprep.subr.mxu0 0.0
    %2686 = vmatpush2.msra.mxu0 0.0
    %2687 = vmatprep.subr.mxu0 0.0
    %2688 = vmatpush2.msra.mxu0 0.0
    %2689 = vmatprep.mubr.f32.mxu0 0.0
    %2690 = vmatmul.mubr.f32.gmra.mxu0 %v2623
    %v2691 = vpop.f32.mrf.mxu0
    %v2692 = vadd.f32 0.0, %v2691
    %v2693 = vpop.f32.mrf.mxu0
    %2694 = vdwg.mxu0
    %2695 = vrot.lane.b32.xlu0 %v2021, 112
    %v2696 = vpop.permute.xlu0 %2695
    %2697 = vrot.lane.b32.xlu0 %v2021, 80
    %v2698 = vpop.permute.xlu0 %2697
    %v2699 = vsel %vm190, %v2696, 0
    %v2701 = vsel %vm190, %v2698, 0
    %2703 = vmatprep.subr.mxu0 0.0
    %2704 = vmatpush1.xpose.msra.mxu0 0.0
    %2705 = vmatprep.subr.mxu0 0.0
    %2706 = vmatpush1.xpose.msra.mxu0 0.0
    %2707 = vmatprep.subr.mxu0 0.0
    %2708 = vmatpush1.xpose.msra.mxu0 0.0
    %2709 = vmatprep.subr.mxu0 0.0
    %2710 = vmatpush1.xpose.msra.mxu0 0.0
    %2711 = vmatprep.subr.mxu0 0.0
    %2712 = vmatpush1.xpose.msra.mxu0 0.0
    %2713 = vmatprep.subr.mxu0 0.0
    %2714 = vmatpush1.xpose.msra.mxu0 0.0
    %2715 = vmatprep.subr.mxu0 0.0
    %2716 = vmatpush1.xpose.msra.mxu0 0.0
    %2717 = vmatprep.subr.mxu0 0.0
    %2718 = vmatpush1.xpose.msra.mxu0 0.0
    %2719 = vmatprep.subr.mxu0 0.0
    %2720 = vmatpush1.xpose.msra.mxu0 0.0
    %2721 = vmatprep.subr.mxu0 0.0
    %2722 = vmatpush1.xpose.msra.mxu0 0.0
    %2723 = vmatprep.subr.mxu0 0.0
    %2724 = vmatpush1.xpose.msra.mxu0 0.0
    %2725 = vmatprep.subr.mxu0 0.0
    %2726 = vmatpush1.xpose.msra.mxu0 0.0
    %2727 = vmatprep.subr.mxu0 0.0
    %2728 = vmatpush1.xpose.msra.mxu0 0.0
    %2729 = vmatprep.subr.mxu0 0.0
    %2730 = vmatpush1.xpose.msra.mxu0 0.0
    %2731 = vmatprep.subr.mxu0 0.0
    %2732 = vmatpush1.xpose.msra.mxu0 0.0
    %2733 = vmatprep.subr.mxu0 0.0
    %2734 = vmatpush1.xpose.msra.mxu0 %v2701
    %2735 = vmatprep.subr.mxu0 0.0
    %2736 = vmatpush2.xpose.msra.mxu0 0.0
    %2737 = vmatprep.subr.mxu0 0.0
    %2738 = vmatpush2.xpose.msra.mxu0 0.0
    %2739 = vmatprep.subr.mxu0 0.0
    %2740 = vmatpush2.xpose.msra.mxu0 0.0
    %2741 = vmatprep.subr.mxu0 0.0
    %2742 = vmatpush2.xpose.msra.mxu0 0.0
    %2743 = vmatprep.subr.mxu0 0.0
    %2744 = vmatpush2.xpose.msra.mxu0 0.0
    %2745 = vmatprep.subr.mxu0 0.0
    %2746 = vmatpush2.xpose.msra.mxu0 0.0
    %2747 = vmatprep.subr.mxu0 0.0
    %2748 = vmatpush2.xpose.msra.mxu0 0.0
    %2749 = vmatprep.subr.mxu0 0.0
    %2750 = vmatpush2.xpose.msra.mxu0 0.0
    %2751 = vmatprep.subr.mxu0 0.0
    %2752 = vmatpush2.xpose.msra.mxu0 0.0
    %2753 = vmatprep.subr.mxu0 0.0
    %2754 = vmatpush2.xpose.msra.mxu0 0.0
    %2755 = vmatprep.subr.mxu0 0.0
    %2756 = vmatpush2.xpose.msra.mxu0 0.0
    %2757 = vmatprep.subr.mxu0 0.0
    %2758 = vmatpush2.xpose.msra.mxu0 0.0
    %2759 = vmatprep.subr.mxu0 0.0
    %2760 = vmatpush2.xpose.msra.mxu0 0.0
    %2761 = vmatprep.subr.mxu0 0.0
    %2762 = vmatpush2.xpose.msra.mxu0 0.0
    %2763 = vmatprep.subr.mxu0 0.0
    %2764 = vmatpush2.xpose.msra.mxu0 0.0
    %2765 = vmatprep.subr.mxu0 0.0
    %2766 = vmatpush2.xpose.msra.mxu0 0.0
    %2767 = vmatprep.mubr.f32.mxu0 0.0
    %2768 = vmatmul.mubr.f32.gmra.mxu0 %v2699
    %v2769 = vpop.f32.mrf.mxu0
    %v2770 = vadd.f32 0.0, %v2769
    %v2771 = vpop.f32.mrf.mxu0
    %2772 = vdwg.mxu0
    %2773 = vrot.lane.b32.xlu0 %v2026, 112
    %v2774 = vpop.permute.xlu0 %2773
    %2775 = vrot.lane.b32.xlu0 %v2026, 80
    %v2776 = vpop.permute.xlu0 %2775
    %v2777 = vsel %vm190, %v2774, 0
    %v2779 = vsel %vm190, %v2776, 0
    %2781 = vmatprep.subr.mxu0 0.0
    %2782 = vmatpush1.xpose.msra.mxu0 0.0
    %2783 = vmatprep.subr.mxu0 0.0
    %2784 = vmatpush1.xpose.msra.mxu0 0.0
    %2785 = vmatprep.subr.mxu0 0.0
    %2786 = vmatpush1.xpose.msra.mxu0 0.0
    %2787 = vmatprep.subr.mxu0 0.0
    %2788 = vmatpush1.xpose.msra.mxu0 0.0
    %2789 = vmatprep.subr.mxu0 0.0
    %2790 = vmatpush1.xpose.msra.mxu0 0.0
    %2791 = vmatprep.subr.mxu0 0.0
    %2792 = vmatpush1.xpose.msra.mxu0 0.0
    %2793 = vmatprep.subr.mxu0 0.0
    %2794 = vmatpush1.xpose.msra.mxu0 0.0
    %2795 = vmatprep.subr.mxu0 0.0
    %2796 = vmatpush1.xpose.msra.mxu0 0.0
    %2797 = vmatprep.subr.mxu0 0.0
    %2798 = vmatpush1.xpose.msra.mxu0 0.0
    %2799 = vmatprep.subr.mxu0 0.0
    %2800 = vmatpush1.xpose.msra.mxu0 0.0
    %2801 = vmatprep.subr.mxu0 0.0
    %2802 = vmatpush1.xpose.msra.mxu0 0.0
    %2803 = vmatprep.subr.mxu0 0.0
    %2804 = vmatpush1.xpose.msra.mxu0 0.0
    %2805 = vmatprep.subr.mxu0 0.0
    %2806 = vmatpush1.xpose.msra.mxu0 0.0
    %2807 = vmatprep.subr.mxu0 0.0
    %2808 = vmatpush1.xpose.msra.mxu0 0.0
    %2809 = vmatprep.subr.mxu0 0.0
    %2810 = vmatpush1.xpose.msra.mxu0 0.0
    %2811 = vmatprep.subr.mxu0 0.0
    %2812 = vmatpush1.xpose.msra.mxu0 %v2779
    %2813 = vmatprep.subr.mxu0 0.0
    %2814 = vmatpush2.xpose.msra.mxu0 0.0
    %2815 = vmatprep.subr.mxu0 0.0
    %2816 = vmatpush2.xpose.msra.mxu0 0.0
    %2817 = vmatprep.subr.mxu0 0.0
    %2818 = vmatpush2.xpose.msra.mxu0 0.0
    %2819 = vmatprep.subr.mxu0 0.0
    %2820 = vmatpush2.xpose.msra.mxu0 0.0
    %2821 = vmatprep.subr.mxu0 0.0
    %2822 = vmatpush2.xpose.msra.mxu0 0.0
    %2823 = vmatprep.subr.mxu0 0.0
    %2824 = vmatpush2.xpose.msra.mxu0 0.0
    %2825 = vmatprep.subr.mxu0 0.0
    %2826 = vmatpush2.xpose.msra.mxu0 0.0
    %2827 = vmatprep.subr.mxu0 0.0
    %2828 = vmatpush2.xpose.msra.mxu0 0.0
    %2829 = vmatprep.subr.mxu0 0.0
    %2830 = vmatpush2.xpose.msra.mxu0 0.0
    %2831 = vmatprep.subr.mxu0 0.0
    %2832 = vmatpush2.xpose.msra.mxu0 0.0
    %2833 = vmatprep.subr.mxu0 0.0
    %2834 = vmatpush2.xpose.msra.mxu0 0.0
    %2835 = vmatprep.subr.mxu0 0.0
    %2836 = vmatpush2.xpose.msra.mxu0 0.0
    %2837 = vmatprep.subr.mxu0 0.0
    %2838 = vmatpush2.xpose.msra.mxu0 0.0
    %2839 = vmatprep.subr.mxu0 0.0
    %2840 = vmatpush2.xpose.msra.mxu0 0.0
    %2841 = vmatprep.subr.mxu0 0.0
    %2842 = vmatpush2.xpose.msra.mxu0 0.0
    %2843 = vmatprep.subr.mxu0 0.0
    %2844 = vmatpush2.xpose.msra.mxu0 0.0
    %2845 = vmatprep.mubr.f32.mxu0 0.0
    %2846 = vmatmul.mubr.f32.gmra.mxu0 %v2777
    %v2847 = vpop.f32.mrf.mxu0
    %v2848 = vadd.f32 0.0, %v2847
    %v2849 = vpop.f32.mrf.mxu0
    %2850 = vdwg.mxu0
    %v2851 = vmul.f32 %v2770, 0.35355338
    %v2852 = vmul.f32 %v2848, 0.35355338
    %v2853 = vadd.f32 %v2851, %v55
    %v2854 = vadd.f32 %v2852, %v55
    %v2855 = vsel %vm190, %v2853, -inf
    %2856 = vmax.xlane.f32.xlu0 %v2855
    %v2857 = vpop.xlane.xlu0 %2856
    %v2858 = vsel %vm190, %v2854, -inf
    %2859 = vmax.xlane.f32.xlu0 %v2858
    %v2860 = vpop.xlane.xlu0 %2859
    %v2861 = vsub.f32 %v2853, %v2857
    %v2862 = vsub.f32 %v2854, %v2860
    %v2863 = vmul.f32 %v2861, 1.442695
    %v2864 = vpow.pop %v2863
    %v2865 = vmul.f32 %v2862, 1.442695
    %v2866 = vpow.pop %v2865
    %v2867 = vsel %vm190, %v2864, 0.0
    %2868 = vadd.xlane.f32.xlu0 %v2867
    %v2869 = vpop.xlane.xlu0 %2868
    %v2870 = vsel %vm190, %v2866, 0.0
    %2871 = vadd.xlane.f32.xlu0 %v2870
    %v2872 = vpop.xlane.xlu0 %2871
    %v2873 = vrcp.pop %v2869
    %v2874 = vrcp.pop %v2872
    %v2875 = vmul.f32 %v2864, %v2873
    %v2876 = vmul.f32 %v2866, %v2874
    %2877 = vrot.lane.b32.xlu0 %v2021, 48
    %v2878 = vpop.permute.xlu0 %2877
    %v2881 = vsel %vm190, %v2875, 0
    %2883 = vmatprep.subr.mxu0 0.0
    %2884 = vmatpush1.msra.mxu0 0.0
    %2885 = vmatprep.subr.mxu0 0.0
    %2886 = vmatpush1.msra.mxu0 0.0
    %2887 = vmatprep.subr.mxu0 0.0
    %2888 = vmatpush1.msra.mxu0 0.0
    %2889 = vmatprep.subr.mxu0 0.0
    %2890 = vmatpush1.msra.mxu0 0.0
    %2891 = vmatprep.subr.mxu0 0.0
    %2892 = vmatpush1.msra.mxu0 0.0
    %2893 = vmatprep.subr.mxu0 0.0
    %2894 = vmatpush1.msra.mxu0 0.0
    %2895 = vmatprep.subr.mxu0 0.0
    %2896 = vmatpush1.msra.mxu0 0.0
    %2897 = vmatprep.subr.mxu0 0.0
    %2898 = vmatpush1.msra.mxu0 0.0
    %2899 = vmatprep.subr.mxu0 0.0
    %2900 = vmatpush1.msra.mxu0 0.0
    %2901 = vmatprep.subr.mxu0 0.0
    %2902 = vmatpush1.msra.mxu0 0.0
    %2903 = vmatprep.subr.mxu0 0.0
    %2904 = vmatpush1.msra.mxu0 0.0
    %2905 = vmatprep.subr.mxu0 0.0
    %2906 = vmatpush1.msra.mxu0 0.0
    %2907 = vmatprep.subr.mxu0 0.0
    %2908 = vmatpush1.msra.mxu0 0.0
    %2909 = vmatprep.subr.mxu0 0.0
    %2910 = vmatpush1.msra.mxu0 0.0
    %2911 = vmatprep.subr.mxu0 0.0
    %2912 = vmatpush1.msra.mxu0 0.0
    %2913 = vmatprep.subr.mxu0 0.0
    %2914 = vmatpush1.msra.mxu0 %v2878
    %2915 = vmatprep.subr.mxu0 0.0
    %2916 = vmatpush2.msra.mxu0 0.0
    %2917 = vmatprep.subr.mxu0 0.0
    %2918 = vmatpush2.msra.mxu0 0.0
    %2919 = vmatprep.subr.mxu0 0.0
    %2920 = vmatpush2.msra.mxu0 0.0
    %2921 = vmatprep.subr.mxu0 0.0
    %2922 = vmatpush2.msra.mxu0 0.0
    %2923 = vmatprep.subr.mxu0 0.0
    %2924 = vmatpush2.msra.mxu0 0.0
    %2925 = vmatprep.subr.mxu0 0.0
    %2926 = vmatpush2.msra.mxu0 0.0
    %2927 = vmatprep.subr.mxu0 0.0
    %2928 = vmatpush2.msra.mxu0 0.0
    %2929 = vmatprep.subr.mxu0 0.0
    %2930 = vmatpush2.msra.mxu0 0.0
    %2931 = vmatprep.subr.mxu0 0.0
    %2932 = vmatpush2.msra.mxu0 0.0
    %2933 = vmatprep.subr.mxu0 0.0
    %2934 = vmatpush2.msra.mxu0 0.0
    %2935 = vmatprep.subr.mxu0 0.0
    %2936 = vmatpush2.msra.mxu0 0.0
    %2937 = vmatprep.subr.mxu0 0.0
    %2938 = vmatpush2.msra.mxu0 0.0
    %2939 = vmatprep.subr.mxu0 0.0
    %2940 = vmatpush2.msra.mxu0 0.0
    %2941 = vmatprep.subr.mxu0 0.0
    %2942 = vmatpush2.msra.mxu0 0.0
    %2943 = vmatprep.subr.mxu0 0.0
    %2944 = vmatpush2.msra.mxu0 0.0
    %2945 = vmatprep.subr.mxu0 0.0
    %2946 = vmatpush2.msra.mxu0 0.0
    %2947 = vmatprep.mubr.f32.mxu0 0.0
    %2948 = vmatmul.mubr.f32.gmra.mxu0 %v2881
    %v2949 = vpop.f32.mrf.mxu0
    %v2950 = vadd.f32 0.0, %v2949
    %v2951 = vpop.f32.mrf.mxu0
    %2952 = vdwg.mxu0
    %2953 = vrot.lane.b32.xlu0 %v2026, 48
    %v2954 = vpop.permute.xlu0 %2953
    %v2957 = vsel %vm190, %v2876, 0
    %2959 = vmatprep.subr.mxu0 0.0
    %2960 = vmatpush1.msra.mxu0 0.0
    %2961 = vmatprep.subr.mxu0 0.0
    %2962 = vmatpush1.msra.mxu0 0.0
    %2963 = vmatprep.subr.mxu0 0.0
    %2964 = vmatpush1.msra.mxu0 0.0
    %2965 = vmatprep.subr.mxu0 0.0
    %2966 = vmatpush1.msra.mxu0 0.0
    %2967 = vmatprep.subr.mxu0 0.0
    %2968 = vmatpush1.msra.mxu0 0.0
    %2969 = vmatprep.subr.mxu0 0.0
    %2970 = vmatpush1.msra.mxu0 0.0
    %2971 = vmatprep.subr.mxu0 0.0
    %2972 = vmatpush1.msra.mxu0 0.0
    %2973 = vmatprep.subr.mxu0 0.0
    %2974 = vmatpush1.msra.mxu0 0.0
    %2975 = vmatprep.subr.mxu0 0.0
    %2976 = vmatpush1.msra.mxu0 0.0
    %2977 = vmatprep.subr.mxu0 0.0
    %2978 = vmatpush1.msra.mxu0 0.0
    %2979 = vmatprep.subr.mxu0 0.0
    %2980 = vmatpush1.msra.mxu0 0.0
    %2981 = vmatprep.subr.mxu0 0.0
    %2982 = vmatpush1.msra.mxu0 0.0
    %2983 = vmatprep.subr.mxu0 0.0
    %2984 = vmatpush1.msra.mxu0 0.0
    %2985 = vmatprep.subr.mxu0 0.0
    %2986 = vmatpush1.msra.mxu0 0.0
    %2987 = vmatprep.subr.mxu0 0.0
    %2988 = vmatpush1.msra.mxu0 0.0
    %2989 = vmatprep.subr.mxu0 0.0
    %2990 = vmatpush1.msra.mxu0 %v2954
    %2991 = vmatprep.subr.mxu0 0.0
    %2992 = vmatpush2.msra.mxu0 0.0
    %2993 = vmatprep.subr.mxu0 0.0
    %2994 = vmatpush2.msra.mxu0 0.0
    %2995 = vmatprep.subr.mxu0 0.0
    %2996 = vmatpush2.msra.mxu0 0.0
    %2997 = vmatprep.subr.mxu0 0.0
    %2998 = vmatpush2.msra.mxu0 0.0
    %2999 = vmatprep.subr.mxu0 0.0
    %3000 = vmatpush2.msra.mxu0 0.0
    %3001 = vmatprep.subr.mxu0 0.0
    %3002 = vmatpush2.msra.mxu0 0.0
    %3003 = vmatprep.subr.mxu0 0.0
    %3004 = vmatpush2.msra.mxu0 0.0
    %3005 = vmatprep.subr.mxu0 0.0
    %3006 = vmatpush2.msra.mxu0 0.0
    %3007 = vmatprep.subr.mxu0 0.0
    %3008 = vmatpush2.msra.mxu0 0.0
    %3009 = vmatprep.subr.mxu0 0.0
    %3010 = vmatpush2.msra.mxu0 0.0
    %3011 = vmatprep.subr.mxu0 0.0
    %3012 = vmatpush2.msra.mxu0 0.0
    %3013 = vmatprep.subr.mxu0 0.0
    %3014 = vmatpush2.msra.mxu0 0.0
    %3015 = vmatprep.subr.mxu0 0.0
    %3016 = vmatpush2.msra.mxu0 0.0
    %3017 = vmatprep.subr.mxu0 0.0
    %3018 = vmatpush2.msra.mxu0 0.0
    %3019 = vmatprep.subr.mxu0 0.0
    %3020 = vmatpush2.msra.mxu0 0.0
    %3021 = vmatprep.subr.mxu0 0.0
    %3022 = vmatpush2.msra.mxu0 0.0
    %3023 = vmatprep.mubr.f32.mxu0 0.0
    %3024 = vmatmul.mubr.f32.gmra.mxu0 %v2957
    %v3025 = vpop.f32.mrf.mxu0
    %v3026 = vadd.f32 0.0, %v3025
    %v3027 = vpop.f32.mrf.mxu0
    %3028 = vdwg.mxu0
    %3029 = vrot.lane.b32.xlu0 %v2021, 104
    %v3030 = vpop.permute.xlu0 %3029
    %3031 = vrot.lane.b32.xlu0 %v2021, 72
    %v3032 = vpop.permute.xlu0 %3031
    %v3033 = vsel %vm190, %v3030, 0
    %v3035 = vsel %vm190, %v3032, 0
    %3037 = vmatprep.subr.mxu0 0.0
    %3038 = vmatpush1.xpose.msra.mxu0 0.0
    %3039 = vmatprep.subr.mxu0 0.0
    %3040 = vmatpush1.xpose.msra.mxu0 0.0
    %3041 = vmatprep.subr.mxu0 0.0
    %3042 = vmatpush1.xpose.msra.mxu0 0.0
    %3043 = vmatprep.subr.mxu0 0.0
    %3044 = vmatpush1.xpose.msra.mxu0 0.0
    %3045 = vmatprep.subr.mxu0 0.0
    %3046 = vmatpush1.xpose.msra.mxu0 0.0
    %3047 = vmatprep.subr.mxu0 0.0
    %3048 = vmatpush1.xpose.msra.mxu0 0.0
    %3049 = vmatprep.subr.mxu0 0.0
    %3050 = vmatpush1.xpose.msra.mxu0 0.0
    %3051 = vmatprep.subr.mxu0 0.0
    %3052 = vmatpush1.xpose.msra.mxu0 0.0
    %3053 = vmatprep.subr.mxu0 0.0
    %3054 = vmatpush1.xpose.msra.mxu0 0.0
    %3055 = vmatprep.subr.mxu0 0.0
    %3056 = vmatpush1.xpose.msra.mxu0 0.0
    %3057 = vmatprep.subr.mxu0 0.0
    %3058 = vmatpush1.xpose.msra.mxu0 0.0
    %3059 = vmatprep.subr.mxu0 0.0
    %3060 = vmatpush1.xpose.msra.mxu0 0.0
    %3061 = vmatprep.subr.mxu0 0.0
    %3062 = vmatpush1.xpose.msra.mxu0 0.0
    %3063 = vmatprep.subr.mxu0 0.0
    %3064 = vmatpush1.xpose.msra.mxu0 0.0
    %3065 = vmatprep.subr.mxu0 0.0
    %3066 = vmatpush1.xpose.msra.mxu0 0.0
    %3067 = vmatprep.subr.mxu0 0.0
    %3068 = vmatpush1.xpose.msra.mxu0 %v3035
    %3069 = vmatprep.subr.mxu0 0.0
    %3070 = vmatpush2.xpose.msra.mxu0 0.0
    %3071 = vmatprep.subr.mxu0 0.0
    %3072 = vmatpush2.xpose.msra.mxu0 0.0
    %3073 = vmatprep.subr.mxu0 0.0
    %3074 = vmatpush2.xpose.msra.mxu0 0.0
    %3075 = vmatprep.subr.mxu0 0.0
    %3076 = vmatpush2.xpose.msra.mxu0 0.0
    %3077 = vmatprep.subr.mxu0 0.0
    %3078 = vmatpush2.xpose.msra.mxu0 0.0
    %3079 = vmatprep.subr.mxu0 0.0
    %3080 = vmatpush2.xpose.msra.mxu0 0.0
    %3081 = vmatprep.subr.mxu0 0.0
    %3082 = vmatpush2.xpose.msra.mxu0 0.0
    %3083 = vmatprep.subr.mxu0 0.0
    %3084 = vmatpush2.xpose.msra.mxu0 0.0
    %3085 = vmatprep.subr.mxu0 0.0
    %3086 = vmatpush2.xpose.msra.mxu0 0.0
    %3087 = vmatprep.subr.mxu0 0.0
    %3088 = vmatpush2.xpose.msra.mxu0 0.0
    %3089 = vmatprep.subr.mxu0 0.0
    %3090 = vmatpush2.xpose.msra.mxu0 0.0
    %3091 = vmatprep.subr.mxu0 0.0
    %3092 = vmatpush2.xpose.msra.mxu0 0.0
    %3093 = vmatprep.subr.mxu0 0.0
    %3094 = vmatpush2.xpose.msra.mxu0 0.0
    %3095 = vmatprep.subr.mxu0 0.0
    %3096 = vmatpush2.xpose.msra.mxu0 0.0
    %3097 = vmatprep.subr.mxu0 0.0
    %3098 = vmatpush2.xpose.msra.mxu0 0.0
    %3099 = vmatprep.subr.mxu0 0.0
    %3100 = vmatpush2.xpose.msra.mxu0 0.0
    %3101 = vmatprep.mubr.f32.mxu0 0.0
    %3102 = vmatmul.mubr.f32.gmra.mxu0 %v3033
    %v3103 = vpop.f32.mrf.mxu0
    %v3104 = vadd.f32 0.0, %v3103
    %v3105 = vpop.f32.mrf.mxu0
    %3106 = vdwg.mxu0
    %3107 = vrot.lane.b32.xlu0 %v2026, 104
    %v3108 = vpop.permute.xlu0 %3107
    %3109 = vrot.lane.b32.xlu0 %v2026, 72
    %v3110 = vpop.permute.xlu0 %3109
    %v3111 = vsel %vm190, %v3108, 0
    %v3113 = vsel %vm190, %v3110, 0
    %3115 = vmatprep.subr.mxu0 0.0
    %3116 = vmatpush1.xpose.msra.mxu0 0.0
    %3117 = vmatprep.subr.mxu0 0.0
    %3118 = vmatpush1.xpose.msra.mxu0 0.0
    %3119 = vmatprep.subr.mxu0 0.0
    %3120 = vmatpush1.xpose.msra.mxu0 0.0
    %3121 = vmatprep.subr.mxu0 0.0
    %3122 = vmatpush1.xpose.msra.mxu0 0.0
    %3123 = vmatprep.subr.mxu0 0.0
    %3124 = vmatpush1.xpose.msra.mxu0 0.0
    %3125 = vmatprep.subr.mxu0 0.0
    %3126 = vmatpush1.xpose.msra.mxu0 0.0
    %3127 = vmatprep.subr.mxu0 0.0
    %3128 = vmatpush1.xpose.msra.mxu0 0.0
    %3129 = vmatprep.subr.mxu0 0.0
    %3130 = vmatpush1.xpose.msra.mxu0 0.0
    %3131 = vmatprep.subr.mxu0 0.0
    %3132 = vmatpush1.xpose.msra.mxu0 0.0
    %3133 = vmatprep.subr.mxu0 0.0
    %3134 = vmatpush1.xpose.msra.mxu0 0.0
    %3135 = vmatprep.subr.mxu0 0.0
    %3136 = vmatpush1.xpose.msra.mxu0 0.0
    %3137 = vmatprep.subr.mxu0 0.0
    %3138 = vmatpush1.xpose.msra.mxu0 0.0
    %3139 = vmatprep.subr.mxu0 0.0
    %3140 = vmatpush1.xpose.msra.mxu0 0.0
    %3141 = vmatprep.subr.mxu0 0.0
    %3142 = vmatpush1.xpose.msra.mxu0 0.0
    %3143 = vmatprep.subr.mxu0 0.0
    %3144 = vmatpush1.xpose.msra.mxu0 0.0
    %3145 = vmatprep.subr.mxu0 0.0
    %3146 = vmatpush1.xpose.msra.mxu0 %v3113
    %3147 = vmatprep.subr.mxu0 0.0
    %3148 = vmatpush2.xpose.msra.mxu0 0.0
    %3149 = vmatprep.subr.mxu0 0.0
    %3150 = vmatpush2.xpose.msra.mxu0 0.0
    %3151 = vmatprep.subr.mxu0 0.0
    %3152 = vmatpush2.xpose.msra.mxu0 0.0
    %3153 = vmatprep.subr.mxu0 0.0
    %3154 = vmatpush2.xpose.msra.mxu0 0.0
    %3155 = vmatprep.subr.mxu0 0.0
    %3156 = vmatpush2.xpose.msra.mxu0 0.0
    %3157 = vmatprep.subr.mxu0 0.0
    %3158 = vmatpush2.xpose.msra.mxu0 0.0
    %3159 = vmatprep.subr.mxu0 0.0
    %3160 = vmatpush2.xpose.msra.mxu0 0.0
    %3161 = vmatprep.subr.mxu0 0.0
    %3162 = vmatpush2.xpose.msra.mxu0 0.0
    %3163 = vmatprep.subr.mxu0 0.0
    %3164 = vmatpush2.xpose.msra.mxu0 0.0
    %3165 = vmatprep.subr.mxu0 0.0
    %3166 = vmatpush2.xpose.msra.mxu0 0.0
    %3167 = vmatprep.subr.mxu0 0.0
    %3168 = vmatpush2.xpose.msra.mxu0 0.0
    %3169 = vmatprep.subr.mxu0 0.0
    %3170 = vmatpush2.xpose.msra.mxu0 0.0
    %3171 = vmatprep.subr.mxu0 0.0
    %3172 = vmatpush2.xpose.msra.mxu0 0.0
    %3173 = vmatprep.subr.mxu0 0.0
    %3174 = vmatpush2.xpose.msra.mxu0 0.0
    %3175 = vmatprep.subr.mxu0 0.0
    %3176 = vmatpush2.xpose.msra.mxu0 0.0
    %3177 = vmatprep.subr.mxu0 0.0
    %3178 = vmatpush2.xpose.msra.mxu0 0.0
    %3179 = vmatprep.mubr.f32.mxu0 0.0
    %3180 = vmatmul.mubr.f32.gmra.mxu0 %v3111
    %v3181 = vpop.f32.mrf.mxu0
    %v3182 = vadd.f32 0.0, %v3181
    %v3183 = vpop.f32.mrf.mxu0
    %3184 = vdwg.mxu0
    %v3185 = vmul.f32 %v3104, 0.35355338
    %v3186 = vmul.f32 %v3182, 0.35355338
    %v3187 = vadd.f32 %v3185, %v55
    %v3188 = vadd.f32 %v3186, %v55
    %v3189 = vsel %vm190, %v3187, -inf
    %3190 = vmax.xlane.f32.xlu0 %v3189
    %v3191 = vpop.xlane.xlu0 %3190
    %v3192 = vsel %vm190, %v3188, -inf
    %3193 = vmax.xlane.f32.xlu0 %v3192
    %v3194 = vpop.xlane.xlu0 %3193
    %v3195 = vsub.f32 %v3187, %v3191
    %v3196 = vsub.f32 %v3188, %v3194
    %v3197 = vmul.f32 %v3195, 1.442695
    %v3198 = vpow.pop %v3197
    %v3199 = vmul.f32 %v3196, 1.442695
    %v3200 = vpow.pop %v3199
    %v3201 = vsel %vm190, %v3198, 0.0
    %3202 = vadd.xlane.f32.xlu0 %v3201
    %v3203 = vpop.xlane.xlu0 %3202
    %v3204 = vsel %vm190, %v3200, 0.0
    %3205 = vadd.xlane.f32.xlu0 %v3204
    %v3206 = vpop.xlane.xlu0 %3205
    %v3207 = vrcp.pop %v3203
    %v3208 = vrcp.pop %v3206
    %v3209 = vmul.f32 %v3198, %v3207
    %v3210 = vmul.f32 %v3200, %v3208
    %3211 = vrot.lane.b32.xlu0 %v2021, 40
    %v3212 = vpop.permute.xlu0 %3211
    %v3215 = vsel %vm190, %v3209, 0
    %3217 = vmatprep.subr.mxu0 0.0
    %3218 = vmatpush1.msra.mxu0 0.0
    %3219 = vmatprep.subr.mxu0 0.0
    %3220 = vmatpush1.msra.mxu0 0.0
    %3221 = vmatprep.subr.mxu0 0.0
    %3222 = vmatpush1.msra.mxu0 0.0
    %3223 = vmatprep.subr.mxu0 0.0
    %3224 = vmatpush1.msra.mxu0 0.0
    %3225 = vmatprep.subr.mxu0 0.0
    %3226 = vmatpush1.msra.mxu0 0.0
    %3227 = vmatprep.subr.mxu0 0.0
    %3228 = vmatpush1.msra.mxu0 0.0
    %3229 = vmatprep.subr.mxu0 0.0
    %3230 = vmatpush1.msra.mxu0 0.0
    %3231 = vmatprep.subr.mxu0 0.0
    %3232 = vmatpush1.msra.mxu0 0.0
    %3233 = vmatprep.subr.mxu0 0.0
    %3234 = vmatpush1.msra.mxu0 0.0
    %3235 = vmatprep.subr.mxu0 0.0
    %3236 = vmatpush1.msra.mxu0 0.0
    %3237 = vmatprep.subr.mxu0 0.0
    %3238 = vmatpush1.msra.mxu0 0.0
    %3239 = vmatprep.subr.mxu0 0.0
    %3240 = vmatpush1.msra.mxu0 0.0
    %3241 = vmatprep.subr.mxu0 0.0
    %3242 = vmatpush1.msra.mxu0 0.0
    %3243 = vmatprep.subr.mxu0 0.0
    %3244 = vmatpush1.msra.mxu0 0.0
    %3245 = vmatprep.subr.mxu0 0.0
    %3246 = vmatpush1.msra.mxu0 0.0
    %3247 = vmatprep.subr.mxu0 0.0
    %3248 = vmatpush1.msra.mxu0 %v3212
    %3249 = vmatprep.subr.mxu0 0.0
    %3250 = vmatpush2.msra.mxu0 0.0
    %3251 = vmatprep.subr.mxu0 0.0
    %3252 = vmatpush2.msra.mxu0 0.0
    %3253 = vmatprep.subr.mxu0 0.0
    %3254 = vmatpush2.msra.mxu0 0.0
    %3255 = vmatprep.subr.mxu0 0.0
    %3256 = vmatpush2.msra.mxu0 0.0
    %3257 = vmatprep.subr.mxu0 0.0
    %3258 = vmatpush2.msra.mxu0 0.0
    %3259 = vmatprep.subr.mxu0 0.0
    %3260 = vmatpush2.msra.mxu0 0.0
    %3261 = vmatprep.subr.mxu0 0.0
    %3262 = vmatpush2.msra.mxu0 0.0
    %3263 = vmatprep.subr.mxu0 0.0
    %3264 = vmatpush2.msra.mxu0 0.0
    %3265 = vmatprep.subr.mxu0 0.0
    %3266 = vmatpush2.msra.mxu0 0.0
    %3267 = vmatprep.subr.mxu0 0.0
    %3268 = vmatpush2.msra.mxu0 0.0
    %3269 = vmatprep.subr.mxu0 0.0
    %3270 = vmatpush2.msra.mxu0 0.0
    %3271 = vmatprep.subr.mxu0 0.0
    %3272 = vmatpush2.msra.mxu0 0.0
    %3273 = vmatprep.subr.mxu0 0.0
    %3274 = vmatpush2.msra.mxu0 0.0
    %3275 = vmatprep.subr.mxu0 0.0
    %3276 = vmatpush2.msra.mxu0 0.0
    %3277 = vmatprep.subr.mxu0 0.0
    %3278 = vmatpush2.msra.mxu0 0.0
    %3279 = vmatprep.subr.mxu0 0.0
    %3280 = vmatpush2.msra.mxu0 0.0
    %3281 = vmatprep.mubr.f32.mxu0 0.0
    %3282 = vmatmul.mubr.f32.gmra.mxu0 %v3215
    %v3283 = vpop.f32.mrf.mxu0
    %v3284 = vadd.f32 0.0, %v3283
    %v3285 = vpop.f32.mrf.mxu0
    %3286 = vdwg.mxu0
    %3287 = vrot.lane.b32.xlu0 %v2026, 40
    %v3288 = vpop.permute.xlu0 %3287
    %v3291 = vsel %vm190, %v3210, 0
    %3293 = vmatprep.subr.mxu0 0.0
    %3294 = vmatpush1.msra.mxu0 0.0
    %3295 = vmatprep.subr.mxu0 0.0
    %3296 = vmatpush1.msra.mxu0 0.0
    %3297 = vmatprep.subr.mxu0 0.0
    %3298 = vmatpush1.msra.mxu0 0.0
    %3299 = vmatprep.subr.mxu0 0.0
    %3300 = vmatpush1.msra.mxu0 0.0
    %3301 = vmatprep.subr.mxu0 0.0
    %3302 = vmatpush1.msra.mxu0 0.0
    %3303 = vmatprep.subr.mxu0 0.0
    %3304 = vmatpush1.msra.mxu0 0.0
    %3305 = vmatprep.subr.mxu0 0.0
    %3306 = vmatpush1.msra.mxu0 0.0
    %3307 = vmatprep.subr.mxu0 0.0
    %3308 = vmatpush1.msra.mxu0 0.0
    %3309 = vmatprep.subr.mxu0 0.0
    %3310 = vmatpush1.msra.mxu0 0.0
    %3311 = vmatprep.subr.mxu0 0.0
    %3312 = vmatpush1.msra.mxu0 0.0
    %3313 = vmatprep.subr.mxu0 0.0
    %3314 = vmatpush1.msra.mxu0 0.0
    %3315 = vmatprep.subr.mxu0 0.0
    %3316 = vmatpush1.msra.mxu0 0.0
    %3317 = vmatprep.subr.mxu0 0.0
    %3318 = vmatpush1.msra.mxu0 0.0
    %3319 = vmatprep.subr.mxu0 0.0
    %3320 = vmatpush1.msra.mxu0 0.0
    %3321 = vmatprep.subr.mxu0 0.0
    %3322 = vmatpush1.msra.mxu0 0.0
    %3323 = vmatprep.subr.mxu0 0.0
    %3324 = vmatpush1.msra.mxu0 %v3288
    %3325 = vmatprep.subr.mxu0 0.0
    %3326 = vmatpush2.msra.mxu0 0.0
    %3327 = vmatprep.subr.mxu0 0.0
    %3328 = vmatpush2.msra.mxu0 0.0
    %3329 = vmatprep.subr.mxu0 0.0
    %3330 = vmatpush2.msra.mxu0 0.0
    %3331 = vmatprep.subr.mxu0 0.0
    %3332 = vmatpush2.msra.mxu0 0.0
    %3333 = vmatprep.subr.mxu0 0.0
    %3334 = vmatpush2.msra.mxu0 0.0
    %3335 = vmatprep.subr.mxu0 0.0
    %3336 = vmatpush2.msra.mxu0 0.0
    %3337 = vmatprep.subr.mxu0 0.0
    %3338 = vmatpush2.msra.mxu0 0.0
    %3339 = vmatprep.subr.mxu0 0.0
    %3340 = vmatpush2.msra.mxu0 0.0
    %3341 = vmatprep.subr.mxu0 0.0
    %3342 = vmatpush2.msra.mxu0 0.0
    %3343 = vmatprep.subr.mxu0 0.0
    %3344 = vmatpush2.msra.mxu0 0.0
    %3345 = vmatprep.subr.mxu0 0.0
    %3346 = vmatpush2.msra.mxu0 0.0
    %3347 = vmatprep.subr.mxu0 0.0
    %3348 = vmatpush2.msra.mxu0 0.0
    %3349 = vmatprep.subr.mxu0 0.0
    %3350 = vmatpush2.msra.mxu0 0.0
    %3351 = vmatprep.subr.mxu0 0.0
    %3352 = vmatpush2.msra.mxu0 0.0
    %3353 = vmatprep.subr.mxu0 0.0
    %3354 = vmatpush2.msra.mxu0 0.0
    %3355 = vmatprep.subr.mxu0 0.0
    %3356 = vmatpush2.msra.mxu0 0.0
    %3357 = vmatprep.mubr.f32.mxu0 0.0
    %3358 = vmatmul.mubr.f32.gmra.mxu0 %v3291
    %v3359 = vpop.f32.mrf.mxu0
    %v3360 = vadd.f32 0.0, %v3359
    %v3361 = vpop.f32.mrf.mxu0
    %3362 = vdwg.mxu0
    %3365 = vrot.lane.b32.xlu0 %v2616, 8
    %v3366 = vpop.permute.xlu0 %3365
    %3367 = vrot.lane.b32.xlu0 %v2692, 8
    %v3368 = vpop.permute.xlu0 %3367
    %3373 = vrot.lane.b32.xlu0 %v2950, 16
    %v3374 = vpop.permute.xlu0 %3373
    %3375 = vrot.lane.b32.xlu0 %v3026, 16
    %v3376 = vpop.permute.xlu0 %3375
    %3381 = vrot.lane.b32.xlu0 %v3284, 24
    %v3382 = vpop.permute.xlu0 %3381
    %3383 = vrot.lane.b32.xlu0 %v3360, 24
    %v3384 = vpop.permute.xlu0 %3383
    %v3387 = vsel %vm190, %v2282, %v3366
    %v3388 = vsel %vm190, %v2358, %v3368
    %v3389 = vsel %vm1548, %v3387, %v3374
    %v3390 = vsel %vm1548, %v3388, %v3376
    %v3391 = vsel %vm1551, %v3389, %v3382
    %v3392 = vsel %vm1551, %v3390, %v3384
    %s3393 = scalar_lea.vmem %s4, 32
    %v3394 = vld [vmem:[%s3393] sm:$0xff]
    %v3395 = vld [vmem:[%s3393 + $0x8] sm:$0xff]
    %v3396 = vld [vmem:[%s3393 + $0x10] sm:$0xff]
    %v3397 = vld [vmem:[%s3393 + $0x18] sm:$0xff]
    %v3399 = vsel %vm58, %v3391, 0
    %v3402 = vsel %vm58, %v3392, 0
    %3404 = vmatprep.subr.mxu0 0.0
    %3405 = vmatpush1.msra.mxu0 0.0
    %3406 = vmatprep.subr.mxu0 0.0
    %3407 = vmatpush1.msra.mxu0 0.0
    %3408 = vmatprep.subr.mxu0 0.0
    %3409 = vmatpush1.msra.mxu0 0.0
    %3410 = vmatprep.subr.mxu0 0.0
    %3411 = vmatpush1.msra.mxu0 0.0
    %3412 = vmatprep.subr.mxu0 0.0
    %3413 = vmatpush1.msra.mxu0 0.0
    %3414 = vmatprep.subr.mxu0 0.0
    %3415 = vmatpush1.msra.mxu0 0.0
    %3416 = vmatprep.subr.mxu0 0.0
    %3417 = vmatpush1.msra.mxu0 0.0
    %3418 = vmatprep.subr.mxu0 0.0
    %3419 = vmatpush1.msra.mxu0 0.0
    %3420 = vmatprep.subr.mxu0 0.0
    %3421 = vmatpush1.msra.mxu0 0.0
    %3422 = vmatprep.subr.mxu0 0.0
    %3423 = vmatpush1.msra.mxu0 0.0
    %3424 = vmatprep.subr.mxu0 0.0
    %3425 = vmatpush1.msra.mxu0 0.0
    %3426 = vmatprep.subr.mxu0 0.0
    %3427 = vmatpush1.msra.mxu0 0.0
    %3428 = vmatprep.subr.mxu0 0.0
    %3429 = vmatpush1.msra.mxu0 %v3397
    %3430 = vmatprep.subr.mxu0 0.0
    %3431 = vmatpush1.msra.mxu0 %v3396
    %3432 = vmatprep.subr.mxu0 0.0
    %3433 = vmatpush1.msra.mxu0 %v3395
    %3434 = vmatprep.subr.mxu0 0.0
    %3435 = vmatpush1.msra.mxu0 %v3394
    %3436 = vmatprep.subr.mxu0 0.0
    %3437 = vmatpush2.msra.mxu0 0.0
    %3438 = vmatprep.subr.mxu0 0.0
    %3439 = vmatpush2.msra.mxu0 0.0
    %3440 = vmatprep.subr.mxu0 0.0
    %3441 = vmatpush2.msra.mxu0 0.0
    %3442 = vmatprep.subr.mxu0 0.0
    %3443 = vmatpush2.msra.mxu0 0.0
    %3444 = vmatprep.subr.mxu0 0.0
    %3445 = vmatpush2.msra.mxu0 0.0
    %3446 = vmatprep.subr.mxu0 0.0
    %3447 = vmatpush2.msra.mxu0 0.0
    %3448 = vmatprep.subr.mxu0 0.0
    %3449 = vmatpush2.msra.mxu0 0.0
    %3450 = vmatprep.subr.mxu0 0.0
    %3451 = vmatpush2.msra.mxu0 0.0
    %3452 = vmatprep.subr.mxu0 0.0
    %3453 = vmatpush2.msra.mxu0 0.0
    %3454 = vmatprep.subr.mxu0 0.0
    %3455 = vmatpush2.msra.mxu0 0.0
    %3456 = vmatprep.subr.mxu0 0.0
    %3457 = vmatpush2.msra.mxu0 0.0
    %3458 = vmatprep.subr.mxu0 0.0
    %3459 = vmatpush2.msra.mxu0 0.0
    %3460 = vmatprep.subr.mxu0 0.0
    %3461 = vmatpush2.msra.mxu0 0.0
    %3462 = vmatprep.subr.mxu0 0.0
    %3463 = vmatpush2.msra.mxu0 0.0
    %3464 = vmatprep.subr.mxu0 0.0
    %3465 = vmatpush2.msra.mxu0 0.0
    %3466 = vmatprep.subr.mxu0 0.0
    %3467 = vmatpush2.msra.mxu0 0.0
    %3468 = vmatprep.mubr.f32.mxu0 0.0
    %3469 = vmatmul.mubr.f32.gmra.mxu0 %v3399
    %v3470 = vpop.f32.mrf.mxu0
    %v3471 = vadd.f32 0.0, %v3470
    %v3472 = vpop.f32.mrf.mxu0
    %3473 = vmatprep.mubr.f32.mxu0 0.0
    %3474 = vmatmul.mubr.f32.gmra.mxu0 %v3402
    %v3475 = vpop.f32.mrf.mxu0
    %v3476 = vadd.f32 0.0, %v3475
    %v3477 = vpop.f32.mrf.mxu0
    %3478 = vdwg.mxu0
    %v3479 = vadd.f32 %v1895, %v3471
    %v3480 = vadd.f32 %v1896, %v3476
    %s3481 = scalar_lea.vmem %s5, 1
    %v3482 = vld [vmem:[%s3481] sm:$0x1]
    %s3483 = scalar_lea.vmem %s6, 1
    %v3484 = vld [vmem:[%s3483] sm:$0x1]
    %v3485 = vsel %vm58, %v3479, 0.0
    %3486 = vadd.xlane.f32.xlu0 %v3485
    %v3487 = vpop.xlane.xlu0 %3486
    %v3488 = vsel %vm58, %v3480, 0.0
    %3489 = vadd.xlane.f32.xlu0 %v3488
    %v3490 = vpop.xlane.xlu0 %3489
    %v3491 = vmul.f32 %v3487, %v65
    %v3492 = vmul.f32 %v3490, %v65
    %v3493 = vsub.f32 %v3479, %v3491
    %v3494 = vsub.f32 %v3480, %v3492
    %v3495 = vmul.f32 %v3493, %v3493
    %v3496 = vmul.f32 %v3494, %v3494
    %v3497 = vsel %vm58, %v3495, 0.0
    %3498 = vadd.xlane.f32.xlu0 %v3497
    %v3499 = vpop.xlane.xlu0 %3498
    %v3500 = vsel %vm58, %v3496, 0.0
    %3501 = vadd.xlane.f32.xlu0 %v3500
    %v3502 = vpop.xlane.xlu0 %3501
    %v3503 = vmul.f32 %v3499, %v65
    %v3504 = vmul.f32 %v3502, %v65
    %v3505 = vadd.f32 %v3503, 1e-05
    %v3506 = vadd.f32 %v3504, 1e-05
    %v3507 = vrsqrt.pop %v3505
    %v3508 = vrsqrt.pop %v3506
    %v3509 = vmul.f32 %v3493, %v3507
    %v3510 = vmul.f32 %v3494, %v3508
    %v3512 = vlaneseq
    %v3513 = vshrl.u32 %v3512, 7
    %v3514 = vsub.s32 0, %v3513
    %v3515 = vrot.slane %v3482, %v3514
    %v3517 = vmul.f32 %v3509, %v3515
    %v3518 = vmul.f32 %v3510, %v3515
    %v3520 = vlaneseq
    %v3521 = vshrl.u32 %v3520, 7
    %v3522 = vsub.s32 0, %v3521
    %v3523 = vrot.slane %v3484, %v3522
    %v3525 = vadd.f32 %v3517, %v3523
    %v3526 = vadd.f32 %v3518, %v3523
    %s3527 = scalar_lea.vmem %s7, 32
    %v3528 = vld [vmem:[%s3527] sm:$0xff]
    %v3529 = vld [vmem:[%s3527 + $0x8] sm:$0xff]
    %v3530 = vld [vmem:[%s3527 + $0x10] sm:$0xff]
    %v3531 = vld [vmem:[%s3527 + $0x18] sm:$0xff]
    %s3532 = scalar_lea.vmem %s8, 1
    %v3533 = vld [vmem:[%s3532] sm:$0x1]
    %v3535 = vlaneseq
    %v3536 = vshrl.u32 %v3535, 7
    %v3537 = vsub.s32 0, %v3536
    %v3538 = vrot.slane %v3533, %v3537
    %v3541 = vsel %vm58, %v3525, 0
    %v3544 = vsel %vm58, %v3526, 0
    %3546 = vmatprep.subr.mxu0 0.0
    %3547 = vmatpush1.msra.mxu0 0.0
    %3548 = vmatprep.subr.mxu0 0.0
    %3549 = vmatpush1.msra.mxu0 0.0
    %3550 = vmatprep.subr.mxu0 0.0
    %3551 = vmatpush1.msra.mxu0 0.0
    %3552 = vmatprep.subr.mxu0 0.0
    %3553 = vmatpush1.msra.mxu0 0.0
    %3554 = vmatprep.subr.mxu0 0.0
    %3555 = vmatpush1.msra.mxu0 0.0
    %3556 = vmatprep.subr.mxu0 0.0
    %3557 = vmatpush1.msra.mxu0 0.0
    %3558 = vmatprep.subr.mxu0 0.0
    %3559 = vmatpush1.msra.mxu0 0.0
    %3560 = vmatprep.subr.mxu0 0.0
    %3561 = vmatpush1.msra.mxu0 0.0
    %3562 = vmatprep.subr.mxu0 0.0
    %3563 = vmatpush1.msra.mxu0 0.0
    %3564 = vmatprep.subr.mxu0 0.0
    %3565 = vmatpush1.msra.mxu0 0.0
    %3566 = vmatprep.subr.mxu0 0.0
    %3567 = vmatpush1.msra.mxu0 0.0
    %3568 = vmatprep.subr.mxu0 0.0
    %3569 = vmatpush1.msra.mxu0 0.0
    %3570 = vmatprep.subr.mxu0 0.0
    %3571 = vmatpush1.msra.mxu0 %v3531
    %3572 = vmatprep.subr.mxu0 0.0
    %3573 = vmatpush1.msra.mxu0 %v3530
    %3574 = vmatprep.subr.mxu0 0.0
    %3575 = vmatpush1.msra.mxu0 %v3529
    %3576 = vmatprep.subr.mxu0 0.0
    %3577 = vmatpush1.msra.mxu0 %v3528
    %3578 = vmatprep.subr.mxu0 0.0
    %3579 = vmatpush2.msra.mxu0 0.0
    %3580 = vmatprep.subr.mxu0 0.0
    %3581 = vmatpush2.msra.mxu0 0.0
    %3582 = vmatprep.subr.mxu0 0.0
    %3583 = vmatpush2.msra.mxu0 0.0
    %3584 = vmatprep.subr.mxu0 0.0
    %3585 = vmatpush2.msra.mxu0 0.0
    %3586 = vmatprep.subr.mxu0 0.0
    %3587 = vmatpush2.msra.mxu0 0.0
    %3588 = vmatprep.subr.mxu0 0.0
    %3589 = vmatpush2.msra.mxu0 0.0
    %3590 = vmatprep.subr.mxu0 0.0
    %3591 = vmatpush2.msra.mxu0 0.0
    %3592 = vmatprep.subr.mxu0 0.0
    %3593 = vmatpush2.msra.mxu0 0.0
    %3594 = vmatprep.subr.mxu0 0.0
    %3595 = vmatpush2.msra.mxu0 0.0
    %3596 = vmatprep.subr.mxu0 0.0
    %3597 = vmatpush2.msra.mxu0 0.0
    %3598 = vmatprep.subr.mxu0 0.0
    %3599 = vmatpush2.msra.mxu0 0.0
    %3600 = vmatprep.subr.mxu0 0.0
    %3601 = vmatpush2.msra.mxu0 0.0
    %3602 = vmatprep.subr.mxu0 0.0
    %3603 = vmatpush2.msra.mxu0 0.0
    %3604 = vmatprep.subr.mxu0 0.0
    %3605 = vmatpush2.msra.mxu0 0.0
    %3606 = vmatprep.subr.mxu0 0.0
    %3607 = vmatpush2.msra.mxu0 0.0
    %3608 = vmatprep.subr.mxu0 0.0
    %3609 = vmatpush2.msra.mxu0 0.0
    %3610 = vmatprep.mubr.f32.mxu0 0.0
    %3611 = vmatmul.mubr.f32.gmra.mxu0 %v3541
    %v3612 = vpop.f32.mrf.mxu0
    %v3613 = vadd.f32 %v3538, %v3612
    %v3614 = vpop.f32.mrf.mxu0
    %3615 = vmatprep.mubr.f32.mxu0 0.0
    %3616 = vmatmul.mubr.f32.gmra.mxu0 %v3544
    %v3617 = vpop.f32.mrf.mxu0
    %v3618 = vadd.f32 %v3538, %v3617
    %v3619 = vpop.f32.mrf.mxu0
    %3620 = vdwg.mxu0
    %v3621 = vmul.f32 %v3613, 0.5
    %v3622 = vmul.f32 %v3618, 0.5
    %v3623 = vmul.f32 %v3613, 0.044715
    %v3624 = vmul.f32 %v3618, 0.044715
    %v3625 = vmul.f32 %v3623, %v3613
    %v3626 = vmul.f32 %v3624, %v3618
    %v3627 = vmul.f32 %v3625, %v3613
    %v3628 = vmul.f32 %v3626, %v3618
    %v3629 = vadd.f32 %v3613, %v3627
    %v3630 = vadd.f32 %v3618, %v3628
    %v3631 = vmul.f32 %v3629, 0.7978846
    %v3632 = vmul.f32 %v3630, 0.7978846
    %v3633 = vtanh.pop %v3631
    %v3634 = vtanh.pop %v3632
    %v3635 = vadd.f32 %v3633, 1.0
    %v3636 = vadd.f32 %v3634, 1.0
    %v3637 = vmul.f32 %v3621, %v3635
    %v3638 = vmul.f32 %v3622, %v3636
    %s3639 = scalar_lea.vmem %s9, 128
    %v3640 = vld [vmem:[%s3639] sm:$0xff]
    %v3641 = vld [vmem:[%s3639 + $0x8] sm:$0xff]
    %v3642 = vld [vmem:[%s3639 + $0x10] sm:$0xff]
    %v3643 = vld [vmem:[%s3639 + $0x18] sm:$0xff]
    %v3644 = vld [vmem:[%s3639 + $0x20] sm:$0xff]
    %v3645 = vld [vmem:[%s3639 + $0x28] sm:$0xff]
    %v3646 = vld [vmem:[%s3639 + $0x30] sm:$0xff]
    %v3647 = vld [vmem:[%s3639 + $0x38] sm:$0xff]
    %v3648 = vld [vmem:[%s3639 + $0x40] sm:$0xff]
    %v3649 = vld [vmem:[%s3639 + $0x48] sm:$0xff]
    %v3650 = vld [vmem:[%s3639 + $0x50] sm:$0xff]
    %v3651 = vld [vmem:[%s3639 + $0x58] sm:$0xff]
    %v3652 = vld [vmem:[%s3639 + $0x60] sm:$0xff]
    %v3653 = vld [vmem:[%s3639 + $0x68] sm:$0xff]
    %v3654 = vld [vmem:[%s3639 + $0x70] sm:$0xff]
    %v3655 = vld [vmem:[%s3639 + $0x78] sm:$0xff]
    %3656 = vmatprep.subr.mxu0 0.0
    %3657 = vmatpush1.msra.mxu0 %v3655
    %3658 = vmatprep.subr.mxu0 0.0
    %3659 = vmatpush1.msra.mxu0 %v3654
    %3660 = vmatprep.subr.mxu0 0.0
    %3661 = vmatpush1.msra.mxu0 %v3653
    %3662 = vmatprep.subr.mxu0 0.0
    %3663 = vmatpush1.msra.mxu0 %v3652
    %3664 = vmatprep.subr.mxu0 0.0
    %3665 = vmatpush1.msra.mxu0 %v3651
    %3666 = vmatprep.subr.mxu0 0.0
    %3667 = vmatpush1.msra.mxu0 %v3650
    %3668 = vmatprep.subr.mxu0 0.0
    %3669 = vmatpush1.msra.mxu0 %v3649
    %3670 = vmatprep.subr.mxu0 0.0
    %3671 = vmatpush1.msra.mxu0 %v3648
    %3672 = vmatprep.subr.mxu0 0.0
    %3673 = vmatpush1.msra.mxu0 %v3647
    %3674 = vmatprep.subr.mxu0 0.0
    %3675 = vmatpush1.msra.mxu0 %v3646
    %3676 = vmatprep.subr.mxu0 0.0
    %3677 = vmatpush1.msra.mxu0 %v3645
    %3678 = vmatprep.subr.mxu0 0.0
    %3679 = vmatpush1.msra.mxu0 %v3644
    %3680 = vmatprep.subr.mxu0 0.0
    %3681 = vmatpush1.msra.mxu0 %v3643
    %3682 = vmatprep.subr.mxu0 0.0
    %3683 = vmatpush1.msra.mxu0 %v3642
    %3684 = vmatprep.subr.mxu0 0.0
    %3685 = vmatpush1.msra.mxu0 %v3641
    %3686 = vmatprep.subr.mxu0 0.0
    %3687 = vmatpush1.msra.mxu0 %v3640
    %3688 = vmatprep.subr.mxu0 0.0
    %3689 = vmatpush2.msra.mxu0 0.0
    %3690 = vmatprep.subr.mxu0 0.0
    %3691 = vmatpush2.msra.mxu0 0.0
    %3692 = vmatprep.subr.mxu0 0.0
    %3693 = vmatpush2.msra.mxu0 0.0
    %3694 = vmatprep.subr.mxu0 0.0
    %3695 = vmatpush2.msra.mxu0 0.0
    %3696 = vmatprep.subr.mxu0 0.0
    %3697 = vmatpush2.msra.mxu0 0.0
    %3698 = vmatprep.subr.mxu0 0.0
    %3699 = vmatpush2.msra.mxu0 0.0
    %3700 = vmatprep.subr.mxu0 0.0
    %3701 = vmatpush2.msra.mxu0 0.0
    %3702 = vmatprep.subr.mxu0 0.0
    %3703 = vmatpush2.msra.mxu0 0.0
    %3704 = vmatprep.subr.mxu0 0.0
    %3705 = vmatpush2.msra.mxu0 0.0
    %3706 = vmatprep.subr.mxu0 0.0
    %3707 = vmatpush2.msra.mxu0 0.0
    %3708 = vmatprep.subr.mxu0 0.0
    %3709 = vmatpush2.msra.mxu0 0.0
    %3710 = vmatprep.subr.mxu0 0.0
    %3711 = vmatpush2.msra.mxu0 0.0
    %3712 = vmatprep.subr.mxu0 0.0
    %3713 = vmatpush2.msra.mxu0 0.0
    %3714 = vmatprep.subr.mxu0 0.0
    %3715 = vmatpush2.msra.mxu0 0.0
    %3716 = vmatprep.subr.mxu0 0.0
    %3717 = vmatpush2.msra.mxu0 0.0
    %3718 = vmatprep.subr.mxu0 0.0
    %3719 = vmatpush2.msra.mxu0 0.0
    %3720 = vmatprep.mubr.f32.mxu0 0.0
    %3721 = vmatmul.mubr.f32.gmra.mxu0 %v3637
    %v3722 = vpop.f32.mrf.mxu0
    %v3723 = vadd.f32 0.0, %v3722
    %v3724 = vpop.f32.mrf.mxu0
    %3725 = vmatprep.mubr.f32.mxu0 0.0
    %3726 = vmatmul.mubr.f32.gmra.mxu0 %v3638
    %v3727 = vpop.f32.mrf.mxu0
    %v3728 = vadd.f32 0.0, %v3727
    %v3729 = vpop.f32.mrf.mxu0
    %3730 = vdwg.mxu0
    %v3731 = vadd.f32 %v3479, %v3723
    %v3732 = vadd.f32 %v3480, %v3728
    %s3733 = scalar_lea.vmem %s10, 1
    %v3734 = vld [vmem:[%s3733] sm:$0x1]
    %v3736 = vlaneseq
    %v3737 = vshrl.u32 %v3736, 7
    %v3738 = vsub.s32 0, %v3737
    %v3739 = vrot.slane %v3734, %v3738
    %v3741 = vadd.f32 %v3731, %v3739
    %v3742 = vadd.f32 %v3732, %v3739
    %v3743 = vld [vmem:[%s11] sm:$0x1]
    %v3744 = vld [vmem:[%s12] sm:$0x1]
    %v3745 = vsel %vm58, %v3741, 0.0
    %3746 = vadd.xlane.f32.xlu0 %v3745
    %v3747 = vpop.xlane.xlu0 %3746
    %v3748 = vsel %vm58, %v3742, 0.0
    %3749 = vadd.xlane.f32.xlu0 %v3748
    %v3750 = vpop.xlane.xlu0 %3749
    %v3751 = vmul.f32 %v3747, %v65
    %v3752 = vmul.f32 %v3750, %v65
    %v3753 = vsub.f32 %v3741, %v3751
    %v3754 = vsub.f32 %v3742, %v3752
    %v3755 = vmul.f32 %v3753, %v3753
    %v3756 = vmul.f32 %v3754, %v3754
    %v3757 = vsel %vm58, %v3755, 0.0
    %3758 = vadd.xlane.f32.xlu0 %v3757
    %v3759 = vpop.xlane.xlu0 %3758
    %v3760 = vsel %vm58, %v3756, 0.0
    %3761 = vadd.xlane.f32.xlu0 %v3760
    %v3762 = vpop.xlane.xlu0 %3761
    %v3763 = vmul.f32 %v3759, %v65
    %v3764 = vmul.f32 %v3762, %v65
    %v3765 = vadd.f32 %v3763, 1e-05
    %v3766 = vadd.f32 %v3764, 1e-05
    %v3767 = vrsqrt.pop %v3765
    %v3768 = vrsqrt.pop %v3766
    %v3769 = vmul.f32 %v3753, %v3767
    %v3770 = vmul.f32 %v3754, %v3768
    %v3772 = vlaneseq
    %v3773 = vshrl.u32 %v3772, 7
    %v3774 = vsub.s32 0, %v3773
    %v3775 = vrot.slane %v3743, %v3774
    %v3777 = vmul.f32 %v3769, %v3775
    %v3778 = vmul.f32 %v3770, %v3775
    %v3780 = vlaneseq
    %v3781 = vshrl.u32 %v3780, 7
    %v3782 = vsub.s32 0, %v3781
    %v3783 = vrot.slane %v3744, %v3782
    %v3785 = vadd.f32 %v3777, %v3783
    %v3786 = vadd.f32 %v3778, %v3783
    %v3787 = vld [vmem:[%s13] sm:$0xff]
    %v3788 = vld [vmem:[%s13 + $0x8] sm:$0xff]
    %v3789 = vld [vmem:[%s13 + $0x10] sm:$0xff]
    %v3790 = vld [vmem:[%s13 + $0x18] sm:$0xff]
    %v3792 = vsel %vm58, %v3785, 0
    %v3795 = vsel %vm58, %v3786, 0
    %3797 = vmatprep.subr.mxu0 0.0
    %3798 = vmatpush1.msra.mxu0 0.0
    %3799 = vmatprep.subr.mxu0 0.0
    %3800 = vmatpush1.msra.mxu0 0.0
    %3801 = vmatprep.subr.mxu0 0.0
    %3802 = vmatpush1.msra.mxu0 0.0
    %3803 = vmatprep.subr.mxu0 0.0
    %3804 = vmatpush1.msra.mxu0 0.0
    %3805 = vmatprep.subr.mxu0 0.0
    %3806 = vmatpush1.msra.mxu0 0.0
    %3807 = vmatprep.subr.mxu0 0.0
    %3808 = vmatpush1.msra.mxu0 0.0
    %3809 = vmatprep.subr.mxu0 0.0
    %3810 = vmatpush1.msra.mxu0 0.0
    %3811 = vmatprep.subr.mxu0 0.0
    %3812 = vmatpush1.msra.mxu0 0.0
    %3813 = vmatprep.subr.mxu0 0.0
    %3814 = vmatpush1.msra.mxu0 0.0
    %3815 = vmatprep.subr.mxu0 0.0
    %3816 = vmatpush1.msra.mxu0 0.0
    %3817 = vmatprep.subr.mxu0 0.0
    %3818 = vmatpush1.msra.mxu0 0.0
    %3819 = vmatprep.subr.mxu0 0.0
    %3820 = vmatpush1.msra.mxu0 0.0
    %3821 = vmatprep.subr.mxu0 0.0
    %3822 = vmatpush1.msra.mxu0 %v3790
    %3823 = vmatprep.subr.mxu0 0.0
    %3824 = vmatpush1.msra.mxu0 %v3789
    %3825 = vmatprep.subr.mxu0 0.0
    %3826 = vmatpush1.msra.mxu0 %v3788
    %3827 = vmatprep.subr.mxu0 0.0
    %3828 = vmatpush1.msra.mxu0 %v3787
    %3829 = vmatprep.subr.mxu0 0.0
    %3830 = vmatpush2.msra.mxu0 0.0
    %3831 = vmatprep.subr.mxu0 0.0
    %3832 = vmatpush2.msra.mxu0 0.0
    %3833 = vmatprep.subr.mxu0 0.0
    %3834 = vmatpush2.msra.mxu0 0.0
    %3835 = vmatprep.subr.mxu0 0.0
    %3836 = vmatpush2.msra.mxu0 0.0
    %3837 = vmatprep.subr.mxu0 0.0
    %3838 = vmatpush2.msra.mxu0 0.0
    %3839 = vmatprep.subr.mxu0 0.0
    %3840 = vmatpush2.msra.mxu0 0.0
    %3841 = vmatprep.subr.mxu0 0.0
    %3842 = vmatpush2.msra.mxu0 0.0
    %3843 = vmatprep.subr.mxu0 0.0
    %3844 = vmatpush2.msra.mxu0 0.0
    %3845 = vmatprep.subr.mxu0 0.0
    %3846 = vmatpush2.msra.mxu0 0.0
    %3847 = vmatprep.subr.mxu0 0.0
    %3848 = vmatpush2.msra.mxu0 0.0
    %3849 = vmatprep.subr.mxu0 0.0
    %3850 = vmatpush2.msra.mxu0 0.0
    %3851 = vmatprep.subr.mxu0 0.0
    %3852 = vmatpush2.msra.mxu0 0.0
    %3853 = vmatprep.subr.mxu0 0.0
    %3854 = vmatpush2.msra.mxu0 0.0
    %3855 = vmatprep.subr.mxu0 0.0
    %3856 = vmatpush2.msra.mxu0 0.0
    %3857 = vmatprep.subr.mxu0 0.0
    %3858 = vmatpush2.msra.mxu0 0.0
    %3859 = vmatprep.subr.mxu0 0.0
    %3860 = vmatpush2.msra.mxu0 0.0
    %3861 = vmatprep.mubr.f32.mxu0 0.0
    %3862 = vmatmul.mubr.f32.gmra.mxu0 %v3792
    %v3863 = vpop.f32.mrf.mxu0
    %v3864 = vadd.f32 0.0, %v3863
    %v3865 = vpop.f32.mrf.mxu0
    %3866 = vmatprep.mubr.f32.mxu0 0.0
    %3867 = vmatmul.mubr.f32.gmra.mxu0 %v3795
    %v3868 = vpop.f32.mrf.mxu0
    %v3869 = vadd.f32 0.0, %v3868
    %v3870 = vpop.f32.mrf.mxu0
    %3871 = vdwg.mxu0
    %3872 = vst [vmem:[#allocation2] sm:$0xff] %v3864
    %3873 = vst [vmem:[#allocation2 + $0x8] sm:$0xff] %v3869
    // Predicated region
    $region58: #{gpt_forward.1} parent=1 // pred_check
      _
    $region59: #{gpt_forward.1} parent=1 // pred_check_branch
      %3875 = sbr.rel (0) target = $region61
    $region60: #{gpt_forward.1} parent=1 // pred_region
      %s3877 = ssub.s32 256, 256
      %3878 = vsyncadd [#allocation3], %s3877
      %s3879 = sshll.u32 [#allocation2], 4
      %s3880 = int_to_ptr.vmem [resolvable:$true] %s3879
      %3885 = dma.vmem_to_hbm [thread:$0]  %s3880, 256, %s14, [#allocation3], 128, 128, 8
    $region61: #{gpt_forward.1} parent=1 // pred_fallthru
      _
    // Predicated region
    $region62: #{gpt_forward.1} parent=1 // pred_check
      _
    $region63: #{gpt_forward.1} parent=1 // pred_check_branch
      %3887 = sbr.rel (0) target = $region65
    $region64: #{gpt_forward.1} parent=1 // pred_region
      %3888 = dma.done [#allocation3], 256
    $region65: #{gpt_forward.1} parent=1 // pred_fallthru
      _
    %3889 = vsyncpa [#allocation3], 1

</llo_original>
